<compile_context>
chip_gen: v5e
topology: v5e:2x2
jax: 0.10.0
libtpu: 0.0.40
codegen_flags: <defaults>
</compile_context>

<pallas_src>
import functools

import jax
import jax.numpy as jnp
from jax.experimental import pallas as pl
from jax.experimental.pallas import tpu as pltpu


# ----------------------------------------------------------------------------
# Flash multi-head attention kernel (serves Attention_pure and
# Cross_Attention_pure), channels-first token layout.
# ----------------------------------------------------------------------------


def _flash_mha_kernel(q_ref, k_ref, v_ref, o_ref, m_sc, l_sc, acc_sc, *,
                      scale, num_heads):
    """One (batch, q-tile, kv-tile) step of online-softmax attention.

    q_ref: (1, H, D, tq)   k_ref/v_ref: (1, H, D, tk)   o_ref: (1, H, D, tq)
    m_sc/l_sc: (H, tq, 1) f32   acc_sc: (H, tq, D) f32
    """
    kv_idx = pl.program_id(2)

    @pl.when(kv_idx == 0)
    def _init():
        m_sc[...] = jnp.full(m_sc.shape, -jnp.inf, m_sc.dtype)
        l_sc[...] = jnp.zeros(l_sc.shape, l_sc.dtype)
        acc_sc[...] = jnp.zeros(acc_sc.shape, acc_sc.dtype)

    # Fold the softmax scale into q: H*D*tq multiplies instead of H*tq*tk.
    q = q_ref[0] * scale               # (H, D, tq) - source dtype preserved
    k = k_ref[0]                       # (H, D, tk)
    v = v_ref[0]                       # (H, D, tk)

    # s[h, q, k] = sum_d q[h, d, q] * k[h, d, k]
    # heads batched, head_dim contracted directly (no transposed copies of
    # q/k materialized in the kernel body); f32 accumulation on the MXU.
    s = jax.lax.dot_general(
        q, k,
        dimension_numbers=(((1,), (1,)), ((0,), (0,))),
        preferred_element_type=jnp.float32,
    )                                                          # (H, tq, tk)

    m_prev = m_sc[...]                                         # (H, tq, 1)
    m_new = jnp.maximum(m_prev, jnp.max(s, axis=-1, keepdims=True))
    alpha = jnp.exp(m_prev - m_new)                            # rescale factor
    p = jnp.exp(s - m_new)                                     # (H, tq, tk)

    l_sc[...] = alpha * l_sc[...] + jnp.sum(p, axis=-1, keepdims=True)
    m_sc[...] = m_new

    # pv[h, q, d] = sum_k p[h, q, k] * v[h, d, k]  -> same (H, tq, D) layout
    # as the accumulator, so alpha / l broadcast natively (no per-step
    # relayouts).
    pv = jax.lax.dot_general(
        p.astype(v.dtype), v,
        dimension_numbers=(((2,), (2,)), ((0,), (0,))),
        preferred_element_type=jnp.float32,
    )                                                          # (H, tq, D)
    acc_sc[...] = alpha * acc_sc[...] + pv

    @pl.when(kv_idx == pl.num_programs(2) - 1)
    def _finalize():
        # Normalize the accumulator (cheaper than normalizing the (tq, tk)
        # probabilities); EUP approximate reciprocal.
        inv_l = pl.reciprocal(l_sc[...], approx=True)          # (H, tq, 1)
        out = acc_sc[...] * inv_l                              # (H, tq, D)
        # One small 2-D minor transpose per head, once per q-tile only:
        # the HBM writeback becomes (D, tq) rows -> full-lane, unmasked
        # stores and contiguous DMA rows.
        for h in range(num_heads):
            o_ref[0, h, :, :] = out[h].T.astype(o_ref.dtype)


def _pick_tile(n, preferred):
    """Largest multiple of 128 <= preferred dividing n, else the full axis."""
    if n <= preferred:
        return n
    t = (preferred // 128) * 128
    while t >= 128:
        if n % t == 0:
            return t
        t -= 128
    return n


def flash_mha(q, k, v, scale, *, block_q=512, block_k=512):
    """q: (B, H, D, Nq), k/v: (B, H, D, Nk)  ->  (B, H*D, Nq) channels-first.

    The output is already in the head-concatenated channels-first layout
    MixBlock needs (the trailing reshape (B,H,D,Nq)->(B,C,Nq) is a free view).
    Tiles are chosen so the f32 score/stat scratch stays a few MiB, far below
    the explicit 32 MiB scoped-VMEM limit (safe on v7x's 64 MiB physical VMEM
    as well as v5e/v6e).
    """
    B, H, D, Nq = q.shape
    Nk = k.shape[3]
    C = H * D

    tq = _pick_tile(Nq, block_q)
    tk = _pick_tile(Nk, block_k)
    grid = (B, Nq // tq, Nk // tk)

    kernel = functools.partial(_flash_mha_kernel, scale=float(scale),
                               num_heads=H)

    itemsize = jnp.dtype(q.dtype).itemsize
    cost = pl.CostEstimate(
        flops=4 * B * H * Nq * Nk * D,
        transcendentals=B * H * Nq * Nk,
        bytes_accessed=(q.size + k.size + v.size + B * Nq * C) * itemsize,
    )

    out = pl.pallas_call(
        kernel,
        out_shape=jax.ShapeDtypeStruct((B, H, D, Nq), q.dtype),
        grid_spec=pltpu.PrefetchScalarGridSpec(
            num_scalar_prefetch=0,
            grid=grid,
            in_specs=[
                pl.BlockSpec((1, H, D, tq), lambda b, qi, ki: (b, 0, 0, qi)),
                pl.BlockSpec((1, H, D, tk), lambda b, qi, ki: (b, 0, 0, ki)),
                pl.BlockSpec((1, H, D, tk), lambda b, qi, ki: (b, 0, 0, ki)),
            ],
            out_specs=pl.BlockSpec((1, H, D, tq),
                                   lambda b, qi, ki: (b, 0, 0, qi)),
            scratch_shapes=[
                pltpu.VMEM((H, tq, 1), jnp.float32),   # running max m
                pltpu.VMEM((H, tq, 1), jnp.float32),   # running denom l
                pltpu.VMEM((H, tq, D), jnp.float32),   # output accumulator
            ],
        ),
        compiler_params=pltpu.CompilerParams(
            dimension_semantics=("parallel", "parallel", "arbitrary"),
            vmem_limit_bytes=32 * 1024 * 1024,
        ),
        cost_estimate=cost,
    )(q, k, v)
    # (B, H, D, Nq) -> (B, C, Nq): adjacent leading dims merge while the token
    # axis stays minor-most -> free view, no transpose.
    return out.reshape(B, C, Nq)


def _split_qkv_heads_cf(packed, num_heads):
    """(B, 3*C, N) channels-first -> q, k, v each (B, H, D, N).

    Pure channel-axis slices + reshapes with the token axis kept minor-most:
    no transpose of the (long) token dimension is ever materialized, matching
    torch's reshape(B,N,3,H,D).permute(2,0,3,1,4) channel grouping exactly.
    """
    B, C3, N = packed.shape
    C = C3 // 3
    D = C // num_heads
    q = packed[:, 0 * C:1 * C].reshape(B, num_heads, D, N)
    k = packed[:, 1 * C:2 * C].reshape(B, num_heads, D, N)
    v = packed[:, 2 * C:3 * C].reshape(B, num_heads, D, N)
    return q, k, v


def attention_pure(x_cf, num_heads, scale, **kw):
    """Pallas Attention_pure.forward, channels-first input (B, 3C, N)."""
    q, k, v = _split_qkv_heads_cf(x_cf, num_heads)
    return flash_mha(q, k, v, scale, **kw)


def cross_attention_pure(q, k, v, scale, **kw):
    """Pallas Cross_Attention_pure.forward (dropout = identity at inference)."""
    return flash_mha(q, k, v, scale, **kw)


# Pure-JAX references (for correctness checks), same channels-first interface.
def _attention_ref(q, k, v, scale):
    attn = jnp.einsum("bhdq,bhdk->bhqk", q, k) * scale
    attn = jax.nn.softmax(attn, axis=-1)
    out = jnp.einsum("bhqk,bhdk->bhdq", attn, v)
    B, H, D, Nq = q.shape
    return out.reshape(B, H * D, Nq)


def attention_pure_ref(x_cf, num_heads, scale):
    q, k, v = _split_qkv_heads_cf(x_cf, num_heads)
    return _attention_ref(q, k, v, scale)


# ----------------------------------------------------------------------------
# MixBlock forward (inference) -- plain-JAX glue around the Pallas attention.
# The token branches are kept channels-first throughout, so XLA never
# transposes the 1024-token conv tensor.
# TODO(synk): 1x1x1 convs, the depthwise 3x3x3 conv, BatchNorm3d/LayerNorm and
# the trilinear interpolations are left to XLA; at MixBlock's channel counts a
# dedicated Pallas kernel for them would not pay for itself.
# ----------------------------------------------------------------------------


def _conv1x1x1(x, w, b):
    # x: (B, Cin, T, H, W); w: (Cout, Cin); b: (Cout,)
    y = jnp.einsum("oc,bcthw->bothw", w, x)
    return y + b[None, :, None, None, None]


def _depthwise_conv3x3x3(x, w, b):
    # x: (B, C, T, H, W); w: (C, 1, 3, 3, 3)
    y = jax.lax.conv_general_dilated(
        x, w, window_strides=(1, 1, 1), padding="SAME",
        dimension_numbers=("NCDHW", "OIDHW", "NCDHW"),
        feature_group_count=x.shape[1])
    return y + b[None, :, None, None, None]


def _batchnorm3d(x, p, eps=1e-5):
    inv = p["gamma"] / jnp.sqrt(p["var"] + eps)
    return ((x - p["mean"][None, :, None, None, None])
            * inv[None, :, None, None, None]
            + p["beta"][None, :, None, None, None])


def _layernorm_cf(x, p, eps=1e-5):
    # x: (B, C, N); torch nn.LayerNorm(C) applied over the channel axis.
    mu = jnp.mean(x, axis=1, keepdims=True)
    var = jnp.mean(jnp.square(x - mu), axis=1, keepdims=True)
    return ((x - mu) * jax.lax.rsqrt(var + eps)
            * p["gamma"][None, :, None] + p["beta"][None, :, None])


def _linear_cf(x, w, b):
    # x: (B, Cin, N); torch nn.Linear weight w: (Cout, Cin), applied over C.
    return jnp.einsum("oc,bcn->bon", w, x) + b[None, :, None]


def _trilinear(x, size):
    # TODO(synk): jax.image.resize 'trilinear' matches torch interpolate
    # (align_corners=False) up to edge handling; same op is used in both the
    # Pallas and the reference forward, so the attention check is exact.
    B, C = x.shape[:2]
    return jax.image.resize(x, (B, C) + tuple(size), method="trilinear",
                            antialias=False)


def mixblock_forward(x, params, *, num_heads, downsample=2,
                     self_attn=attention_pure, cross_attn=cross_attention_pure):
    B, _, T, H, W = x.shape
    d = params["conv1_w"].shape[0]
    dc = params["dwconv_w"].shape[0]
    ds = d - dc
    head_dim = ds // num_heads
    scale = head_dim ** -0.5   # both attn modules built with dim_sa

    residual = x
    x = _conv1x1x1(x, params["conv1_w"], params["conv1_b"])        # (B, d, T, H, W)
    qkv = x[:, :ds]
    conv = x[:, ds:]

    residual_conv = conv
    conv = residual_conv + _depthwise_conv3x3x3(
        _batchnorm3d(conv, params["bn_conv1"]),
        params["dwconv_w"], params["dwconv_b"])

    T_d, H_d, W_d = T // downsample, H // downsample, W // downsample
    if T_d < 2:
        T_d = 1
    if H_d < 7:
        H_d, W_d = 7, 7
    N_sa = T_d * H_d * W_d
    N_conv = T * H * W

    sa = _trilinear(qkv, (T_d, H_d, W_d))                          # (B, ds, Td, Hd, Wd)
    sa = sa.reshape(B, ds, N_sa)                                   # channels-first tokens
    residual_sa = sa
    sa_n = _layernorm_cf(sa, params["ln_sa1"])
    sa_pack = _linear_cf(sa_n, params["channel_up_w"],
                         params["channel_up_b"])                   # (B, 3ds, N_sa)
    sa = residual_sa + self_attn(sa_pack, num_heads, scale)        # (B, ds, N_sa)

    residual_conv_co = conv
    residual_sa_co = sa

    conv_qkv = _conv1x1x1(_batchnorm3d(conv, params["bn_conv2"]),
                          params["ccu_conv_w"], params["ccu_conv_b"])  # (B, 3dc, T, H, W)
    conv_qkv = conv_qkv.reshape(B, 3 * dc, N_conv)                 # (B, 3dc, N_conv)
    sa_qkv = _linear_cf(_layernorm_cf(sa, params["ln_sa2"]),
                        params["ccu_sa_w"], params["ccu_sa_b"])    # (B, 3ds, N_sa)

    conv_q, conv_k, conv_v = _split_qkv_heads_cf(conv_qkv, num_heads)
    sa_q, sa_k, sa_v = _split_qkv_heads_cf(sa_qkv, num_heads)

    # conv tokens attend to (downsampled) sa tokens
    conv_o = cross_attn(conv_q, sa_k, sa_v, scale)                 # (B, dc, N_conv)
    conv_o = _linear_cf(conv_o, params["fuse_conv_w"], params["fuse_conv_b"])
    conv = residual_conv_co + conv_o.reshape(B, dc, T, H, W)

    # sa tokens attend to conv tokens
    sa_o = cross_attn(sa_q, conv_k, conv_v, scale)                 # (B, ds, N_sa)
    sa = residual_sa_co + _linear_cf(sa_o, params["fuse_sa_w"],
                                     params["fuse_sa_b"])
    sa = _trilinear(sa.reshape(B, ds, T_d, H_d, W_d), (T, H, W))

    x = jnp.concatenate([conv, sa], axis=1)                        # (B, d, T, H, W)
    x = residual + _conv1x1x1(x, params["conv2_w"], params["conv2_b"])
    return x


def init_mixblock_params(key, dim, num_heads):
    d = dim // 8
    dc = int(d * 0.5)
    ds = d - dc
    assert ds % num_heads == 0, "dim_sa must be divisible by num_heads"

    keys = list(jax.random.split(key, 32))

    def nxt():
        return keys.pop()

    def w(shape, s=0.1):
        return jax.random.normal(nxt(), shape, dtype=jnp.float32) * s

    def bn(c):
        return dict(gamma=1.0 + w((c,)), beta=w((c,)), mean=w((c,), 0.2),
                    var=0.5 + jax.random.uniform(nxt(), (c,), dtype=jnp.float32))

    def ln(c):
        return dict(gamma=1.0 + w((c,)), beta=w((c,)))

    return dict(
        conv1_w=w((d, dim)), conv1_b=w((d,)),
        bn_conv1=bn(dc),
        dwconv_w=w((dc, 1, 3, 3, 3)), dwconv_b=w((dc,)),
        ln_sa1=ln(ds),
        channel_up_w=w((3 * ds, ds)), channel_up_b=w((3 * ds,)),
        bn_conv2=bn(dc),
        ccu_conv_w=w((3 * dc, dc)), ccu_conv_b=w((3 * dc,)),
        ln_sa2=ln(ds),
        ccu_sa_w=w((3 * ds, ds)), ccu_sa_b=w((3 * ds,)),
        fuse_conv_w=w((dc, dc)), fuse_conv_b=w((dc,)),
        fuse_sa_w=w((ds, ds)), fuse_sa_b=w((ds,)),
        conv2_w=w((dim, d)), conv2_b=w((dim,)),
    )


if __name__ == "__main__":
    # MixBlock(dim=256, num_heads=4): internal dim = 32, dim_conv = dim_sa = 16,
    # head_dim = 4.  Input x: (B, 256, T, H, W).
    DIM, NUM_HEADS, DOWNSAMPLE = 256, 4, 2
    B, T, H, W = 2, 4, 16, 16

    root = jax.random.PRNGKey(0)
    k_x, k_p, k_a, k_c = jax.random.split(root, 4)

    x = jax.random.normal(k_x, (B, DIM, T, H, W), dtype=jnp.float32)
    params = init_mixblock_params(k_p, DIM, NUM_HEADS)

    # --- standalone checks of the Pallas attention kernel --------------------
    N_sa, C_sa = 128, 16
    packed = jax.random.normal(k_a, (B, 3 * C_sa, N_sa), dtype=jnp.float32)
    scl = (C_sa // NUM_HEADS) ** -0.5
    out_attn = jax.block_until_ready(attention_pure(packed, NUM_HEADS, scl))
    ref_attn = attention_pure_ref(packed, NUM_HEADS, scl)
    assert out_attn.shape == (B, C_sa, N_sa)
    assert jnp.allclose(out_attn, ref_attn, atol=5e-3, rtol=5e-3), (
        float(jnp.max(jnp.abs(out_attn - ref_attn))))

    # cross-attention with asymmetric query / key lengths (channels-first)
    Nq, Nk, D = 1024, 128, 4
    qc = jax.random.normal(k_c, (B, NUM_HEADS, D, Nq), dtype=jnp.float32)
    kc = jax.random.normal(jax.random.fold_in(k_c, 1), (B, NUM_HEADS, D, Nk),
                           dtype=jnp.float32)
    vc = jax.random.normal(jax.random.fold_in(k_c, 2), (B, NUM_HEADS, D, Nk),
                           dtype=jnp.float32)
    out_x = jax.block_until_ready(cross_attention_pure(qc, kc, vc, D ** -0.5))
    ref_x = _attention_ref(qc, kc, vc, D ** -0.5)
    assert jnp.allclose(out_x, ref_x, atol=5e-3, rtol=5e-3)

    # swapped roles -> Nk=1024 exercises multi-step online-softmax accumulation
    out_x2 = jax.block_until_ready(cross_attention_pure(kc, qc, qc, D ** -0.5))
    ref_x2 = _attention_ref(kc, qc, qc, D ** -0.5)
    assert jnp.allclose(out_x2, ref_x2, atol=5e-3, rtol=5e-3)

    # --- full MixBlock forward ------------------------------------------------
    fwd_pallas = jax.jit(functools.partial(
        mixblock_forward, num_heads=NUM_HEADS, downsample=DOWNSAMPLE,
        self_attn=attention_pure, cross_attn=cross_attention_pure))
    fwd_ref = jax.jit(functools.partial(
        mixblock_forward, num_heads=NUM_HEADS, downsample=DOWNSAMPLE,
        self_attn=attention_pure_ref, cross_attn=_attention_ref))

    out = jax.block_until_ready(fwd_pallas(x, params))
    ref = jax.block_until_ready(fwd_ref(x, params))

    assert out.shape == (B, DIM, T, H, W)
    assert jnp.allclose(out, ref, atol=5e-3, rtol=5e-3), (
        float(jnp.max(jnp.abs(out - ref))))

    print("KERNEL_OK")
</pallas_src>

<mosaic_0001>
module attributes {stable_mosaic.version = 11 : i64} {
  func.func @_flash_mha_kernel(%arg0: i32, %arg1: i32, %arg2: i32, %arg3: memref<1x4x4x128xf32, #tpu.memory_space<vmem>>, %arg4: memref<1x4x4x128xf32, #tpu.memory_space<vmem>>, %arg5: memref<1x4x4x128xf32, #tpu.memory_space<vmem>>, %arg6: memref<1x4x4x128xf32, #tpu.memory_space<vmem>>, %arg7: memref<4x128x1xf32, #tpu.memory_space<vmem>>, %arg8: memref<4x128x1xf32, #tpu.memory_space<vmem>>, %arg9: memref<4x128x4xf32, #tpu.memory_space<vmem>>) attributes {dimension_semantics = [#tpu.dimension_semantics<parallel>, #tpu.dimension_semantics<parallel>, #tpu.dimension_semantics<arbitrary>], iteration_bounds = array<i64: 2, 1, 1>, scalar_prefetch = 0 : i64, scratch_operands = 3 : i64, tpu.core_type = #tpu.core_type<tc>, window_params = [{transform_indices = @transform_0, window_bounds = array<i64: 1, 4, 4, 128>}, {transform_indices = @transform_1, window_bounds = array<i64: 1, 4, 4, 128>}, {transform_indices = @transform_2, window_bounds = array<i64: 1, 4, 4, 128>}, {transform_indices = @transform_3, window_bounds = array<i64: 1, 4, 4, 128>}]} {
    %c0_i32 = arith.constant 0 : i32
    %0 = arith.cmpi eq, %arg2, %c0_i32 : i32
    %1 = arith.extui %0 : i1 to i32
    %c0_i32_0 = arith.constant 0 : i32
    %2 = arith.cmpi ne, %1, %c0_i32_0 : i32
    scf.if %2 {
      %cst_36 = arith.constant 0xFF800000 : f32
      %37 = vector.broadcast %cst_36 : f32 to vector<4x128x1xf32>
      %c0_37 = arith.constant 0 : index
      %c0_38 = arith.constant 0 : index
      %c0_39 = arith.constant 0 : index
      %38 = vector.load %arg7[%c0_37, %c0_38, %c0_39] : memref<4x128x1xf32, #tpu.memory_space<vmem>>, vector<4x128x1xf32>
      tpu.vector_store %arg7[%c0_37, %c0_38, %c0_39], %37 {strides = array<i32>} : memref<4x128x1xf32, #tpu.memory_space<vmem>>, vector<4x128x1xf32>,
      %cst_40 = arith.constant 0.000000e+00 : f32
      %39 = vector.broadcast %cst_40 : f32 to vector<4x128x1xf32>
      %c0_41 = arith.constant 0 : index
      %c0_42 = arith.constant 0 : index
      %c0_43 = arith.constant 0 : index
      %40 = vector.load %arg8[%c0_41, %c0_42, %c0_43] : memref<4x128x1xf32, #tpu.memory_space<vmem>>, vector<4x128x1xf32>
      tpu.vector_store %arg8[%c0_41, %c0_42, %c0_43], %39 {strides = array<i32>} : memref<4x128x1xf32, #tpu.memory_space<vmem>>, vector<4x128x1xf32>,
      %cst_44 = arith.constant 0.000000e+00 : f32
      %41 = vector.broadcast %cst_44 : f32 to vector<4x128x4xf32>
      %c0_45 = arith.constant 0 : index
      %c0_46 = arith.constant 0 : index
      %c0_47 = arith.constant 0 : index
      %42 = vector.load %arg9[%c0_45, %c0_46, %c0_47] : memref<4x128x4xf32, #tpu.memory_space<vmem>>, vector<4x128x4xf32>
      tpu.vector_store %arg9[%c0_45, %c0_46, %c0_47], %41 {strides = array<i32>} : memref<4x128x4xf32, #tpu.memory_space<vmem>>, vector<4x128x4xf32>,
    } else {
    }
    %c0 = arith.constant 0 : index
    %c0_1 = arith.constant 0 : index
    %c0_2 = arith.constant 0 : index
    %c0_3 = arith.constant 0 : index
    %3 = vector.load %arg3[%c0, %c0_1, %c0_2, %c0_3] : memref<1x4x4x128xf32, #tpu.memory_space<vmem>>, vector<1x4x4x128xf32>
    %4 = vector.shape_cast %3 : vector<1x4x4x128xf32> to vector<4x4x128xf32>
    %cst = arith.constant 5.000000e-01 : f32
    %5 = vector.broadcast %cst : f32 to vector<4x4x128xf32>
    %6 = arith.mulf %4, %5 : vector<4x4x128xf32>
    %c0_4 = arith.constant 0 : index
    %c0_5 = arith.constant 0 : index
    %c0_6 = arith.constant 0 : index
    %c0_7 = arith.constant 0 : index
    %7 = vector.load %arg4[%c0_4, %c0_5, %c0_6, %c0_7] : memref<1x4x4x128xf32, #tpu.memory_space<vmem>>, vector<1x4x4x128xf32>
    %8 = vector.shape_cast %7 : vector<1x4x4x128xf32> to vector<4x4x128xf32>
    %c0_8 = arith.constant 0 : index
    %c0_9 = arith.constant 0 : index
    %c0_10 = arith.constant 0 : index
    %c0_11 = arith.constant 0 : index
    %9 = vector.load %arg5[%c0_8, %c0_9, %c0_10, %c0_11] : memref<1x4x4x128xf32, #tpu.memory_space<vmem>>, vector<1x4x4x128xf32>
    %10 = vector.shape_cast %9 : vector<1x4x4x128xf32> to vector<4x4x128xf32>
    %cst_12 = arith.constant dense<0.000000e+00> : vector<4x128x128xf32>
    %11 = tpu.matmul %6, %8, %cst_12 {dimension_numbers = #tpu.dot_dimension_numbers<[1], [1], [2], [2], [0, 0, 0, 2, 1, 2], [0], [0]>} : vector<4x4x128xf32>, vector<4x4x128xf32>, vector<4x128x128xf32> -> vector<4x128x128xf32>
    %c0_13 = arith.constant 0 : index
    %c0_14 = arith.constant 0 : index
    %c0_15 = arith.constant 0 : index
    %12 = vector.load %arg7[%c0_13, %c0_14, %c0_15] : memref<4x128x1xf32, #tpu.memory_space<vmem>>, vector<4x128x1xf32>
    %cst_16 = arith.constant dense<0xFF800000> : vector<4x128xf32>
    %13 = vector.multi_reduction <maximumf>, %11, %cst_16 [2] : vector<4x128x128xf32> to vector<4x128xf32>
    %14 = vector.shape_cast %13 : vector<4x128xf32> to vector<4x128x1xf32>
    %15 = arith.maximumf %12, %14 : vector<4x128x1xf32>
    %16 = arith.subf %12, %15 : vector<4x128x1xf32>
    %17 = math.exp %16 : vector<4x128x1xf32>
    %18 = vector.broadcast %15 : vector<4x128x1xf32> to vector<4x128x128xf32>
    %19 = arith.subf %11, %18 : vector<4x128x128xf32>
    %20 = math.exp %19 : vector<4x128x128xf32>
    %c0_17 = arith.constant 0 : index
    %c0_18 = arith.constant 0 : index
    %c0_19 = arith.constant 0 : index
    %21 = vector.load %arg8[%c0_17, %c0_18, %c0_19] : memref<4x128x1xf32, #tpu.memory_space<vmem>>, vector<4x128x1xf32>
    %22 = arith.mulf %17, %21 : vector<4x128x1xf32>
    %cst_20 = arith.constant dense<0.000000e+00> : vector<4x128xf32>
    %23 = vector.multi_reduction <add>, %20, %cst_20 [2] : vector<4x128x128xf32> to vector<4x128xf32>
    %24 = vector.shape_cast %23 : vector<4x128xf32> to vector<4x128x1xf32>
    %25 = arith.addf %22, %24 : vector<4x128x1xf32>
    %c0_21 = arith.constant 0 : index
    %c0_22 = arith.constant 0 : index
    %c0_23 = arith.constant 0 : index
    %26 = vector.load %arg8[%c0_21, %c0_22, %c0_23] : memref<4x128x1xf32, #tpu.memory_space<vmem>>, vector<4x128x1xf32>
    tpu.vector_store %arg8[%c0_21, %c0_22, %c0_23], %25 {strides = array<i32>} : memref<4x128x1xf32, #tpu.memory_space<vmem>>, vector<4x128x1xf32>,
    %c0_24 = arith.constant 0 : index
    %c0_25 = arith.constant 0 : index
    %c0_26 = arith.constant 0 : index
    %27 = vector.load %arg7[%c0_24, %c0_25, %c0_26] : memref<4x128x1xf32, #tpu.memory_space<vmem>>, vector<4x128x1xf32>
    tpu.vector_store %arg7[%c0_24, %c0_25, %c0_26], %15 {strides = array<i32>} : memref<4x128x1xf32, #tpu.memory_space<vmem>>, vector<4x128x1xf32>,
    %cst_27 = arith.constant dense<0.000000e+00> : vector<4x128x4xf32>
    %28 = tpu.matmul %20, %10, %cst_27 {dimension_numbers = #tpu.dot_dimension_numbers<[2], [2], [1], [1], [0, 0, 0, 1, 1, 1], [0], [0]>} : vector<4x128x128xf32>, vector<4x4x128xf32>, vector<4x128x4xf32> -> vector<4x128x4xf32>
    %c0_28 = arith.constant 0 : index
    %c0_29 = arith.constant 0 : index
    %c0_30 = arith.constant 0 : index
    %29 = vector.load %arg9[%c0_28, %c0_29, %c0_30] : memref<4x128x4xf32, #tpu.memory_space<vmem>>, vector<4x128x4xf32>
    %30 = vector.broadcast %17 : vector<4x128x1xf32> to vector<4x128x4xf32>
    %31 = arith.mulf %30, %29 : vector<4x128x4xf32>
    %32 = arith.addf %31, %28 : vector<4x128x4xf32>
    %c0_31 = arith.constant 0 : index
    %c0_32 = arith.constant 0 : index
    %c0_33 = arith.constant 0 : index
    %33 = vector.load %arg9[%c0_31, %c0_32, %c0_33] : memref<4x128x4xf32, #tpu.memory_space<vmem>>, vector<4x128x4xf32>
    tpu.vector_store %arg9[%c0_31, %c0_32, %c0_33], %32 {strides = array<i32>} : memref<4x128x4xf32, #tpu.memory_space<vmem>>, vector<4x128x4xf32>,
    %c0_i32_34 = arith.constant 0 : i32
    %34 = arith.cmpi eq, %arg2, %c0_i32_34 : i32
    %35 = arith.extui %34 : i1 to i32
    %c0_i32_35 = arith.constant 0 : i32
    %36 = arith.cmpi ne, %35, %c0_i32_35 : i32
    scf.if %36 {
      %c0_36 = arith.constant 0 : index
      %c0_37 = arith.constant 0 : index
      %c0_38 = arith.constant 0 : index
      %37 = vector.load %arg8[%c0_36, %c0_37, %c0_38] : memref<4x128x1xf32, #tpu.memory_space<vmem>>, vector<4x128x1xf32>
      %38 = tpu.reciprocal %37 {approx = true} : vector<4x128x1xf32> -> vector<4x128x1xf32>
      %c0_39 = arith.constant 0 : index
      %c0_40 = arith.constant 0 : index
      %c0_41 = arith.constant 0 : index
      %39 = vector.load %arg9[%c0_39, %c0_40, %c0_41] : memref<4x128x4xf32, #tpu.memory_space<vmem>>, vector<4x128x4xf32>
      %40 = vector.broadcast %38 : vector<4x128x1xf32> to vector<4x128x4xf32>
      %41 = arith.mulf %39, %40 : vector<4x128x4xf32>
      %42 = vector.extract_strided_slice %41 {offsets = [0, 0, 0], sizes = [1, 128, 4], strides = [1, 1, 1]} : vector<4x128x4xf32> to vector<1x128x4xf32>
      %43 = vector.shape_cast %42 : vector<1x128x4xf32> to vector<128x4xf32>
      %44 = tpu.transpose %43, [1, 0] : vector<128x4xf32> -> vector<4x128xf32>
      %c0_42 = arith.constant 0 : index
      %c0_43 = arith.constant 0 : index
      %c0_44 = arith.constant 0 : index
      %c0_45 = arith.constant 0 : index
      %45 = vector.load %arg6[%c0_42, %c0_43, %c0_44, %c0_45] : memref<1x4x4x128xf32, #tpu.memory_space<vmem>>, vector<1x1x4x128xf32>
      %46 = vector.shape_cast %45 : vector<1x1x4x128xf32> to vector<4x128xf32>
      %47 = vector.shape_cast %44 : vector<4x128xf32> to vector<1x1x4x128xf32>
      tpu.vector_store %arg6[%c0_42, %c0_43, %c0_44, %c0_45], %47 {strides = array<i32>} : memref<1x4x4x128xf32, #tpu.memory_space<vmem>>, vector<1x1x4x128xf32>,
      %48 = vector.extract_strided_slice %41 {offsets = [1, 0, 0], sizes = [1, 128, 4], strides = [1, 1, 1]} : vector<4x128x4xf32> to vector<1x128x4xf32>
      %49 = vector.shape_cast %48 : vector<1x128x4xf32> to vector<128x4xf32>
      %50 = tpu.transpose %49, [1, 0] : vector<128x4xf32> -> vector<4x128xf32>
      %c0_46 = arith.constant 0 : index
      %c1 = arith.constant 1 : index
      %c0_47 = arith.constant 0 : index
      %c0_48 = arith.constant 0 : index
      %51 = vector.load %arg6[%c0_46, %c1, %c0_47, %c0_48] : memref<1x4x4x128xf32, #tpu.memory_space<vmem>>, vector<1x1x4x128xf32>
      %52 = vector.shape_cast %51 : vector<1x1x4x128xf32> to vector<4x128xf32>
      %53 = vector.shape_cast %50 : vector<4x128xf32> to vector<1x1x4x128xf32>
      tpu.vector_store %arg6[%c0_46, %c1, %c0_47, %c0_48], %53 {strides = array<i32>} : memref<1x4x4x128xf32, #tpu.memory_space<vmem>>, vector<1x1x4x128xf32>,
      %54 = vector.extract_strided_slice %41 {offsets = [2, 0, 0], sizes = [1, 128, 4], strides = [1, 1, 1]} : vector<4x128x4xf32> to vector<1x128x4xf32>
      %55 = vector.shape_cast %54 : vector<1x128x4xf32> to vector<128x4xf32>
      %56 = tpu.transpose %55, [1, 0] : vector<128x4xf32> -> vector<4x128xf32>
      %c0_49 = arith.constant 0 : index
      %c2 = arith.constant 2 : index
      %c0_50 = arith.constant 0 : index
      %c0_51 = arith.constant 0 : index
      %57 = vector.load %arg6[%c0_49, %c2, %c0_50, %c0_51] : memref<1x4x4x128xf32, #tpu.memory_space<vmem>>, vector<1x1x4x128xf32>
      %58 = vector.shape_cast %57 : vector<1x1x4x128xf32> to vector<4x128xf32>
      %59 = vector.shape_cast %56 : vector<4x128xf32> to vector<1x1x4x128xf32>
      tpu.vector_store %arg6[%c0_49, %c2, %c0_50, %c0_51], %59 {strides = array<i32>} : memref<1x4x4x128xf32, #tpu.memory_space<vmem>>, vector<1x1x4x128xf32>,
      %60 = vector.extract_strided_slice %41 {offsets = [3, 0, 0], sizes = [1, 128, 4], strides = [1, 1, 1]} : vector<4x128x4xf32> to vector<1x128x4xf32>
      %61 = vector.shape_cast %60 : vector<1x128x4xf32> to vector<128x4xf32>
      %62 = tpu.transpose %61, [1, 0] : vector<128x4xf32> -> vector<4x128xf32>
      %c0_52 = arith.constant 0 : index
      %c3 = arith.constant 3 : index
      %c0_53 = arith.constant 0 : index
      %c0_54 = arith.constant 0 : index
      %63 = vector.load %arg6[%c0_52, %c3, %c0_53, %c0_54] : memref<1x4x4x128xf32, #tpu.memory_space<vmem>>, vector<1x1x4x128xf32>
      %64 = vector.shape_cast %63 : vector<1x1x4x128xf32> to vector<4x128xf32>
      %65 = vector.shape_cast %62 : vector<4x128xf32> to vector<1x1x4x128xf32>
      tpu.vector_store %arg6[%c0_52, %c3, %c0_53, %c0_54], %65 {strides = array<i32>} : memref<1x4x4x128xf32, #tpu.memory_space<vmem>>, vector<1x1x4x128xf32>,
    } else {
    }
    return
  }
  func.func @transform_0(%arg0: i32, %arg1: i32, %arg2: i32) -> (i32, i32, i32, i32) {
    %c0_i32 = arith.constant 0 : i32
    %c0_i32_0 = arith.constant 0 : i32
    %c0_i32_1 = arith.constant 0 : i32
    return %arg0, %c0_i32, %c0_i32_0, %arg1 : i32, i32, i32, i32
  }
  func.func @transform_1(%arg0: i32, %arg1: i32, %arg2: i32) -> (i32, i32, i32, i32) {
    %c0_i32 = arith.constant 0 : i32
    %c0_i32_0 = arith.constant 0 : i32
    %c0_i32_1 = arith.constant 0 : i32
    return %arg0, %c0_i32, %c0_i32_0, %arg2 : i32, i32, i32, i32
  }
  func.func @transform_2(%arg0: i32, %arg1: i32, %arg2: i32) -> (i32, i32, i32, i32) {
    %c0_i32 = arith.constant 0 : i32
    %c0_i32_0 = arith.constant 0 : i32
    %c0_i32_1 = arith.constant 0 : i32
    return %arg0, %c0_i32, %c0_i32_0, %arg2 : i32, i32, i32, i32
  }
  func.func @transform_3(%arg0: i32, %arg1: i32, %arg2: i32) -> (i32, i32, i32, i32) {
    %c0_i32 = arith.constant 0 : i32
    %c0_i32_0 = arith.constant 0 : i32
    %c0_i32_1 = arith.constant 0 : i32
    return %arg0, %c0_i32, %c0_i32_0, %arg1 : i32, i32, i32, i32
  }
}

</mosaic_0001>

<llo_original>
// kernel: tpu_custom_call.1
$region0: #{tpu_custom_call.1}
  #allocation0 [shape = 'u32[]', space=smem, size = 0x4, offset = 0x4, fixed_abs, tag = 'smem constant byte address 0x4 - core index']
  #allocation1 [shape = 'u32[72,128]{1,0:T(1,128)}', space=vmem, size = 0x9000, scoped, tag = 'internal scratch']
  #allocation2 [shape = 'f32[4,128,1]{2,1,0:T(8,128)}', space=vmem, size = 0x40000, scoped, tag = 'scratch operand']
  #allocation3 [shape = 'f32[4,128,1]{2,1,0:T(8,128)}', space=vmem, size = 0x40000, scoped, tag = 'scratch operand']
  #allocation4 [shape = 'f32[4,128,4]{2,1,0:T(8,128)}', space=vmem, size = 0x40000, scoped, tag = 'scratch operand']
  %s0 = inlined_call_operand.hbm [shape: f32[2,4,4,128], index: 0, kind: input, shape index: {}]
  %s1 = inlined_call_operand.hbm [shape: f32[2,4,4,128], index: 1, kind: input, shape index: {}]
  %s2 = inlined_call_operand.hbm [shape: f32[2,4,4,128], index: 2, kind: input, shape index: {}]
  %s3 = inlined_call_operand.hbm [shape: f32[2,4,4,128], index: 3, kind: output, shape index: {}]
  %s4 = sld [smem:[#allocation0]]
  $region65: #{tpu_custom_call.1} parent=0
    _
  %s6 = ssub.s32 1, %s4
  %s7 = scalar_select 0, %s6, %s4
  $region1: #{tpu_custom_call.1} parent=0
    #allocation5 [shape = 'u8[16384]{0}', space=vmem, size = 0x4000, scoped, tag = 'input window, operand 0']
    #allocation6 [shape = 's32[2]{0}', space=sflag, size = 0x8, scoped, tag = 'scoped memory for tpu_custom_call.1']
    #allocation7 [shape = 's32[2]{0}', space=sflag, size = 0x8, scoped, tag = 'scoped memory for tpu_custom_call.1']
    #allocation8 [shape = 'u8[16384]{0}', space=vmem, size = 0x4000, scoped, tag = 'input window, operand 1']
    #allocation9 [shape = 's32[2]{0}', space=sflag, size = 0x8, scoped, tag = 'scoped memory for tpu_custom_call.1']
    #allocation10 [shape = 'u8[16384]{0}', space=vmem, size = 0x4000, scoped, tag = 'input window, operand 2']
    #allocation11 [shape = 'u8[16384]{0}', space=vmem, size = 0x4000, scoped, tag = 'output window, operand 0']
    %8 = vsyncpa [#allocation6], 0
    %s9 = scalar_lea.sflag [#allocation6], 1
    %10 = vsyncpa %s9, 0
    %11 = vsyncpa [#allocation9], 0
    %s12 = scalar_lea.sflag [#allocation9], 1
    %13 = vsyncpa %s12, 0
    %14 = vsyncpa [#allocation7], 0
    %s15 = scalar_lea.sflag [#allocation7], 1
    %16 = vsyncpa %s15, 0
    loop: start=0, step=1, limit=4
    $region2: #{tpu_custom_call.1} parent=1 // loop_pre_header
      _
    $region3: #{tpu_custom_call.1} parent=1 // loop_header
      %s18 = sphi 0, %s22
      %p19 = scmp.ge.s32.totalorder %s18, 4
      %s25 = sphi 0, %s44
      %s26 = sphi 0, %s40
      %s27 = sphi 0, %s36
      %s28 = sphi 0, %s25
      %s29 = sphi 0, %s26
      %s30 = sphi 0, %s27
      %s31 = sphi 0, %s28
      %s32 = sphi 0, %s29
      %s33 = sphi 0, %s30
      %s49 = sphi 0, %s51
      %s52 = sphi 0, %s49
      %s53 = sphi 0, %s52
      %s69 = sphi 0, %s53
      %s77 = sphi 0, %s79
      %s80 = sphi 0, %s77
      %s81 = sphi 0, %s80
      %s97 = sphi 0, %s81
      %s105 = sphi 0, %s107
      %s108 = sphi 0, %s105
      %s109 = sphi 0, %s108
      %s125 = sphi 0, %s109
      %s133 = sphi 0, %s135
      %s136 = sphi 0, %s133
      %s137 = sphi 0, %s136
      %s153 = sphi 0, %s137
    $region4: #{tpu_custom_call.1} parent=1 // loop_header_branch
      %21 = sbr.rel (%p19) target = $region8
    $region5: #{tpu_custom_call.1} parent=1 // loop_body
      %s23 = ssub.s32 %s18, 1
      %s24 = ssub.s32 %s18, 2
      %s34 = sadd.s32 1, %s27
      %p35 = scmp.ge.s32.totalorder %s34, 1
      %s36 = scalar_select %p35, 0, %s34
      %s37 = sadd.s32 1, %s26
      %s38 = scalar_select %p35, %s37, %s26
      %p39 = scmp.ge.s32.totalorder %s38, 1
      %s40 = scalar_select %p39, 0, %s38
      %s41 = sadd.s32 1, %s25
      %s42 = scalar_select %p39, %s41, %s25
      %p43 = scmp.ge.s32.totalorder %s42, 2
      %s44 = scalar_select %p43, 0, %s42
      %s45 = ssub.s32 %s25, %s44
      %s46 = ssub.s32 %s26, %s40
      %s47 = sor.u32 %s45, %s46
      %p48 = scmp.eq.s32.totalorder %s47, 0
      %s50 = sadd.s32 %s49, 1
      %s51 = scalar_select %p48, %s49, %s50
      %p54 = pneg %p48
      %p55 = scmp.eq.s32.totalorder %s18, 1
      %p56 = por %p54, %p55
      %p57 = scmp.ne.s32.totalorder %s49, %s52
      %p58 = scmp.eq.s32.totalorder %s18, 0
      %p59 = por %p57, %p58
      %p60 = scmp.ne.s32.totalorder %s49, %s52
      %p61 = scmp.eq.s32.totalorder %s23, 1
      %p62 = por %p60, %p61
      %p63 = scmp.ne.s32.totalorder %s52, %s53
      %p64 = scmp.eq.s32.totalorder %s23, 0
      %p65 = por %p63, %p64
      %p66 = scmp.ne.s32.totalorder %s52, %s53
      %p67 = scmp.eq.s32.totalorder %s24, 1
      %p68 = por %p66, %p67
      %p70 = scmp.ne.s32.totalorder %s53, %s69
      %p71 = scmp.eq.s32.totalorder %s24, 0
      %p72 = por %p70, %p71
      %s73 = ssub.s32 %s25, %s44
      %s74 = ssub.s32 %s27, %s36
      %s75 = sor.u32 %s73, %s74
      %p76 = scmp.eq.s32.totalorder %s75, 0
      %s78 = sadd.s32 %s77, 1
      %s79 = scalar_select %p76, %s77, %s78
      %p82 = pneg %p76
      %p83 = scmp.eq.s32.totalorder %s18, 1
      %p84 = por %p82, %p83
      %p85 = scmp.ne.s32.totalorder %s77, %s80
      %p86 = scmp.eq.s32.totalorder %s18, 0
      %p87 = por %p85, %p86
      %p88 = scmp.ne.s32.totalorder %s77, %s80
      %p89 = scmp.eq.s32.totalorder %s23, 1
      %p90 = por %p88, %p89
      %p91 = scmp.ne.s32.totalorder %s80, %s81
      %p92 = scmp.eq.s32.totalorder %s23, 0
      %p93 = por %p91, %p92
      %p94 = scmp.ne.s32.totalorder %s80, %s81
      %p95 = scmp.eq.s32.totalorder %s24, 1
      %p96 = por %p94, %p95
      %p98 = scmp.ne.s32.totalorder %s81, %s97
      %p99 = scmp.eq.s32.totalorder %s24, 0
      %p100 = por %p98, %p99
      %s101 = ssub.s32 %s25, %s44
      %s102 = ssub.s32 %s27, %s36
      %s103 = sor.u32 %s101, %s102
      %p104 = scmp.eq.s32.totalorder %s103, 0
      %s106 = sadd.s32 %s105, 1
      %s107 = scalar_select %p104, %s105, %s106
      %p110 = pneg %p104
      %p111 = scmp.eq.s32.totalorder %s18, 1
      %p112 = por %p110, %p111
      %p113 = scmp.ne.s32.totalorder %s105, %s108
      %p114 = scmp.eq.s32.totalorder %s18, 0
      %p115 = por %p113, %p114
      %p116 = scmp.ne.s32.totalorder %s105, %s108
      %p117 = scmp.eq.s32.totalorder %s23, 1
      %p118 = por %p116, %p117
      %p119 = scmp.ne.s32.totalorder %s108, %s109
      %p120 = scmp.eq.s32.totalorder %s23, 0
      %p121 = por %p119, %p120
      %p122 = scmp.ne.s32.totalorder %s108, %s109
      %p123 = scmp.eq.s32.totalorder %s24, 1
      %p124 = por %p122, %p123
      %p126 = scmp.ne.s32.totalorder %s109, %s125
      %p127 = scmp.eq.s32.totalorder %s24, 0
      %p128 = por %p126, %p127
      %s129 = ssub.s32 %s25, %s44
      %s130 = ssub.s32 %s26, %s40
      %s131 = sor.u32 %s129, %s130
      %p132 = scmp.eq.s32.totalorder %s131, 0
      %s134 = sadd.s32 %s133, 1
      %s135 = scalar_select %p132, %s133, %s134
      %p138 = pneg %p132
      %p139 = scmp.eq.s32.totalorder %s18, 1
      %p140 = por %p138, %p139
      %p141 = scmp.ne.s32.totalorder %s133, %s136
      %p142 = scmp.eq.s32.totalorder %s18, 0
      %p143 = por %p141, %p142
      %p144 = scmp.ne.s32.totalorder %s133, %s136
      %p145 = scmp.eq.s32.totalorder %s23, 1
      %p146 = por %p144, %p145
      %p147 = scmp.ne.s32.totalorder %s136, %s137
      %p148 = scmp.eq.s32.totalorder %s23, 0
      %p149 = por %p147, %p148
      %p150 = scmp.ne.s32.totalorder %s136, %s137
      %p151 = scmp.eq.s32.totalorder %s24, 1
      %p152 = por %p150, %p151
      %p154 = scmp.ne.s32.totalorder %s137, %s153
      %p155 = scmp.eq.s32.totalorder %s24, 0
      %p156 = por %p154, %p155
      %p157 = scmp.le.s32.totalorder 1, %s18
      %p158 = scmp.lt.s32.totalorder %s18, 3
      %p159 = pnand %p157, %p158
      %p160 = pneg %p159
      // Predicated region
      $region9: #{tpu_custom_call.1} parent=5 // pred_check
        _
      $region10: #{tpu_custom_call.1} parent=5 // pred_check_branch
        %162 = sbr.rel (%p159) target = $region12
      $region11: #{tpu_custom_call.1} parent=5 // pred_region
        %s163 = ssub.s32 %s18, 1
      $region12: #{tpu_custom_call.1} parent=5 // pred_fallthru
        _
      %p164 = scmp.lt.s32.totalorder %s18, 2
      // Predicated region
      $region13: #{tpu_custom_call.1} parent=5 // pred_check
        %p165 = pneg %p164
      $region14: #{tpu_custom_call.1} parent=5 // pred_check_branch
        %167 = sbr.rel (%p165) target = $region16
      $region15: #{tpu_custom_call.1} parent=5 // pred_region
        // Predicated region
        $region17: #{tpu_custom_call.1} parent=15 // pred_check
          %p168 = pneg %p59
        $region18: #{tpu_custom_call.1} parent=15 // pred_check_branch
          %170 = sbr.rel (%p168) target = $region20
        $region19: #{tpu_custom_call.1} parent=15 // pred_region
          %s171 = sand.u32 %s49, 1
          %s172 = scalar_lea.sflag [#allocation6], %s171
          %s173 = sand.u32 %s49, 1
          %s174 = smul.addr %s173, 16
          %s175 = scalar_lea.vmem [#allocation5], %s174
          %177 = vsyncadd %s172, 0
          %s178 = smul.addr %s25, 4
          %s179 = sadd.s32 %s26, %s178
          %s180 = smul.addr %s179, 4
          %s181 = scalar_lea.hbm %s0, %s180
          %s182 = sshll.u32 %s181, 4
          %s183 = int_to_ptr.hbm [resolvable:$true] %s182
          %s184 = sshll.u32 %s175, 4
          %s185 = int_to_ptr.vmem [resolvable:$true] %s184
          %190 = dma.hbm_to_vmem [thread:$0]  %s183, 256, %s185, %s172, 64, 64, 4
        $region20: #{tpu_custom_call.1} parent=15 // pred_fallthru
          _
        // Predicated region
        $region21: #{tpu_custom_call.1} parent=15 // pred_check
          %p191 = pneg %p87
        $region22: #{tpu_custom_call.1} parent=15 // pred_check_branch
          %193 = sbr.rel (%p191) target = $region24
        $region23: #{tpu_custom_call.1} parent=15 // pred_region
          %s194 = sand.u32 %s18, 1
          %s195 = scalar_lea.sflag [#allocation9], %s194
          %s196 = sand.u32 %s77, 1
          %s197 = smul.addr %s196, 16
          %s198 = scalar_lea.vmem [#allocation8], %s197
          %200 = vsyncadd %s195, 0
          %s201 = smul.addr %s25, 4
          %s202 = sadd.s32 %s27, %s201
          %s203 = smul.addr %s202, 4
          %s204 = scalar_lea.hbm %s1, %s203
          %s205 = sshll.u32 %s204, 4
          %s206 = int_to_ptr.hbm [resolvable:$true] %s205
          %s207 = sshll.u32 %s198, 4
          %s208 = int_to_ptr.vmem [resolvable:$true] %s207
          %213 = dma.hbm_to_vmem [thread:$0]  %s206, 256, %s208, %s195, 64, 64, 4
        $region24: #{tpu_custom_call.1} parent=15 // pred_fallthru
          _
        // Predicated region
        $region25: #{tpu_custom_call.1} parent=15 // pred_check
          %p214 = pneg %p115
        $region26: #{tpu_custom_call.1} parent=15 // pred_check_branch
          %216 = sbr.rel (%p214) target = $region28
        $region27: #{tpu_custom_call.1} parent=15 // pred_region
          %s217 = sand.u32 %s18, 1
          %s218 = scalar_lea.sflag [#allocation9], %s217
          %s219 = sand.u32 %s105, 1
          %s220 = smul.addr %s219, 16
          %s221 = scalar_lea.vmem [#allocation10], %s220
          %223 = vsyncadd %s218, 0
          %s224 = smul.addr %s25, 4
          %s225 = sadd.s32 %s27, %s224
          %s226 = smul.addr %s225, 4
          %s227 = scalar_lea.hbm %s2, %s226
          %s228 = sshll.u32 %s227, 4
          %s229 = int_to_ptr.hbm [resolvable:$true] %s228
          %s230 = sshll.u32 %s221, 4
          %s231 = int_to_ptr.vmem [resolvable:$true] %s230
          %236 = dma.hbm_to_vmem [thread:$0]  %s229, 256, %s231, %s218, 64, 64, 4
        $region28: #{tpu_custom_call.1} parent=15 // pred_fallthru
          _
      $region16: #{tpu_custom_call.1} parent=5 // pred_fallthru
        _
      %p237 = scmp.le.s32.totalorder 1, %s18
      %p238 = scmp.lt.s32.totalorder %s18, 3
      %p239 = pnand %p237, %p238
      %p240 = pneg %p239
      // Predicated region
      $region29: #{tpu_custom_call.1} parent=5 // pred_check
        _
      $region30: #{tpu_custom_call.1} parent=5 // pred_check_branch
        %242 = sbr.rel (%p239) target = $region32
      $region31: #{tpu_custom_call.1} parent=5 // pred_region
        %s243 = ssub.s32 %s18, 1
        %s244 = sand.u32 %s52, 1
        %s245 = scalar_lea.sflag [#allocation6], %s244
        %s246 = sand.u32 %s52, 1
        %s247 = smul.addr %s246, 16
        %s248 = scalar_lea.vmem [#allocation5], %s247
        // Predicated region
        $region33: #{tpu_custom_call.1} parent=31 // pred_check
          %p249 = pneg %p65
        $region34: #{tpu_custom_call.1} parent=31 // pred_check_branch
          %251 = sbr.rel (%p249) target = $region36
        $region35: #{tpu_custom_call.1} parent=31 // pred_region
          %253 = dma.done %s245, 256
        $region36: #{tpu_custom_call.1} parent=31 // pred_fallthru
          _
        %s254 = sand.u32 %s23, 1
        %s255 = scalar_lea.sflag [#allocation9], %s254
        %s256 = sand.u32 %s80, 1
        %s257 = smul.addr %s256, 16
        %s258 = scalar_lea.vmem [#allocation8], %s257
        // Predicated region
        $region37: #{tpu_custom_call.1} parent=31 // pred_check
          %p259 = pneg %p93
        $region38: #{tpu_custom_call.1} parent=31 // pred_check_branch
          %261 = sbr.rel (%p259) target = $region40
        $region39: #{tpu_custom_call.1} parent=31 // pred_region
          %263 = dma.done %s255, 256
        $region40: #{tpu_custom_call.1} parent=31 // pred_fallthru
          _
        %s264 = sand.u32 %s23, 1
        %s265 = scalar_lea.sflag [#allocation9], %s264
        %s266 = sand.u32 %s108, 1
        %s267 = smul.addr %s266, 16
        %s268 = scalar_lea.vmem [#allocation10], %s267
        // Predicated region
        $region41: #{tpu_custom_call.1} parent=31 // pred_check
          %p269 = pneg %p121
        $region42: #{tpu_custom_call.1} parent=31 // pred_check_branch
          %271 = sbr.rel (%p269) target = $region44
        $region43: #{tpu_custom_call.1} parent=31 // pred_region
          %273 = dma.done %s265, 256
        $region44: #{tpu_custom_call.1} parent=31 // pred_fallthru
          _
        %s274 = sand.u32 %s52, 1
        %s275 = scalar_lea.sflag [#allocation6], %s274
        %s276 = sand.u32 %s52, 1
        %s277 = smul.addr %s276, 16
        %s278 = scalar_lea.vmem [#allocation5], %s277
        %p279 = pneg %p65
        %p280 = pneg %p62
        %s281 = sand.u32 %s23, 1
        %s282 = scalar_lea.sflag [#allocation9], %s281
        %s283 = sand.u32 %s80, 1
        %s284 = smul.addr %s283, 16
        %s285 = scalar_lea.vmem [#allocation8], %s284
        %p286 = pneg %p93
        %p287 = pneg %p90
        %s288 = sand.u32 %s23, 1
        %s289 = scalar_lea.sflag [#allocation9], %s288
        %s290 = sand.u32 %s108, 1
        %s291 = smul.addr %s290, 16
        %s292 = scalar_lea.vmem [#allocation10], %s291
        %p293 = pneg %p121
        %p294 = pneg %p118
        %p295 = pneg %p149
        %p296 = pneg %p146
        %s297 = sand.u32 %s136, 1
        %s298 = scalar_lea.sflag [#allocation7], %s297
        %s299 = sand.u32 %s136, 1
        %s300 = smul.addr %s299, 16
        %s301 = scalar_lea.vmem [#allocation11], %s300
        %p302 = scmp.eq.s32.totalorder %s30, 0
        // Predicated region
        $region45: #{tpu_custom_call.1} parent=31 // pred_check
          %p303 = pneg %p302
        $region46: #{tpu_custom_call.1} parent=31 // pred_check_branch
          %305 = sbr.rel (%p303) target = $region48
        $region47: #{tpu_custom_call.1} parent=31 // pred_region
          %vm306 = vcmask 7168
          %307 = vst.msk [vmem:[#allocation2] sm:$0xff] %vm306, -inf
          %308 = vst.msk [vmem:[#allocation2 + $0x8] sm:$0xff] %vm306, -inf
          %309 = vst.msk [vmem:[#allocation2 + $0x10] sm:$0xff] %vm306, -inf
          %310 = vst.msk [vmem:[#allocation2 + $0x18] sm:$0xff] %vm306, -inf
          %311 = vst.msk [vmem:[#allocation2 + $0x20] sm:$0xff] %vm306, -inf
          %312 = vst.msk [vmem:[#allocation2 + $0x28] sm:$0xff] %vm306, -inf
          %313 = vst.msk [vmem:[#allocation2 + $0x30] sm:$0xff] %vm306, -inf
          %314 = vst.msk [vmem:[#allocation2 + $0x38] sm:$0xff] %vm306, -inf
          %315 = vst.msk [vmem:[#allocation2 + $0x40] sm:$0xff] %vm306, -inf
          %316 = vst.msk [vmem:[#allocation2 + $0x48] sm:$0xff] %vm306, -inf
          %317 = vst.msk [vmem:[#allocation2 + $0x50] sm:$0xff] %vm306, -inf
          %318 = vst.msk [vmem:[#allocation2 + $0x58] sm:$0xff] %vm306, -inf
          %319 = vst.msk [vmem:[#allocation2 + $0x60] sm:$0xff] %vm306, -inf
          %320 = vst.msk [vmem:[#allocation2 + $0x68] sm:$0xff] %vm306, -inf
          %321 = vst.msk [vmem:[#allocation2 + $0x70] sm:$0xff] %vm306, -inf
          %322 = vst.msk [vmem:[#allocation2 + $0x78] sm:$0xff] %vm306, -inf
          %323 = vst.msk [vmem:[#allocation2 + $0x80] sm:$0xff] %vm306, -inf
          %324 = vst.msk [vmem:[#allocation2 + $0x88] sm:$0xff] %vm306, -inf
          %325 = vst.msk [vmem:[#allocation2 + $0x90] sm:$0xff] %vm306, -inf
          %326 = vst.msk [vmem:[#allocation2 + $0x98] sm:$0xff] %vm306, -inf
          %327 = vst.msk [vmem:[#allocation2 + $0xa0] sm:$0xff] %vm306, -inf
          %328 = vst.msk [vmem:[#allocation2 + $0xa8] sm:$0xff] %vm306, -inf
          %329 = vst.msk [vmem:[#allocation2 + $0xb0] sm:$0xff] %vm306, -inf
          %330 = vst.msk [vmem:[#allocation2 + $0xb8] sm:$0xff] %vm306, -inf
          %331 = vst.msk [vmem:[#allocation2 + $0xc0] sm:$0xff] %vm306, -inf
          %332 = vst.msk [vmem:[#allocation2 + $0xc8] sm:$0xff] %vm306, -inf
          %333 = vst.msk [vmem:[#allocation2 + $0xd0] sm:$0xff] %vm306, -inf
          %334 = vst.msk [vmem:[#allocation2 + $0xd8] sm:$0xff] %vm306, -inf
          %335 = vst.msk [vmem:[#allocation2 + $0xe0] sm:$0xff] %vm306, -inf
          %336 = vst.msk [vmem:[#allocation2 + $0xe8] sm:$0xff] %vm306, -inf
          %337 = vst.msk [vmem:[#allocation2 + $0xf0] sm:$0xff] %vm306, -inf
          %338 = vst.msk [vmem:[#allocation2 + $0xf8] sm:$0xff] %vm306, -inf
          %339 = vst.msk [vmem:[#allocation2 + $0x100] sm:$0xff] %vm306, -inf
          %340 = vst.msk [vmem:[#allocation2 + $0x108] sm:$0xff] %vm306, -inf
          %341 = vst.msk [vmem:[#allocation2 + $0x110] sm:$0xff] %vm306, -inf
          %342 = vst.msk [vmem:[#allocation2 + $0x118] sm:$0xff] %vm306, -inf
          %343 = vst.msk [vmem:[#allocation2 + $0x120] sm:$0xff] %vm306, -inf
          %344 = vst.msk [vmem:[#allocation2 + $0x128] sm:$0xff] %vm306, -inf
          %345 = vst.msk [vmem:[#allocation2 + $0x130] sm:$0xff] %vm306, -inf
          %346 = vst.msk [vmem:[#allocation2 + $0x138] sm:$0xff] %vm306, -inf
          %347 = vst.msk [vmem:[#allocation2 + $0x140] sm:$0xff] %vm306, -inf
          %348 = vst.msk [vmem:[#allocation2 + $0x148] sm:$0xff] %vm306, -inf
          %349 = vst.msk [vmem:[#allocation2 + $0x150] sm:$0xff] %vm306, -inf
          %350 = vst.msk [vmem:[#allocation2 + $0x158] sm:$0xff] %vm306, -inf
          %351 = vst.msk [vmem:[#allocation2 + $0x160] sm:$0xff] %vm306, -inf
          %352 = vst.msk [vmem:[#allocation2 + $0x168] sm:$0xff] %vm306, -inf
          %353 = vst.msk [vmem:[#allocation2 + $0x170] sm:$0xff] %vm306, -inf
          %354 = vst.msk [vmem:[#allocation2 + $0x178] sm:$0xff] %vm306, -inf
          %355 = vst.msk [vmem:[#allocation2 + $0x180] sm:$0xff] %vm306, -inf
          %356 = vst.msk [vmem:[#allocation2 + $0x188] sm:$0xff] %vm306, -inf
          %357 = vst.msk [vmem:[#allocation2 + $0x190] sm:$0xff] %vm306, -inf
          %358 = vst.msk [vmem:[#allocation2 + $0x198] sm:$0xff] %vm306, -inf
          %359 = vst.msk [vmem:[#allocation2 + $0x1a0] sm:$0xff] %vm306, -inf
          %360 = vst.msk [vmem:[#allocation2 + $0x1a8] sm:$0xff] %vm306, -inf
          %361 = vst.msk [vmem:[#allocation2 + $0x1b0] sm:$0xff] %vm306, -inf
          %362 = vst.msk [vmem:[#allocation2 + $0x1b8] sm:$0xff] %vm306, -inf
          %363 = vst.msk [vmem:[#allocation2 + $0x1c0] sm:$0xff] %vm306, -inf
          %364 = vst.msk [vmem:[#allocation2 + $0x1c8] sm:$0xff] %vm306, -inf
          %365 = vst.msk [vmem:[#allocation2 + $0x1d0] sm:$0xff] %vm306, -inf
          %366 = vst.msk [vmem:[#allocation2 + $0x1d8] sm:$0xff] %vm306, -inf
          %367 = vst.msk [vmem:[#allocation2 + $0x1e0] sm:$0xff] %vm306, -inf
          %368 = vst.msk [vmem:[#allocation2 + $0x1e8] sm:$0xff] %vm306, -inf
          %369 = vst.msk [vmem:[#allocation2 + $0x1f0] sm:$0xff] %vm306, -inf
          %370 = vst.msk [vmem:[#allocation2 + $0x1f8] sm:$0xff] %vm306, -inf
          %371 = vst.msk [vmem:[#allocation3] sm:$0xff] %vm306, 0.0
          %372 = vst.msk [vmem:[#allocation3 + $0x8] sm:$0xff] %vm306, 0.0
          %373 = vst.msk [vmem:[#allocation3 + $0x10] sm:$0xff] %vm306, 0.0
          %374 = vst.msk [vmem:[#allocation3 + $0x18] sm:$0xff] %vm306, 0.0
          %375 = vst.msk [vmem:[#allocation3 + $0x20] sm:$0xff] %vm306, 0.0
          %376 = vst.msk [vmem:[#allocation3 + $0x28] sm:$0xff] %vm306, 0.0
          %377 = vst.msk [vmem:[#allocation3 + $0x30] sm:$0xff] %vm306, 0.0
          %378 = vst.msk [vmem:[#allocation3 + $0x38] sm:$0xff] %vm306, 0.0
          %379 = vst.msk [vmem:[#allocation3 + $0x40] sm:$0xff] %vm306, 0.0
          %380 = vst.msk [vmem:[#allocation3 + $0x48] sm:$0xff] %vm306, 0.0
          %381 = vst.msk [vmem:[#allocation3 + $0x50] sm:$0xff] %vm306, 0.0
          %382 = vst.msk [vmem:[#allocation3 + $0x58] sm:$0xff] %vm306, 0.0
          %383 = vst.msk [vmem:[#allocation3 + $0x60] sm:$0xff] %vm306, 0.0
          %384 = vst.msk [vmem:[#allocation3 + $0x68] sm:$0xff] %vm306, 0.0
          %385 = vst.msk [vmem:[#allocation3 + $0x70] sm:$0xff] %vm306, 0.0
          %386 = vst.msk [vmem:[#allocation3 + $0x78] sm:$0xff] %vm306, 0.0
          %387 = vst.msk [vmem:[#allocation3 + $0x80] sm:$0xff] %vm306, 0.0
          %388 = vst.msk [vmem:[#allocation3 + $0x88] sm:$0xff] %vm306, 0.0
          %389 = vst.msk [vmem:[#allocation3 + $0x90] sm:$0xff] %vm306, 0.0
          %390 = vst.msk [vmem:[#allocation3 + $0x98] sm:$0xff] %vm306, 0.0
          %391 = vst.msk [vmem:[#allocation3 + $0xa0] sm:$0xff] %vm306, 0.0
          %392 = vst.msk [vmem:[#allocation3 + $0xa8] sm:$0xff] %vm306, 0.0
          %393 = vst.msk [vmem:[#allocation3 + $0xb0] sm:$0xff] %vm306, 0.0
          %394 = vst.msk [vmem:[#allocation3 + $0xb8] sm:$0xff] %vm306, 0.0
          %395 = vst.msk [vmem:[#allocation3 + $0xc0] sm:$0xff] %vm306, 0.0
          %396 = vst.msk [vmem:[#allocation3 + $0xc8] sm:$0xff] %vm306, 0.0
          %397 = vst.msk [vmem:[#allocation3 + $0xd0] sm:$0xff] %vm306, 0.0
          %398 = vst.msk [vmem:[#allocation3 + $0xd8] sm:$0xff] %vm306, 0.0
          %399 = vst.msk [vmem:[#allocation3 + $0xe0] sm:$0xff] %vm306, 0.0
          %400 = vst.msk [vmem:[#allocation3 + $0xe8] sm:$0xff] %vm306, 0.0
          %401 = vst.msk [vmem:[#allocation3 + $0xf0] sm:$0xff] %vm306, 0.0
          %402 = vst.msk [vmem:[#allocation3 + $0xf8] sm:$0xff] %vm306, 0.0
          %403 = vst.msk [vmem:[#allocation3 + $0x100] sm:$0xff] %vm306, 0.0
          %404 = vst.msk [vmem:[#allocation3 + $0x108] sm:$0xff] %vm306, 0.0
          %405 = vst.msk [vmem:[#allocation3 + $0x110] sm:$0xff] %vm306, 0.0
          %406 = vst.msk [vmem:[#allocation3 + $0x118] sm:$0xff] %vm306, 0.0
          %407 = vst.msk [vmem:[#allocation3 + $0x120] sm:$0xff] %vm306, 0.0
          %408 = vst.msk [vmem:[#allocation3 + $0x128] sm:$0xff] %vm306, 0.0
          %409 = vst.msk [vmem:[#allocation3 + $0x130] sm:$0xff] %vm306, 0.0
          %410 = vst.msk [vmem:[#allocation3 + $0x138] sm:$0xff] %vm306, 0.0
          %411 = vst.msk [vmem:[#allocation3 + $0x140] sm:$0xff] %vm306, 0.0
          %412 = vst.msk [vmem:[#allocation3 + $0x148] sm:$0xff] %vm306, 0.0
          %413 = vst.msk [vmem:[#allocation3 + $0x150] sm:$0xff] %vm306, 0.0
          %414 = vst.msk [vmem:[#allocation3 + $0x158] sm:$0xff] %vm306, 0.0
          %415 = vst.msk [vmem:[#allocation3 + $0x160] sm:$0xff] %vm306, 0.0
          %416 = vst.msk [vmem:[#allocation3 + $0x168] sm:$0xff] %vm306, 0.0
          %417 = vst.msk [vmem:[#allocation3 + $0x170] sm:$0xff] %vm306, 0.0
          %418 = vst.msk [vmem:[#allocation3 + $0x178] sm:$0xff] %vm306, 0.0
          %419 = vst.msk [vmem:[#allocation3 + $0x180] sm:$0xff] %vm306, 0.0
          %420 = vst.msk [vmem:[#allocation3 + $0x188] sm:$0xff] %vm306, 0.0
          %421 = vst.msk [vmem:[#allocation3 + $0x190] sm:$0xff] %vm306, 0.0
          %422 = vst.msk [vmem:[#allocation3 + $0x198] sm:$0xff] %vm306, 0.0
          %423 = vst.msk [vmem:[#allocation3 + $0x1a0] sm:$0xff] %vm306, 0.0
          %424 = vst.msk [vmem:[#allocation3 + $0x1a8] sm:$0xff] %vm306, 0.0
          %425 = vst.msk [vmem:[#allocation3 + $0x1b0] sm:$0xff] %vm306, 0.0
          %426 = vst.msk [vmem:[#allocation3 + $0x1b8] sm:$0xff] %vm306, 0.0
          %427 = vst.msk [vmem:[#allocation3 + $0x1c0] sm:$0xff] %vm306, 0.0
          %428 = vst.msk [vmem:[#allocation3 + $0x1c8] sm:$0xff] %vm306, 0.0
          %429 = vst.msk [vmem:[#allocation3 + $0x1d0] sm:$0xff] %vm306, 0.0
          %430 = vst.msk [vmem:[#allocation3 + $0x1d8] sm:$0xff] %vm306, 0.0
          %431 = vst.msk [vmem:[#allocation3 + $0x1e0] sm:$0xff] %vm306, 0.0
          %432 = vst.msk [vmem:[#allocation3 + $0x1e8] sm:$0xff] %vm306, 0.0
          %433 = vst.msk [vmem:[#allocation3 + $0x1f0] sm:$0xff] %vm306, 0.0
          %434 = vst.msk [vmem:[#allocation3 + $0x1f8] sm:$0xff] %vm306, 0.0
          %vm435 = vcmask 31744
          %436 = vst.msk [vmem:[#allocation4] sm:$0xff] %vm435, 0.0
          %437 = vst.msk [vmem:[#allocation4 + $0x8] sm:$0xff] %vm435, 0.0
          %438 = vst.msk [vmem:[#allocation4 + $0x10] sm:$0xff] %vm435, 0.0
          %439 = vst.msk [vmem:[#allocation4 + $0x18] sm:$0xff] %vm435, 0.0
          %440 = vst.msk [vmem:[#allocation4 + $0x20] sm:$0xff] %vm435, 0.0
          %441 = vst.msk [vmem:[#allocation4 + $0x28] sm:$0xff] %vm435, 0.0
          %442 = vst.msk [vmem:[#allocation4 + $0x30] sm:$0xff] %vm435, 0.0
          %443 = vst.msk [vmem:[#allocation4 + $0x38] sm:$0xff] %vm435, 0.0
          %444 = vst.msk [vmem:[#allocation4 + $0x40] sm:$0xff] %vm435, 0.0
          %445 = vst.msk [vmem:[#allocation4 + $0x48] sm:$0xff] %vm435, 0.0
          %446 = vst.msk [vmem:[#allocation4 + $0x50] sm:$0xff] %vm435, 0.0
          %447 = vst.msk [vmem:[#allocation4 + $0x58] sm:$0xff] %vm435, 0.0
          %448 = vst.msk [vmem:[#allocation4 + $0x60] sm:$0xff] %vm435, 0.0
          %449 = vst.msk [vmem:[#allocation4 + $0x68] sm:$0xff] %vm435, 0.0
          %450 = vst.msk [vmem:[#allocation4 + $0x70] sm:$0xff] %vm435, 0.0
          %451 = vst.msk [vmem:[#allocation4 + $0x78] sm:$0xff] %vm435, 0.0
          %452 = vst.msk [vmem:[#allocation4 + $0x80] sm:$0xff] %vm435, 0.0
          %453 = vst.msk [vmem:[#allocation4 + $0x88] sm:$0xff] %vm435, 0.0
          %454 = vst.msk [vmem:[#allocation4 + $0x90] sm:$0xff] %vm435, 0.0
          %455 = vst.msk [vmem:[#allocation4 + $0x98] sm:$0xff] %vm435, 0.0
          %456 = vst.msk [vmem:[#allocation4 + $0xa0] sm:$0xff] %vm435, 0.0
          %457 = vst.msk [vmem:[#allocation4 + $0xa8] sm:$0xff] %vm435, 0.0
          %458 = vst.msk [vmem:[#allocation4 + $0xb0] sm:$0xff] %vm435, 0.0
          %459 = vst.msk [vmem:[#allocation4 + $0xb8] sm:$0xff] %vm435, 0.0
          %460 = vst.msk [vmem:[#allocation4 + $0xc0] sm:$0xff] %vm435, 0.0
          %461 = vst.msk [vmem:[#allocation4 + $0xc8] sm:$0xff] %vm435, 0.0
          %462 = vst.msk [vmem:[#allocation4 + $0xd0] sm:$0xff] %vm435, 0.0
          %463 = vst.msk [vmem:[#allocation4 + $0xd8] sm:$0xff] %vm435, 0.0
          %464 = vst.msk [vmem:[#allocation4 + $0xe0] sm:$0xff] %vm435, 0.0
          %465 = vst.msk [vmem:[#allocation4 + $0xe8] sm:$0xff] %vm435, 0.0
          %466 = vst.msk [vmem:[#allocation4 + $0xf0] sm:$0xff] %vm435, 0.0
          %467 = vst.msk [vmem:[#allocation4 + $0xf8] sm:$0xff] %vm435, 0.0
          %468 = vst.msk [vmem:[#allocation4 + $0x100] sm:$0xff] %vm435, 0.0
          %469 = vst.msk [vmem:[#allocation4 + $0x108] sm:$0xff] %vm435, 0.0
          %470 = vst.msk [vmem:[#allocation4 + $0x110] sm:$0xff] %vm435, 0.0
          %471 = vst.msk [vmem:[#allocation4 + $0x118] sm:$0xff] %vm435, 0.0
          %472 = vst.msk [vmem:[#allocation4 + $0x120] sm:$0xff] %vm435, 0.0
          %473 = vst.msk [vmem:[#allocation4 + $0x128] sm:$0xff] %vm435, 0.0
          %474 = vst.msk [vmem:[#allocation4 + $0x130] sm:$0xff] %vm435, 0.0
          %475 = vst.msk [vmem:[#allocation4 + $0x138] sm:$0xff] %vm435, 0.0
          %476 = vst.msk [vmem:[#allocation4 + $0x140] sm:$0xff] %vm435, 0.0
          %477 = vst.msk [vmem:[#allocation4 + $0x148] sm:$0xff] %vm435, 0.0
          %478 = vst.msk [vmem:[#allocation4 + $0x150] sm:$0xff] %vm435, 0.0
          %479 = vst.msk [vmem:[#allocation4 + $0x158] sm:$0xff] %vm435, 0.0
          %480 = vst.msk [vmem:[#allocation4 + $0x160] sm:$0xff] %vm435, 0.0
          %481 = vst.msk [vmem:[#allocation4 + $0x168] sm:$0xff] %vm435, 0.0
          %482 = vst.msk [vmem:[#allocation4 + $0x170] sm:$0xff] %vm435, 0.0
          %483 = vst.msk [vmem:[#allocation4 + $0x178] sm:$0xff] %vm435, 0.0
          %484 = vst.msk [vmem:[#allocation4 + $0x180] sm:$0xff] %vm435, 0.0
          %485 = vst.msk [vmem:[#allocation4 + $0x188] sm:$0xff] %vm435, 0.0
          %486 = vst.msk [vmem:[#allocation4 + $0x190] sm:$0xff] %vm435, 0.0
          %487 = vst.msk [vmem:[#allocation4 + $0x198] sm:$0xff] %vm435, 0.0
          %488 = vst.msk [vmem:[#allocation4 + $0x1a0] sm:$0xff] %vm435, 0.0
          %489 = vst.msk [vmem:[#allocation4 + $0x1a8] sm:$0xff] %vm435, 0.0
          %490 = vst.msk [vmem:[#allocation4 + $0x1b0] sm:$0xff] %vm435, 0.0
          %491 = vst.msk [vmem:[#allocation4 + $0x1b8] sm:$0xff] %vm435, 0.0
          %492 = vst.msk [vmem:[#allocation4 + $0x1c0] sm:$0xff] %vm435, 0.0
          %493 = vst.msk [vmem:[#allocation4 + $0x1c8] sm:$0xff] %vm435, 0.0
          %494 = vst.msk [vmem:[#allocation4 + $0x1d0] sm:$0xff] %vm435, 0.0
          %495 = vst.msk [vmem:[#allocation4 + $0x1d8] sm:$0xff] %vm435, 0.0
          %496 = vst.msk [vmem:[#allocation4 + $0x1e0] sm:$0xff] %vm435, 0.0
          %497 = vst.msk [vmem:[#allocation4 + $0x1e8] sm:$0xff] %vm435, 0.0
          %498 = vst.msk [vmem:[#allocation4 + $0x1f0] sm:$0xff] %vm435, 0.0
          %499 = vst.msk [vmem:[#allocation4 + $0x1f8] sm:$0xff] %vm435, 0.0
        $region48: #{tpu_custom_call.1} parent=31 // pred_fallthru
          _
        %v500 = vld [vmem:[%s248] sm:$0xf]
        %v501 = vld [vmem:[%s248 + $0x4] sm:$0xf]
        %v502 = vld [vmem:[%s248 + $0x8] sm:$0xf]
        %v503 = vld [vmem:[%s248 + $0xc] sm:$0xf]
        %v504 = vmul.f32 %v500, 0.5
        %v505 = vmul.f32 %v501, 0.5
        %v506 = vmul.f32 %v502, 0.5
        %v507 = vmul.f32 %v503, 0.5
        %v508 = vld [vmem:[%s258] sm:$0xf]
        %v509 = vld [vmem:[%s258 + $0x4] sm:$0xf]
        %v510 = vld [vmem:[%s258 + $0x8] sm:$0xf]
        %v511 = vld [vmem:[%s258 + $0xc] sm:$0xf]
        %v512 = vld [vmem:[%s268] sm:$0xf]
        %v513 = vld [vmem:[%s268 + $0x4] sm:$0xf]
        %v514 = vld [vmem:[%s268 + $0x8] sm:$0xf]
        %v515 = vld [vmem:[%s268 + $0xc] sm:$0xf]
        %516 = vxpose.xlu0.b32.start [1/16] %v504, 128
        %517 = vxpose.xlu0.b32.cont [2/16] 0.0, 128
        %518 = vxpose.xlu0.b32.cont [3/16] 0.0, 128
        %519 = vxpose.xlu0.b32.cont [4/16] 0.0, 128
        %520 = vxpose.xlu0.b32.cont [5/16] 0.0, 128
        %521 = vxpose.xlu0.b32.cont [6/16] 0.0, 128
        %522 = vxpose.xlu0.b32.cont [7/16] 0.0, 128
        %523 = vxpose.xlu0.b32.cont [8/16] 0.0, 128
        %524 = vxpose.xlu0.b32.cont [9/16] 0.0, 128
        %525 = vxpose.xlu0.b32.cont [10/16] 0.0, 128
        %526 = vxpose.xlu0.b32.cont [11/16] 0.0, 128
        %527 = vxpose.xlu0.b32.cont [12/16] 0.0, 128
        %528 = vxpose.xlu0.b32.cont [13/16] 0.0, 128
        %529 = vxpose.xlu0.b32.cont [14/16] 0.0, 128
        %530 = vxpose.xlu0.b32.cont [15/16] 0.0, 128
        %531 = vxpose.xlu0.b32.end [16/16] 0.0, 128
        %v532 = vpop.trf.xlu0
        %v533 = vpop.trf.xlu0
        %v534 = vpop.trf.xlu0
        %v535 = vpop.trf.xlu0
        %v536 = vpop.trf.xlu0
        %v537 = vpop.trf.xlu0
        %v538 = vpop.trf.xlu0
        %v539 = vpop.trf.xlu0
        %v540 = vpop.trf.xlu0
        %v541 = vpop.trf.xlu0
        %v542 = vpop.trf.xlu0
        %v543 = vpop.trf.xlu0
        %v544 = vpop.trf.xlu0
        %v545 = vpop.trf.xlu0
        %v546 = vpop.trf.xlu0
        %v547 = vpop.trf.xlu0
        %vm548 = vcmask 31744
        %v550 = vsel %vm548, %v532, 0
        %v553 = vsel %vm548, %v533, 0
        %v556 = vsel %vm548, %v534, 0
        %v559 = vsel %vm548, %v535, 0
        %v562 = vsel %vm548, %v536, 0
        %v565 = vsel %vm548, %v537, 0
        %v568 = vsel %vm548, %v538, 0
        %v571 = vsel %vm548, %v539, 0
        %v574 = vsel %vm548, %v540, 0
        %v577 = vsel %vm548, %v541, 0
        %v580 = vsel %vm548, %v542, 0
        %v583 = vsel %vm548, %v543, 0
        %v586 = vsel %vm548, %v544, 0
        %v589 = vsel %vm548, %v545, 0
        %v592 = vsel %vm548, %v546, 0
        %v595 = vsel %vm548, %v547, 0
        %vm597 = vcmask 1043456
        %v599 = vsel %vm597, %v508, 0
        %601 = vmatpush.msra.mxu0 0.0
        %602 = vmatpush.msra.mxu0 0.0
        %603 = vmatpush.msra.mxu0 0.0
        %604 = vmatpush.msra.mxu0 0.0
        %605 = vmatpush.msra.mxu0 0.0
        %606 = vmatpush.msra.mxu0 0.0
        %607 = vmatpush.msra.mxu0 0.0
        %608 = vmatpush.msra.mxu0 0.0
        %609 = vmatpush.msra.mxu0 0.0
        %610 = vmatpush.msra.mxu0 0.0
        %611 = vmatpush.msra.mxu0 0.0
        %612 = vmatpush.msra.mxu0 0.0
        %613 = vmatpush.msra.mxu0 0.0
        %614 = vmatpush.msra.mxu0 0.0
        %615 = vmatpush.msra.mxu0 0.0
        %616 = vmatpush.msra.mxu0 %v599
        %617 = vmatmul.f32.gmra.mxu0 %v550
        %v618 = vpop.f32.mrf.mxu0
        %v619 = vadd.f32 0.0, %v618
        %620 = vmatmul.f32.gmra.mxu0 %v553
        %v621 = vpop.f32.mrf.mxu0
        %v622 = vadd.f32 0.0, %v621
        %623 = vmatmul.f32.gmra.mxu0 %v556
        %v624 = vpop.f32.mrf.mxu0
        %v625 = vadd.f32 0.0, %v624
        %626 = vmatmul.f32.gmra.mxu0 %v559
        %v627 = vpop.f32.mrf.mxu0
        %v628 = vadd.f32 0.0, %v627
        %629 = vmatmul.f32.gmra.mxu0 %v562
        %v630 = vpop.f32.mrf.mxu0
        %v631 = vadd.f32 0.0, %v630
        %632 = vmatmul.f32.gmra.mxu0 %v565
        %v633 = vpop.f32.mrf.mxu0
        %v634 = vadd.f32 0.0, %v633
        %635 = vmatmul.f32.gmra.mxu0 %v568
        %v636 = vpop.f32.mrf.mxu0
        %v637 = vadd.f32 0.0, %v636
        %638 = vmatmul.f32.gmra.mxu0 %v571
        %v639 = vpop.f32.mrf.mxu0
        %v640 = vadd.f32 0.0, %v639
        %641 = vmatmul.f32.gmra.mxu0 %v574
        %v642 = vpop.f32.mrf.mxu0
        %v643 = vadd.f32 0.0, %v642
        %644 = vmatmul.f32.gmra.mxu0 %v577
        %v645 = vpop.f32.mrf.mxu0
        %v646 = vadd.f32 0.0, %v645
        %647 = vmatmul.f32.gmra.mxu0 %v580
        %v648 = vpop.f32.mrf.mxu0
        %v649 = vadd.f32 0.0, %v648
        %650 = vmatmul.f32.gmra.mxu0 %v583
        %v651 = vpop.f32.mrf.mxu0
        %v652 = vadd.f32 0.0, %v651
        %653 = vmatmul.f32.gmra.mxu0 %v586
        %v654 = vpop.f32.mrf.mxu0
        %v655 = vadd.f32 0.0, %v654
        %656 = vmatmul.f32.gmra.mxu0 %v589
        %v657 = vpop.f32.mrf.mxu0
        %v658 = vadd.f32 0.0, %v657
        %659 = vmatmul.f32.gmra.mxu0 %v592
        %v660 = vpop.f32.mrf.mxu0
        %v661 = vadd.f32 0.0, %v660
        %662 = vmatmul.f32.gmra.mxu0 %v595
        %v663 = vpop.f32.mrf.mxu0
        %v664 = vadd.f32 0.0, %v663
        %665 = vdwg.mxu0
        %666 = vxpose.xlu0.b32.start [1/16] %v505, 128
        %667 = vxpose.xlu0.b32.cont [2/16] 0.0, 128
        %668 = vxpose.xlu0.b32.cont [3/16] 0.0, 128
        %669 = vxpose.xlu0.b32.cont [4/16] 0.0, 128
        %670 = vxpose.xlu0.b32.cont [5/16] 0.0, 128
        %671 = vxpose.xlu0.b32.cont [6/16] 0.0, 128
        %672 = vxpose.xlu0.b32.cont [7/16] 0.0, 128
        %673 = vxpose.xlu0.b32.cont [8/16] 0.0, 128
        %674 = vxpose.xlu0.b32.cont [9/16] 0.0, 128
        %675 = vxpose.xlu0.b32.cont [10/16] 0.0, 128
        %676 = vxpose.xlu0.b32.cont [11/16] 0.0, 128
        %677 = vxpose.xlu0.b32.cont [12/16] 0.0, 128
        %678 = vxpose.xlu0.b32.cont [13/16] 0.0, 128
        %679 = vxpose.xlu0.b32.cont [14/16] 0.0, 128
        %680 = vxpose.xlu0.b32.cont [15/16] 0.0, 128
        %681 = vxpose.xlu0.b32.end [16/16] 0.0, 128
        %v682 = vpop.trf.xlu0
        %v683 = vpop.trf.xlu0
        %v684 = vpop.trf.xlu0
        %v685 = vpop.trf.xlu0
        %v686 = vpop.trf.xlu0
        %v687 = vpop.trf.xlu0
        %v688 = vpop.trf.xlu0
        %v689 = vpop.trf.xlu0
        %v690 = vpop.trf.xlu0
        %v691 = vpop.trf.xlu0
        %v692 = vpop.trf.xlu0
        %v693 = vpop.trf.xlu0
        %v694 = vpop.trf.xlu0
        %v695 = vpop.trf.xlu0
        %v696 = vpop.trf.xlu0
        %v697 = vpop.trf.xlu0
        %v699 = vsel %vm548, %v682, 0
        %v702 = vsel %vm548, %v683, 0
        %v705 = vsel %vm548, %v684, 0
        %v708 = vsel %vm548, %v685, 0
        %v711 = vsel %vm548, %v686, 0
        %v714 = vsel %vm548, %v687, 0
        %v717 = vsel %vm548, %v688, 0
        %v720 = vsel %vm548, %v689, 0
        %v723 = vsel %vm548, %v690, 0
        %v726 = vsel %vm548, %v691, 0
        %v729 = vsel %vm548, %v692, 0
        %v732 = vsel %vm548, %v693, 0
        %v735 = vsel %vm548, %v694, 0
        %v738 = vsel %vm548, %v695, 0
        %v741 = vsel %vm548, %v696, 0
        %v744 = vsel %vm548, %v697, 0
        %v747 = vsel %vm597, %v509, 0
        %749 = vmatpush.msra.mxu0 0.0
        %750 = vmatpush.msra.mxu0 0.0
        %751 = vmatpush.msra.mxu0 0.0
        %752 = vmatpush.msra.mxu0 0.0
        %753 = vmatpush.msra.mxu0 0.0
        %754 = vmatpush.msra.mxu0 0.0
        %755 = vmatpush.msra.mxu0 0.0
        %756 = vmatpush.msra.mxu0 0.0
        %757 = vmatpush.msra.mxu0 0.0
        %758 = vmatpush.msra.mxu0 0.0
        %759 = vmatpush.msra.mxu0 0.0
        %760 = vmatpush.msra.mxu0 0.0
        %761 = vmatpush.msra.mxu0 0.0
        %762 = vmatpush.msra.mxu0 0.0
        %763 = vmatpush.msra.mxu0 0.0
        %764 = vmatpush.msra.mxu0 %v747
        %765 = vmatmul.f32.gmra.mxu0 %v699
        %v766 = vpop.f32.mrf.mxu0
        %v767 = vadd.f32 0.0, %v766
        %768 = vmatmul.f32.gmra.mxu0 %v702
        %v769 = vpop.f32.mrf.mxu0
        %v770 = vadd.f32 0.0, %v769
        %771 = vmatmul.f32.gmra.mxu0 %v705
        %v772 = vpop.f32.mrf.mxu0
        %v773 = vadd.f32 0.0, %v772
        %774 = vmatmul.f32.gmra.mxu0 %v708
        %v775 = vpop.f32.mrf.mxu0
        %v776 = vadd.f32 0.0, %v775
        %777 = vmatmul.f32.gmra.mxu0 %v711
        %v778 = vpop.f32.mrf.mxu0
        %v779 = vadd.f32 0.0, %v778
        %780 = vmatmul.f32.gmra.mxu0 %v714
        %v781 = vpop.f32.mrf.mxu0
        %v782 = vadd.f32 0.0, %v781
        %783 = vmatmul.f32.gmra.mxu0 %v717
        %v784 = vpop.f32.mrf.mxu0
        %v785 = vadd.f32 0.0, %v784
        %786 = vmatmul.f32.gmra.mxu0 %v720
        %v787 = vpop.f32.mrf.mxu0
        %v788 = vadd.f32 0.0, %v787
        %789 = vmatmul.f32.gmra.mxu0 %v723
        %v790 = vpop.f32.mrf.mxu0
        %v791 = vadd.f32 0.0, %v790
        %792 = vmatmul.f32.gmra.mxu0 %v726
        %v793 = vpop.f32.mrf.mxu0
        %v794 = vadd.f32 0.0, %v793
        %795 = vmatmul.f32.gmra.mxu0 %v729
        %v796 = vpop.f32.mrf.mxu0
        %v797 = vadd.f32 0.0, %v796
        %798 = vmatmul.f32.gmra.mxu0 %v732
        %v799 = vpop.f32.mrf.mxu0
        %v800 = vadd.f32 0.0, %v799
        %801 = vmatmul.f32.gmra.mxu0 %v735
        %v802 = vpop.f32.mrf.mxu0
        %v803 = vadd.f32 0.0, %v802
        %804 = vmatmul.f32.gmra.mxu0 %v738
        %v805 = vpop.f32.mrf.mxu0
        %v806 = vadd.f32 0.0, %v805
        %807 = vmatmul.f32.gmra.mxu0 %v741
        %v808 = vpop.f32.mrf.mxu0
        %v809 = vadd.f32 0.0, %v808
        %810 = vmatmul.f32.gmra.mxu0 %v744
        %v811 = vpop.f32.mrf.mxu0
        %v812 = vadd.f32 0.0, %v811
        %813 = vdwg.mxu0
        %814 = vxpose.xlu0.b32.start [1/16] %v506, 128
        %815 = vxpose.xlu0.b32.cont [2/16] 0.0, 128
        %816 = vxpose.xlu0.b32.cont [3/16] 0.0, 128
        %817 = vxpose.xlu0.b32.cont [4/16] 0.0, 128
        %818 = vxpose.xlu0.b32.cont [5/16] 0.0, 128
        %819 = vxpose.xlu0.b32.cont [6/16] 0.0, 128
        %820 = vxpose.xlu0.b32.cont [7/16] 0.0, 128
        %821 = vxpose.xlu0.b32.cont [8/16] 0.0, 128
        %822 = vxpose.xlu0.b32.cont [9/16] 0.0, 128
        %823 = vxpose.xlu0.b32.cont [10/16] 0.0, 128
        %824 = vxpose.xlu0.b32.cont [11/16] 0.0, 128
        %825 = vxpose.xlu0.b32.cont [12/16] 0.0, 128
        %826 = vxpose.xlu0.b32.cont [13/16] 0.0, 128
        %827 = vxpose.xlu0.b32.cont [14/16] 0.0, 128
        %828 = vxpose.xlu0.b32.cont [15/16] 0.0, 128
        %829 = vxpose.xlu0.b32.end [16/16] 0.0, 128
        %v830 = vpop.trf.xlu0
        %v831 = vpop.trf.xlu0
        %v832 = vpop.trf.xlu0
        %v833 = vpop.trf.xlu0
        %v834 = vpop.trf.xlu0
        %v835 = vpop.trf.xlu0
        %v836 = vpop.trf.xlu0
        %v837 = vpop.trf.xlu0
        %v838 = vpop.trf.xlu0
        %v839 = vpop.trf.xlu0
        %v840 = vpop.trf.xlu0
        %v841 = vpop.trf.xlu0
        %v842 = vpop.trf.xlu0
        %v843 = vpop.trf.xlu0
        %v844 = vpop.trf.xlu0
        %v845 = vpop.trf.xlu0
        %v847 = vsel %vm548, %v830, 0
        %v850 = vsel %vm548, %v831, 0
        %v853 = vsel %vm548, %v832, 0
        %v856 = vsel %vm548, %v833, 0
        %v859 = vsel %vm548, %v834, 0
        %v862 = vsel %vm548, %v835, 0
        %v865 = vsel %vm548, %v836, 0
        %v868 = vsel %vm548, %v837, 0
        %v871 = vsel %vm548, %v838, 0
        %v874 = vsel %vm548, %v839, 0
        %v877 = vsel %vm548, %v840, 0
        %v880 = vsel %vm548, %v841, 0
        %v883 = vsel %vm548, %v842, 0
        %v886 = vsel %vm548, %v843, 0
        %v889 = vsel %vm548, %v844, 0
        %v892 = vsel %vm548, %v845, 0
        %v895 = vsel %vm597, %v510, 0
        %897 = vmatpush.msra.mxu0 0.0
        %898 = vmatpush.msra.mxu0 0.0
        %899 = vmatpush.msra.mxu0 0.0
        %900 = vmatpush.msra.mxu0 0.0
        %901 = vmatpush.msra.mxu0 0.0
        %902 = vmatpush.msra.mxu0 0.0
        %903 = vmatpush.msra.mxu0 0.0
        %904 = vmatpush.msra.mxu0 0.0
        %905 = vmatpush.msra.mxu0 0.0
        %906 = vmatpush.msra.mxu0 0.0
        %907 = vmatpush.msra.mxu0 0.0
        %908 = vmatpush.msra.mxu0 0.0
        %909 = vmatpush.msra.mxu0 0.0
        %910 = vmatpush.msra.mxu0 0.0
        %911 = vmatpush.msra.mxu0 0.0
        %912 = vmatpush.msra.mxu0 %v895
        %913 = vmatmul.f32.gmra.mxu0 %v847
        %v914 = vpop.f32.mrf.mxu0
        %v915 = vadd.f32 0.0, %v914
        %916 = vmatmul.f32.gmra.mxu0 %v850
        %v917 = vpop.f32.mrf.mxu0
        %v918 = vadd.f32 0.0, %v917
        %919 = vmatmul.f32.gmra.mxu0 %v853
        %v920 = vpop.f32.mrf.mxu0
        %v921 = vadd.f32 0.0, %v920
        %922 = vmatmul.f32.gmra.mxu0 %v856
        %v923 = vpop.f32.mrf.mxu0
        %v924 = vadd.f32 0.0, %v923
        %925 = vmatmul.f32.gmra.mxu0 %v859
        %v926 = vpop.f32.mrf.mxu0
        %v927 = vadd.f32 0.0, %v926
        %928 = vmatmul.f32.gmra.mxu0 %v862
        %v929 = vpop.f32.mrf.mxu0
        %v930 = vadd.f32 0.0, %v929
        %931 = vmatmul.f32.gmra.mxu0 %v865
        %v932 = vpop.f32.mrf.mxu0
        %v933 = vadd.f32 0.0, %v932
        %934 = vmatmul.f32.gmra.mxu0 %v868
        %v935 = vpop.f32.mrf.mxu0
        %v936 = vadd.f32 0.0, %v935
        %937 = vmatmul.f32.gmra.mxu0 %v871
        %v938 = vpop.f32.mrf.mxu0
        %v939 = vadd.f32 0.0, %v938
        %940 = vmatmul.f32.gmra.mxu0 %v874
        %v941 = vpop.f32.mrf.mxu0
        %v942 = vadd.f32 0.0, %v941
        %943 = vmatmul.f32.gmra.mxu0 %v877
        %v944 = vpop.f32.mrf.mxu0
        %v945 = vadd.f32 0.0, %v944
        %946 = vmatmul.f32.gmra.mxu0 %v880
        %v947 = vpop.f32.mrf.mxu0
        %v948 = vadd.f32 0.0, %v947
        %949 = vmatmul.f32.gmra.mxu0 %v883
        %v950 = vpop.f32.mrf.mxu0
        %v951 = vadd.f32 0.0, %v950
        %952 = vmatmul.f32.gmra.mxu0 %v886
        %v953 = vpop.f32.mrf.mxu0
        %v954 = vadd.f32 0.0, %v953
        %955 = vmatmul.f32.gmra.mxu0 %v889
        %v956 = vpop.f32.mrf.mxu0
        %v957 = vadd.f32 0.0, %v956
        %958 = vmatmul.f32.gmra.mxu0 %v892
        %v959 = vpop.f32.mrf.mxu0
        %v960 = vadd.f32 0.0, %v959
        %961 = vdwg.mxu0
        %962 = vxpose.xlu0.b32.start [1/16] %v507, 128
        %963 = vxpose.xlu0.b32.cont [2/16] 0.0, 128
        %964 = vxpose.xlu0.b32.cont [3/16] 0.0, 128
        %965 = vxpose.xlu0.b32.cont [4/16] 0.0, 128
        %966 = vxpose.xlu0.b32.cont [5/16] 0.0, 128
        %967 = vxpose.xlu0.b32.cont [6/16] 0.0, 128
        %968 = vxpose.xlu0.b32.cont [7/16] 0.0, 128
        %969 = vxpose.xlu0.b32.cont [8/16] 0.0, 128
        %970 = vxpose.xlu0.b32.cont [9/16] 0.0, 128
        %971 = vxpose.xlu0.b32.cont [10/16] 0.0, 128
        %972 = vxpose.xlu0.b32.cont [11/16] 0.0, 128
        %973 = vxpose.xlu0.b32.cont [12/16] 0.0, 128
        %974 = vxpose.xlu0.b32.cont [13/16] 0.0, 128
        %975 = vxpose.xlu0.b32.cont [14/16] 0.0, 128
        %976 = vxpose.xlu0.b32.cont [15/16] 0.0, 128
        %977 = vxpose.xlu0.b32.end [16/16] 0.0, 128
        %v978 = vpop.trf.xlu0
        %v979 = vpop.trf.xlu0
        %v980 = vpop.trf.xlu0
        %v981 = vpop.trf.xlu0
        %v982 = vpop.trf.xlu0
        %v983 = vpop.trf.xlu0
        %v984 = vpop.trf.xlu0
        %v985 = vpop.trf.xlu0
        %v986 = vpop.trf.xlu0
        %v987 = vpop.trf.xlu0
        %v988 = vpop.trf.xlu0
        %v989 = vpop.trf.xlu0
        %v990 = vpop.trf.xlu0
        %v991 = vpop.trf.xlu0
        %v992 = vpop.trf.xlu0
        %v993 = vpop.trf.xlu0
        %v995 = vsel %vm548, %v978, 0
        %v998 = vsel %vm548, %v979, 0
        %v1001 = vsel %vm548, %v980, 0
        %v1004 = vsel %vm548, %v981, 0
        %v1007 = vsel %vm548, %v982, 0
        %v1010 = vsel %vm548, %v983, 0
        %v1013 = vsel %vm548, %v984, 0
        %v1016 = vsel %vm548, %v985, 0
        %v1019 = vsel %vm548, %v986, 0
        %v1022 = vsel %vm548, %v987, 0
        %v1025 = vsel %vm548, %v988, 0
        %v1028 = vsel %vm548, %v989, 0
        %v1031 = vsel %vm548, %v990, 0
        %v1034 = vsel %vm548, %v991, 0
        %v1037 = vsel %vm548, %v992, 0
        %v1040 = vsel %vm548, %v993, 0
        %v1043 = vsel %vm597, %v511, 0
        %1045 = vmatpush.msra.mxu0 0.0
        %1046 = vmatpush.msra.mxu0 0.0
        %1047 = vmatpush.msra.mxu0 0.0
        %1048 = vmatpush.msra.mxu0 0.0
        %1049 = vmatpush.msra.mxu0 0.0
        %1050 = vmatpush.msra.mxu0 0.0
        %1051 = vmatpush.msra.mxu0 0.0
        %1052 = vmatpush.msra.mxu0 0.0
        %1053 = vmatpush.msra.mxu0 0.0
        %1054 = vmatpush.msra.mxu0 0.0
        %1055 = vmatpush.msra.mxu0 0.0
        %1056 = vmatpush.msra.mxu0 0.0
        %1057 = vmatpush.msra.mxu0 0.0
        %1058 = vmatpush.msra.mxu0 0.0
        %1059 = vmatpush.msra.mxu0 0.0
        %1060 = vmatpush.msra.mxu0 %v1043
        %1061 = vmatmul.f32.gmra.mxu0 %v995
        %v1062 = vpop.f32.mrf.mxu0
        %v1063 = vadd.f32 0.0, %v1062
        %1064 = vmatmul.f32.gmra.mxu0 %v998
        %v1065 = vpop.f32.mrf.mxu0
        %v1066 = vadd.f32 0.0, %v1065
        %1067 = vmatmul.f32.gmra.mxu0 %v1001
        %v1068 = vpop.f32.mrf.mxu0
        %v1069 = vadd.f32 0.0, %v1068
        %1070 = vmatmul.f32.gmra.mxu0 %v1004
        %v1071 = vpop.f32.mrf.mxu0
        %v1072 = vadd.f32 0.0, %v1071
        %1073 = vmatmul.f32.gmra.mxu0 %v1007
        %v1074 = vpop.f32.mrf.mxu0
        %v1075 = vadd.f32 0.0, %v1074
        %1076 = vmatmul.f32.gmra.mxu0 %v1010
        %v1077 = vpop.f32.mrf.mxu0
        %v1078 = vadd.f32 0.0, %v1077
        %1079 = vmatmul.f32.gmra.mxu0 %v1013
        %v1080 = vpop.f32.mrf.mxu0
        %v1081 = vadd.f32 0.0, %v1080
        %1082 = vmatmul.f32.gmra.mxu0 %v1016
        %v1083 = vpop.f32.mrf.mxu0
        %v1084 = vadd.f32 0.0, %v1083
        %1085 = vmatmul.f32.gmra.mxu0 %v1019
        %v1086 = vpop.f32.mrf.mxu0
        %v1087 = vadd.f32 0.0, %v1086
        %1088 = vmatmul.f32.gmra.mxu0 %v1022
        %v1089 = vpop.f32.mrf.mxu0
        %v1090 = vadd.f32 0.0, %v1089
        %1091 = vmatmul.f32.gmra.mxu0 %v1025
        %v1092 = vpop.f32.mrf.mxu0
        %v1093 = vadd.f32 0.0, %v1092
        %1094 = vmatmul.f32.gmra.mxu0 %v1028
        %v1095 = vpop.f32.mrf.mxu0
        %v1096 = vadd.f32 0.0, %v1095
        %1097 = vmatmul.f32.gmra.mxu0 %v1031
        %v1098 = vpop.f32.mrf.mxu0
        %v1099 = vadd.f32 0.0, %v1098
        %1100 = vmatmul.f32.gmra.mxu0 %v1034
        %v1101 = vpop.f32.mrf.mxu0
        %v1102 = vadd.f32 0.0, %v1101
        %1103 = vmatmul.f32.gmra.mxu0 %v1037
        %v1104 = vpop.f32.mrf.mxu0
        %v1105 = vadd.f32 0.0, %v1104
        %1106 = vmatmul.f32.gmra.mxu0 %v1040
        %v1107 = vpop.f32.mrf.mxu0
        %v1108 = vadd.f32 0.0, %v1107
        %1109 = vdwg.mxu0
        %v1110 = vld [vmem:[#allocation2] sm:$0xff]
        %v1111 = vld [vmem:[#allocation2 + $0x8] sm:$0xff]
        %v1112 = vld [vmem:[#allocation2 + $0x10] sm:$0xff]
        %v1113 = vld [vmem:[#allocation2 + $0x18] sm:$0xff]
        %v1114 = vld [vmem:[#allocation2 + $0x20] sm:$0xff]
        %v1115 = vld [vmem:[#allocation2 + $0x28] sm:$0xff]
        %v1116 = vld [vmem:[#allocation2 + $0x30] sm:$0xff]
        %v1117 = vld [vmem:[#allocation2 + $0x38] sm:$0xff]
        %v1118 = vld [vmem:[#allocation2 + $0x40] sm:$0xff]
        %v1119 = vld [vmem:[#allocation2 + $0x48] sm:$0xff]
        %v1120 = vld [vmem:[#allocation2 + $0x50] sm:$0xff]
        %v1121 = vld [vmem:[#allocation2 + $0x58] sm:$0xff]
        %v1122 = vld [vmem:[#allocation2 + $0x60] sm:$0xff]
        %v1123 = vld [vmem:[#allocation2 + $0x68] sm:$0xff]
        %v1124 = vld [vmem:[#allocation2 + $0x70] sm:$0xff]
        %v1125 = vld [vmem:[#allocation2 + $0x78] sm:$0xff]
        %v1126 = vld [vmem:[#allocation2 + $0x80] sm:$0xff]
        %v1127 = vld [vmem:[#allocation2 + $0x88] sm:$0xff]
        %v1128 = vld [vmem:[#allocation2 + $0x90] sm:$0xff]
        %v1129 = vld [vmem:[#allocation2 + $0x98] sm:$0xff]
        %v1130 = vld [vmem:[#allocation2 + $0xa0] sm:$0xff]
        %v1131 = vld [vmem:[#allocation2 + $0xa8] sm:$0xff]
        %v1132 = vld [vmem:[#allocation2 + $0xb0] sm:$0xff]
        %v1133 = vld [vmem:[#allocation2 + $0xb8] sm:$0xff]
        %v1134 = vld [vmem:[#allocation2 + $0xc0] sm:$0xff]
        %v1135 = vld [vmem:[#allocation2 + $0xc8] sm:$0xff]
        %v1136 = vld [vmem:[#allocation2 + $0xd0] sm:$0xff]
        %v1137 = vld [vmem:[#allocation2 + $0xd8] sm:$0xff]
        %v1138 = vld [vmem:[#allocation2 + $0xe0] sm:$0xff]
        %v1139 = vld [vmem:[#allocation2 + $0xe8] sm:$0xff]
        %v1140 = vld [vmem:[#allocation2 + $0xf0] sm:$0xff]
        %v1141 = vld [vmem:[#allocation2 + $0xf8] sm:$0xff]
        %v1142 = vld [vmem:[#allocation2 + $0x100] sm:$0xff]
        %v1143 = vld [vmem:[#allocation2 + $0x108] sm:$0xff]
        %v1144 = vld [vmem:[#allocation2 + $0x110] sm:$0xff]
        %v1145 = vld [vmem:[#allocation2 + $0x118] sm:$0xff]
        %v1146 = vld [vmem:[#allocation2 + $0x120] sm:$0xff]
        %v1147 = vld [vmem:[#allocation2 + $0x128] sm:$0xff]
        %v1148 = vld [vmem:[#allocation2 + $0x130] sm:$0xff]
        %v1149 = vld [vmem:[#allocation2 + $0x138] sm:$0xff]
        %v1150 = vld [vmem:[#allocation2 + $0x140] sm:$0xff]
        %v1151 = vld [vmem:[#allocation2 + $0x148] sm:$0xff]
        %v1152 = vld [vmem:[#allocation2 + $0x150] sm:$0xff]
        %v1153 = vld [vmem:[#allocation2 + $0x158] sm:$0xff]
        %v1154 = vld [vmem:[#allocation2 + $0x160] sm:$0xff]
        %v1155 = vld [vmem:[#allocation2 + $0x168] sm:$0xff]
        %v1156 = vld [vmem:[#allocation2 + $0x170] sm:$0xff]
        %v1157 = vld [vmem:[#allocation2 + $0x178] sm:$0xff]
        %v1158 = vld [vmem:[#allocation2 + $0x180] sm:$0xff]
        %v1159 = vld [vmem:[#allocation2 + $0x188] sm:$0xff]
        %v1160 = vld [vmem:[#allocation2 + $0x190] sm:$0xff]
        %v1161 = vld [vmem:[#allocation2 + $0x198] sm:$0xff]
        %v1162 = vld [vmem:[#allocation2 + $0x1a0] sm:$0xff]
        %v1163 = vld [vmem:[#allocation2 + $0x1a8] sm:$0xff]
        %v1164 = vld [vmem:[#allocation2 + $0x1b0] sm:$0xff]
        %v1165 = vld [vmem:[#allocation2 + $0x1b8] sm:$0xff]
        %v1166 = vld [vmem:[#allocation2 + $0x1c0] sm:$0xff]
        %v1167 = vld [vmem:[#allocation2 + $0x1c8] sm:$0xff]
        %v1168 = vld [vmem:[#allocation2 + $0x1d0] sm:$0xff]
        %v1169 = vld [vmem:[#allocation2 + $0x1d8] sm:$0xff]
        %v1170 = vld [vmem:[#allocation2 + $0x1e0] sm:$0xff]
        %v1171 = vld [vmem:[#allocation2 + $0x1e8] sm:$0xff]
        %v1172 = vld [vmem:[#allocation2 + $0x1f0] sm:$0xff]
        %v1173 = vld [vmem:[#allocation2 + $0x1f8] sm:$0xff]
        %1174 = vmax.xlane.f32.xlu0 %v619
        %v1175 = vpop.xlane.xlu0 %1174
        %1176 = vmax.xlane.f32.xlu0 %v622
        %v1177 = vpop.xlane.xlu0 %1176
        %1178 = vmax.xlane.f32.xlu0 %v625
        %v1179 = vpop.xlane.xlu0 %1178
        %1180 = vmax.xlane.f32.xlu0 %v628
        %v1181 = vpop.xlane.xlu0 %1180
        %1182 = vmax.xlane.f32.xlu0 %v631
        %v1183 = vpop.xlane.xlu0 %1182
        %1184 = vmax.xlane.f32.xlu0 %v634
        %v1185 = vpop.xlane.xlu0 %1184
        %1186 = vmax.xlane.f32.xlu0 %v637
        %v1187 = vpop.xlane.xlu0 %1186
        %1188 = vmax.xlane.f32.xlu0 %v640
        %v1189 = vpop.xlane.xlu0 %1188
        %1190 = vmax.xlane.f32.xlu0 %v643
        %v1191 = vpop.xlane.xlu0 %1190
        %1192 = vmax.xlane.f32.xlu0 %v646
        %v1193 = vpop.xlane.xlu0 %1192
        %1194 = vmax.xlane.f32.xlu0 %v649
        %v1195 = vpop.xlane.xlu0 %1194
        %1196 = vmax.xlane.f32.xlu0 %v652
        %v1197 = vpop.xlane.xlu0 %1196
        %1198 = vmax.xlane.f32.xlu0 %v655
        %v1199 = vpop.xlane.xlu0 %1198
        %1200 = vmax.xlane.f32.xlu0 %v658
        %v1201 = vpop.xlane.xlu0 %1200
        %1202 = vmax.xlane.f32.xlu0 %v661
        %v1203 = vpop.xlane.xlu0 %1202
        %1204 = vmax.xlane.f32.xlu0 %v664
        %v1205 = vpop.xlane.xlu0 %1204
        %1206 = vmax.xlane.f32.xlu0 %v767
        %v1207 = vpop.xlane.xlu0 %1206
        %1208 = vmax.xlane.f32.xlu0 %v770
        %v1209 = vpop.xlane.xlu0 %1208
        %1210 = vmax.xlane.f32.xlu0 %v773
        %v1211 = vpop.xlane.xlu0 %1210
        %1212 = vmax.xlane.f32.xlu0 %v776
        %v1213 = vpop.xlane.xlu0 %1212
        %1214 = vmax.xlane.f32.xlu0 %v779
        %v1215 = vpop.xlane.xlu0 %1214
        %1216 = vmax.xlane.f32.xlu0 %v782
        %v1217 = vpop.xlane.xlu0 %1216
        %1218 = vmax.xlane.f32.xlu0 %v785
        %v1219 = vpop.xlane.xlu0 %1218
        %1220 = vmax.xlane.f32.xlu0 %v788
        %v1221 = vpop.xlane.xlu0 %1220
        %1222 = vmax.xlane.f32.xlu0 %v791
        %v1223 = vpop.xlane.xlu0 %1222
        %1224 = vmax.xlane.f32.xlu0 %v794
        %v1225 = vpop.xlane.xlu0 %1224
        %1226 = vmax.xlane.f32.xlu0 %v797
        %v1227 = vpop.xlane.xlu0 %1226
        %1228 = vmax.xlane.f32.xlu0 %v800
        %v1229 = vpop.xlane.xlu0 %1228
        %1230 = vmax.xlane.f32.xlu0 %v803
        %v1231 = vpop.xlane.xlu0 %1230
        %1232 = vmax.xlane.f32.xlu0 %v806
        %v1233 = vpop.xlane.xlu0 %1232
        %1234 = vmax.xlane.f32.xlu0 %v809
        %v1235 = vpop.xlane.xlu0 %1234
        %1236 = vmax.xlane.f32.xlu0 %v812
        %v1237 = vpop.xlane.xlu0 %1236
        %1238 = vmax.xlane.f32.xlu0 %v915
        %v1239 = vpop.xlane.xlu0 %1238
        %1240 = vmax.xlane.f32.xlu0 %v918
        %v1241 = vpop.xlane.xlu0 %1240
        %1242 = vmax.xlane.f32.xlu0 %v921
        %v1243 = vpop.xlane.xlu0 %1242
        %1244 = vmax.xlane.f32.xlu0 %v924
        %v1245 = vpop.xlane.xlu0 %1244
        %1246 = vmax.xlane.f32.xlu0 %v927
        %v1247 = vpop.xlane.xlu0 %1246
        %1248 = vmax.xlane.f32.xlu0 %v930
        %v1249 = vpop.xlane.xlu0 %1248
        %1250 = vmax.xlane.f32.xlu0 %v933
        %v1251 = vpop.xlane.xlu0 %1250
        %1252 = vmax.xlane.f32.xlu0 %v936
        %v1253 = vpop.xlane.xlu0 %1252
        %1254 = vmax.xlane.f32.xlu0 %v939
        %v1255 = vpop.xlane.xlu0 %1254
        %1256 = vmax.xlane.f32.xlu0 %v942
        %v1257 = vpop.xlane.xlu0 %1256
        %1258 = vmax.xlane.f32.xlu0 %v945
        %v1259 = vpop.xlane.xlu0 %1258
        %1260 = vmax.xlane.f32.xlu0 %v948
        %v1261 = vpop.xlane.xlu0 %1260
        %1262 = vmax.xlane.f32.xlu0 %v951
        %v1263 = vpop.xlane.xlu0 %1262
        %1264 = vmax.xlane.f32.xlu0 %v954
        %v1265 = vpop.xlane.xlu0 %1264
        %1266 = vmax.xlane.f32.xlu0 %v957
        %v1267 = vpop.xlane.xlu0 %1266
        %1268 = vmax.xlane.f32.xlu0 %v960
        %v1269 = vpop.xlane.xlu0 %1268
        %1270 = vmax.xlane.f32.xlu0 %v1063
        %v1271 = vpop.xlane.xlu0 %1270
        %1272 = vmax.xlane.f32.xlu0 %v1066
        %v1273 = vpop.xlane.xlu0 %1272
        %1274 = vmax.xlane.f32.xlu0 %v1069
        %v1275 = vpop.xlane.xlu0 %1274
        %1276 = vmax.xlane.f32.xlu0 %v1072
        %v1277 = vpop.xlane.xlu0 %1276
        %1278 = vmax.xlane.f32.xlu0 %v1075
        %v1279 = vpop.xlane.xlu0 %1278
        %1280 = vmax.xlane.f32.xlu0 %v1078
        %v1281 = vpop.xlane.xlu0 %1280
        %1282 = vmax.xlane.f32.xlu0 %v1081
        %v1283 = vpop.xlane.xlu0 %1282
        %1284 = vmax.xlane.f32.xlu0 %v1084
        %v1285 = vpop.xlane.xlu0 %1284
        %1286 = vmax.xlane.f32.xlu0 %v1087
        %v1287 = vpop.xlane.xlu0 %1286
        %1288 = vmax.xlane.f32.xlu0 %v1090
        %v1289 = vpop.xlane.xlu0 %1288
        %1290 = vmax.xlane.f32.xlu0 %v1093
        %v1291 = vpop.xlane.xlu0 %1290
        %1292 = vmax.xlane.f32.xlu0 %v1096
        %v1293 = vpop.xlane.xlu0 %1292
        %1294 = vmax.xlane.f32.xlu0 %v1099
        %v1295 = vpop.xlane.xlu0 %1294
        %1296 = vmax.xlane.f32.xlu0 %v1102
        %v1297 = vpop.xlane.xlu0 %1296
        %1298 = vmax.xlane.f32.xlu0 %v1105
        %v1299 = vpop.xlane.xlu0 %1298
        %1300 = vmax.xlane.f32.xlu0 %v1108
        %v1301 = vpop.xlane.xlu0 %1300
        %v1302 = vmax.f32 %v1110, %v1175
        %v1303 = vmax.f32 %v1111, %v1177
        %v1304 = vmax.f32 %v1112, %v1179
        %v1305 = vmax.f32 %v1113, %v1181
        %v1306 = vmax.f32 %v1114, %v1183
        %v1307 = vmax.f32 %v1115, %v1185
        %v1308 = vmax.f32 %v1116, %v1187
        %v1309 = vmax.f32 %v1117, %v1189
        %v1310 = vmax.f32 %v1118, %v1191
        %v1311 = vmax.f32 %v1119, %v1193
        %v1312 = vmax.f32 %v1120, %v1195
        %v1313 = vmax.f32 %v1121, %v1197
        %v1314 = vmax.f32 %v1122, %v1199
        %v1315 = vmax.f32 %v1123, %v1201
        %v1316 = vmax.f32 %v1124, %v1203
        %v1317 = vmax.f32 %v1125, %v1205
        %v1318 = vmax.f32 %v1126, %v1207
        %v1319 = vmax.f32 %v1127, %v1209
        %v1320 = vmax.f32 %v1128, %v1211
        %v1321 = vmax.f32 %v1129, %v1213
        %v1322 = vmax.f32 %v1130, %v1215
        %v1323 = vmax.f32 %v1131, %v1217
        %v1324 = vmax.f32 %v1132, %v1219
        %v1325 = vmax.f32 %v1133, %v1221
        %v1326 = vmax.f32 %v1134, %v1223
        %v1327 = vmax.f32 %v1135, %v1225
        %v1328 = vmax.f32 %v1136, %v1227
        %v1329 = vmax.f32 %v1137, %v1229
        %v1330 = vmax.f32 %v1138, %v1231
        %v1331 = vmax.f32 %v1139, %v1233
        %v1332 = vmax.f32 %v1140, %v1235
        %v1333 = vmax.f32 %v1141, %v1237
        %v1334 = vmax.f32 %v1142, %v1239
        %v1335 = vmax.f32 %v1143, %v1241
        %v1336 = vmax.f32 %v1144, %v1243
        %v1337 = vmax.f32 %v1145, %v1245
        %v1338 = vmax.f32 %v1146, %v1247
        %v1339 = vmax.f32 %v1147, %v1249
        %v1340 = vmax.f32 %v1148, %v1251
        %v1341 = vmax.f32 %v1149, %v1253
        %v1342 = vmax.f32 %v1150, %v1255
        %v1343 = vmax.f32 %v1151, %v1257
        %v1344 = vmax.f32 %v1152, %v1259
        %v1345 = vmax.f32 %v1153, %v1261
        %v1346 = vmax.f32 %v1154, %v1263
        %v1347 = vmax.f32 %v1155, %v1265
        %v1348 = vmax.f32 %v1156, %v1267
        %v1349 = vmax.f32 %v1157, %v1269
        %v1350 = vmax.f32 %v1158, %v1271
        %v1351 = vmax.f32 %v1159, %v1273
        %v1352 = vmax.f32 %v1160, %v1275
        %v1353 = vmax.f32 %v1161, %v1277
        %v1354 = vmax.f32 %v1162, %v1279
        %v1355 = vmax.f32 %v1163, %v1281
        %v1356 = vmax.f32 %v1164, %v1283
        %v1357 = vmax.f32 %v1165, %v1285
        %v1358 = vmax.f32 %v1166, %v1287
        %v1359 = vmax.f32 %v1167, %v1289
        %v1360 = vmax.f32 %v1168, %v1291
        %v1361 = vmax.f32 %v1169, %v1293
        %v1362 = vmax.f32 %v1170, %v1295
        %v1363 = vmax.f32 %v1171, %v1297
        %v1364 = vmax.f32 %v1172, %v1299
        %v1365 = vmax.f32 %v1173, %v1301
        %v1366 = vsub.f32 %v1110, %v1302
        %v1367 = vsub.f32 %v1111, %v1303
        %v1368 = vsub.f32 %v1112, %v1304
        %v1369 = vsub.f32 %v1113, %v1305
        %v1370 = vsub.f32 %v1114, %v1306
        %v1371 = vsub.f32 %v1115, %v1307
        %v1372 = vsub.f32 %v1116, %v1308
        %v1373 = vsub.f32 %v1117, %v1309
        %v1374 = vsub.f32 %v1118, %v1310
        %v1375 = vsub.f32 %v1119, %v1311
        %v1376 = vsub.f32 %v1120, %v1312
        %v1377 = vsub.f32 %v1121, %v1313
        %v1378 = vsub.f32 %v1122, %v1314
        %v1379 = vsub.f32 %v1123, %v1315
        %v1380 = vsub.f32 %v1124, %v1316
        %v1381 = vsub.f32 %v1125, %v1317
        %v1382 = vsub.f32 %v1126, %v1318
        %v1383 = vsub.f32 %v1127, %v1319
        %v1384 = vsub.f32 %v1128, %v1320
        %v1385 = vsub.f32 %v1129, %v1321
        %v1386 = vsub.f32 %v1130, %v1322
        %v1387 = vsub.f32 %v1131, %v1323
        %v1388 = vsub.f32 %v1132, %v1324
        %v1389 = vsub.f32 %v1133, %v1325
        %v1390 = vsub.f32 %v1134, %v1326
        %v1391 = vsub.f32 %v1135, %v1327
        %v1392 = vsub.f32 %v1136, %v1328
        %v1393 = vsub.f32 %v1137, %v1329
        %v1394 = vsub.f32 %v1138, %v1330
        %v1395 = vsub.f32 %v1139, %v1331
        %v1396 = vsub.f32 %v1140, %v1332
        %v1397 = vsub.f32 %v1141, %v1333
        %v1398 = vsub.f32 %v1142, %v1334
        %v1399 = vsub.f32 %v1143, %v1335
        %v1400 = vsub.f32 %v1144, %v1336
        %v1401 = vsub.f32 %v1145, %v1337
        %v1402 = vsub.f32 %v1146, %v1338
        %v1403 = vsub.f32 %v1147, %v1339
        %v1404 = vsub.f32 %v1148, %v1340
        %v1405 = vsub.f32 %v1149, %v1341
        %v1406 = vsub.f32 %v1150, %v1342
        %v1407 = vsub.f32 %v1151, %v1343
        %v1408 = vsub.f32 %v1152, %v1344
        %v1409 = vsub.f32 %v1153, %v1345
        %v1410 = vsub.f32 %v1154, %v1346
        %v1411 = vsub.f32 %v1155, %v1347
        %v1412 = vsub.f32 %v1156, %v1348
        %v1413 = vsub.f32 %v1157, %v1349
        %v1414 = vsub.f32 %v1158, %v1350
        %v1415 = vsub.f32 %v1159, %v1351
        %v1416 = vsub.f32 %v1160, %v1352
        %v1417 = vsub.f32 %v1161, %v1353
        %v1418 = vsub.f32 %v1162, %v1354
        %v1419 = vsub.f32 %v1163, %v1355
        %v1420 = vsub.f32 %v1164, %v1356
        %v1421 = vsub.f32 %v1165, %v1357
        %v1422 = vsub.f32 %v1166, %v1358
        %v1423 = vsub.f32 %v1167, %v1359
        %v1424 = vsub.f32 %v1168, %v1360
        %v1425 = vsub.f32 %v1169, %v1361
        %v1426 = vsub.f32 %v1170, %v1362
        %v1427 = vsub.f32 %v1171, %v1363
        %v1428 = vsub.f32 %v1172, %v1364
        %v1429 = vsub.f32 %v1173, %v1365
        %v1430 = vmul.f32 %v1366, 1.442695
        %v1431 = vpow.pop %v1430
        %v1432 = vmul.f32 %v1367, 1.442695
        %v1433 = vpow.pop %v1432
        %v1434 = vmul.f32 %v1368, 1.442695
        %v1435 = vpow.pop %v1434
        %v1436 = vmul.f32 %v1369, 1.442695
        %v1437 = vpow.pop %v1436
        %v1438 = vmul.f32 %v1370, 1.442695
        %v1439 = vpow.pop %v1438
        %v1440 = vmul.f32 %v1371, 1.442695
        %v1441 = vpow.pop %v1440
        %v1442 = vmul.f32 %v1372, 1.442695
        %v1443 = vpow.pop %v1442
        %v1444 = vmul.f32 %v1373, 1.442695
        %v1445 = vpow.pop %v1444
        %v1446 = vmul.f32 %v1374, 1.442695
        %v1447 = vpow.pop %v1446
        %v1448 = vmul.f32 %v1375, 1.442695
        %v1449 = vpow.pop %v1448
        %v1450 = vmul.f32 %v1376, 1.442695
        %v1451 = vpow.pop %v1450
        %v1452 = vmul.f32 %v1377, 1.442695
        %v1453 = vpow.pop %v1452
        %v1454 = vmul.f32 %v1378, 1.442695
        %v1455 = vpow.pop %v1454
        %v1456 = vmul.f32 %v1379, 1.442695
        %v1457 = vpow.pop %v1456
        %v1458 = vmul.f32 %v1380, 1.442695
        %v1459 = vpow.pop %v1458
        %v1460 = vmul.f32 %v1381, 1.442695
        %v1461 = vpow.pop %v1460
        %v1462 = vmul.f32 %v1382, 1.442695
        %v1463 = vpow.pop %v1462
        %v1464 = vmul.f32 %v1383, 1.442695
        %v1465 = vpow.pop %v1464
        %v1466 = vmul.f32 %v1384, 1.442695
        %v1467 = vpow.pop %v1466
        %v1468 = vmul.f32 %v1385, 1.442695
        %v1469 = vpow.pop %v1468
        %v1470 = vmul.f32 %v1386, 1.442695
        %v1471 = vpow.pop %v1470
        %v1472 = vmul.f32 %v1387, 1.442695
        %v1473 = vpow.pop %v1472
        %v1474 = vmul.f32 %v1388, 1.442695
        %v1475 = vpow.pop %v1474
        %v1476 = vmul.f32 %v1389, 1.442695
        %v1477 = vpow.pop %v1476
        %v1478 = vmul.f32 %v1390, 1.442695
        %v1479 = vpow.pop %v1478
        %v1480 = vmul.f32 %v1391, 1.442695
        %v1481 = vpow.pop %v1480
        %v1482 = vmul.f32 %v1392, 1.442695
        %v1483 = vpow.pop %v1482
        %v1484 = vmul.f32 %v1393, 1.442695
        %v1485 = vpow.pop %v1484
        %v1486 = vmul.f32 %v1394, 1.442695
        %v1487 = vpow.pop %v1486
        %v1488 = vmul.f32 %v1395, 1.442695
        %v1489 = vpow.pop %v1488
        %v1490 = vmul.f32 %v1396, 1.442695
        %v1491 = vpow.pop %v1490
        %v1492 = vmul.f32 %v1397, 1.442695
        %v1493 = vpow.pop %v1492
        %v1494 = vmul.f32 %v1398, 1.442695
        %v1495 = vpow.pop %v1494
        %v1496 = vmul.f32 %v1399, 1.442695
        %v1497 = vpow.pop %v1496
        %v1498 = vmul.f32 %v1400, 1.442695
        %v1499 = vpow.pop %v1498
        %v1500 = vmul.f32 %v1401, 1.442695
        %v1501 = vpow.pop %v1500
        %v1502 = vmul.f32 %v1402, 1.442695
        %v1503 = vpow.pop %v1502
        %v1504 = vmul.f32 %v1403, 1.442695
        %v1505 = vpow.pop %v1504
        %v1506 = vmul.f32 %v1404, 1.442695
        %v1507 = vpow.pop %v1506
        %v1508 = vmul.f32 %v1405, 1.442695
        %v1509 = vpow.pop %v1508
        %v1510 = vmul.f32 %v1406, 1.442695
        %v1511 = vpow.pop %v1510
        %v1512 = vmul.f32 %v1407, 1.442695
        %v1513 = vpow.pop %v1512
        %v1514 = vmul.f32 %v1408, 1.442695
        %v1515 = vpow.pop %v1514
        %v1516 = vmul.f32 %v1409, 1.442695
        %v1517 = vpow.pop %v1516
        %v1518 = vmul.f32 %v1410, 1.442695
        %v1519 = vpow.pop %v1518
        %v1520 = vmul.f32 %v1411, 1.442695
        %v1521 = vpow.pop %v1520
        %v1522 = vmul.f32 %v1412, 1.442695
        %v1523 = vpow.pop %v1522
        %v1524 = vmul.f32 %v1413, 1.442695
        %v1525 = vpow.pop %v1524
        %v1526 = vmul.f32 %v1414, 1.442695
        %v1527 = vpow.pop %v1526
        %v1528 = vmul.f32 %v1415, 1.442695
        %v1529 = vpow.pop %v1528
        %v1530 = vmul.f32 %v1416, 1.442695
        %v1531 = vpow.pop %v1530
        %v1532 = vmul.f32 %v1417, 1.442695
        %v1533 = vpow.pop %v1532
        %v1534 = vmul.f32 %v1418, 1.442695
        %v1535 = vpow.pop %v1534
        %v1536 = vmul.f32 %v1419, 1.442695
        %v1537 = vpow.pop %v1536
        %v1538 = vmul.f32 %v1420, 1.442695
        %v1539 = vpow.pop %v1538
        %v1540 = vmul.f32 %v1421, 1.442695
        %v1541 = vpow.pop %v1540
        %v1542 = vmul.f32 %v1422, 1.442695
        %v1543 = vpow.pop %v1542
        %v1544 = vmul.f32 %v1423, 1.442695
        %v1545 = vpow.pop %v1544
        %v1546 = vmul.f32 %v1424, 1.442695
        %v1547 = vpow.pop %v1546
        %v1548 = vmul.f32 %v1425, 1.442695
        %v1549 = vpow.pop %v1548
        %v1550 = vmul.f32 %v1426, 1.442695
        %v1551 = vpow.pop %v1550
        %v1552 = vmul.f32 %v1427, 1.442695
        %v1553 = vpow.pop %v1552
        %v1554 = vmul.f32 %v1428, 1.442695
        %v1555 = vpow.pop %v1554
        %v1556 = vmul.f32 %v1429, 1.442695
        %v1557 = vpow.pop %v1556
        %1559 = vset.pattern.permute.xlu0 0
        %1560 = vperm.xlu0 %1559, %v1302
        %v1561 = vpop.permute.xlu0 %1560
        %1564 = vset.pattern.permute.xlu0 0
        %1565 = vperm.xlu0 %1564, %v1303
        %v1566 = vpop.permute.xlu0 %1565
        %1569 = vset.pattern.permute.xlu0 0
        %1570 = vperm.xlu0 %1569, %v1304
        %v1571 = vpop.permute.xlu0 %1570
        %1574 = vset.pattern.permute.xlu0 0
        %1575 = vperm.xlu0 %1574, %v1305
        %v1576 = vpop.permute.xlu0 %1575
        %1579 = vset.pattern.permute.xlu0 0
        %1580 = vperm.xlu0 %1579, %v1306
        %v1581 = vpop.permute.xlu0 %1580
        %1584 = vset.pattern.permute.xlu0 0
        %1585 = vperm.xlu0 %1584, %v1307
        %v1586 = vpop.permute.xlu0 %1585
        %1589 = vset.pattern.permute.xlu0 0
        %1590 = vperm.xlu0 %1589, %v1308
        %v1591 = vpop.permute.xlu0 %1590
        %1594 = vset.pattern.permute.xlu0 0
        %1595 = vperm.xlu0 %1594, %v1309
        %v1596 = vpop.permute.xlu0 %1595
        %1599 = vset.pattern.permute.xlu0 0
        %1600 = vperm.xlu0 %1599, %v1310
        %v1601 = vpop.permute.xlu0 %1600
        %1604 = vset.pattern.permute.xlu0 0
        %1605 = vperm.xlu0 %1604, %v1311
        %v1606 = vpop.permute.xlu0 %1605
        %1609 = vset.pattern.permute.xlu0 0
        %1610 = vperm.xlu0 %1609, %v1312
        %v1611 = vpop.permute.xlu0 %1610
        %1614 = vset.pattern.permute.xlu0 0
        %1615 = vperm.xlu0 %1614, %v1313
        %v1616 = vpop.permute.xlu0 %1615
        %1619 = vset.pattern.permute.xlu0 0
        %1620 = vperm.xlu0 %1619, %v1314
        %v1621 = vpop.permute.xlu0 %1620
        %1624 = vset.pattern.permute.xlu0 0
        %1625 = vperm.xlu0 %1624, %v1315
        %v1626 = vpop.permute.xlu0 %1625
        %1629 = vset.pattern.permute.xlu0 0
        %1630 = vperm.xlu0 %1629, %v1316
        %v1631 = vpop.permute.xlu0 %1630
        %1634 = vset.pattern.permute.xlu0 0
        %1635 = vperm.xlu0 %1634, %v1317
        %v1636 = vpop.permute.xlu0 %1635
        %1639 = vset.pattern.permute.xlu0 0
        %1640 = vperm.xlu0 %1639, %v1318
        %v1641 = vpop.permute.xlu0 %1640
        %1644 = vset.pattern.permute.xlu0 0
        %1645 = vperm.xlu0 %1644, %v1319
        %v1646 = vpop.permute.xlu0 %1645
        %1649 = vset.pattern.permute.xlu0 0
        %1650 = vperm.xlu0 %1649, %v1320
        %v1651 = vpop.permute.xlu0 %1650
        %1654 = vset.pattern.permute.xlu0 0
        %1655 = vperm.xlu0 %1654, %v1321
        %v1656 = vpop.permute.xlu0 %1655
        %1659 = vset.pattern.permute.xlu0 0
        %1660 = vperm.xlu0 %1659, %v1322
        %v1661 = vpop.permute.xlu0 %1660
        %1664 = vset.pattern.permute.xlu0 0
        %1665 = vperm.xlu0 %1664, %v1323
        %v1666 = vpop.permute.xlu0 %1665
        %1669 = vset.pattern.permute.xlu0 0
        %1670 = vperm.xlu0 %1669, %v1324
        %v1671 = vpop.permute.xlu0 %1670
        %1674 = vset.pattern.permute.xlu0 0
        %1675 = vperm.xlu0 %1674, %v1325
        %v1676 = vpop.permute.xlu0 %1675
        %1679 = vset.pattern.permute.xlu0 0
        %1680 = vperm.xlu0 %1679, %v1326
        %v1681 = vpop.permute.xlu0 %1680
        %1684 = vset.pattern.permute.xlu0 0
        %1685 = vperm.xlu0 %1684, %v1327
        %v1686 = vpop.permute.xlu0 %1685
        %1689 = vset.pattern.permute.xlu0 0
        %1690 = vperm.xlu0 %1689, %v1328
        %v1691 = vpop.permute.xlu0 %1690
        %1694 = vset.pattern.permute.xlu0 0
        %1695 = vperm.xlu0 %1694, %v1329
        %v1696 = vpop.permute.xlu0 %1695
        %1699 = vset.pattern.permute.xlu0 0
        %1700 = vperm.xlu0 %1699, %v1330
        %v1701 = vpop.permute.xlu0 %1700
        %1704 = vset.pattern.permute.xlu0 0
        %1705 = vperm.xlu0 %1704, %v1331
        %v1706 = vpop.permute.xlu0 %1705
        %1709 = vset.pattern.permute.xlu0 0
        %1710 = vperm.xlu0 %1709, %v1332
        %v1711 = vpop.permute.xlu0 %1710
        %1714 = vset.pattern.permute.xlu0 0
        %1715 = vperm.xlu0 %1714, %v1333
        %v1716 = vpop.permute.xlu0 %1715
        %1719 = vset.pattern.permute.xlu0 0
        %1720 = vperm.xlu0 %1719, %v1334
        %v1721 = vpop.permute.xlu0 %1720
        %1724 = vset.pattern.permute.xlu0 0
        %1725 = vperm.xlu0 %1724, %v1335
        %v1726 = vpop.permute.xlu0 %1725
        %1729 = vset.pattern.permute.xlu0 0
        %1730 = vperm.xlu0 %1729, %v1336
        %v1731 = vpop.permute.xlu0 %1730
        %1734 = vset.pattern.permute.xlu0 0
        %1735 = vperm.xlu0 %1734, %v1337
        %v1736 = vpop.permute.xlu0 %1735
        %1739 = vset.pattern.permute.xlu0 0
        %1740 = vperm.xlu0 %1739, %v1338
        %v1741 = vpop.permute.xlu0 %1740
        %1744 = vset.pattern.permute.xlu0 0
        %1745 = vperm.xlu0 %1744, %v1339
        %v1746 = vpop.permute.xlu0 %1745
        %1749 = vset.pattern.permute.xlu0 0
        %1750 = vperm.xlu0 %1749, %v1340
        %v1751 = vpop.permute.xlu0 %1750
        %1754 = vset.pattern.permute.xlu0 0
        %1755 = vperm.xlu0 %1754, %v1341
        %v1756 = vpop.permute.xlu0 %1755
        %1759 = vset.pattern.permute.xlu0 0
        %1760 = vperm.xlu0 %1759, %v1342
        %v1761 = vpop.permute.xlu0 %1760
        %1764 = vset.pattern.permute.xlu0 0
        %1765 = vperm.xlu0 %1764, %v1343
        %v1766 = vpop.permute.xlu0 %1765
        %1769 = vset.pattern.permute.xlu0 0
        %1770 = vperm.xlu0 %1769, %v1344
        %v1771 = vpop.permute.xlu0 %1770
        %1774 = vset.pattern.permute.xlu0 0
        %1775 = vperm.xlu0 %1774, %v1345
        %v1776 = vpop.permute.xlu0 %1775
        %1779 = vset.pattern.permute.xlu0 0
        %1780 = vperm.xlu0 %1779, %v1346
        %v1781 = vpop.permute.xlu0 %1780
        %1784 = vset.pattern.permute.xlu0 0
        %1785 = vperm.xlu0 %1784, %v1347
        %v1786 = vpop.permute.xlu0 %1785
        %1789 = vset.pattern.permute.xlu0 0
        %1790 = vperm.xlu0 %1789, %v1348
        %v1791 = vpop.permute.xlu0 %1790
        %1794 = vset.pattern.permute.xlu0 0
        %1795 = vperm.xlu0 %1794, %v1349
        %v1796 = vpop.permute.xlu0 %1795
        %1799 = vset.pattern.permute.xlu0 0
        %1800 = vperm.xlu0 %1799, %v1350
        %v1801 = vpop.permute.xlu0 %1800
        %1804 = vset.pattern.permute.xlu0 0
        %1805 = vperm.xlu0 %1804, %v1351
        %v1806 = vpop.permute.xlu0 %1805
        %1809 = vset.pattern.permute.xlu0 0
        %1810 = vperm.xlu0 %1809, %v1352
        %v1811 = vpop.permute.xlu0 %1810
        %1814 = vset.pattern.permute.xlu0 0
        %1815 = vperm.xlu0 %1814, %v1353
        %v1816 = vpop.permute.xlu0 %1815
        %1819 = vset.pattern.permute.xlu0 0
        %1820 = vperm.xlu0 %1819, %v1354
        %v1821 = vpop.permute.xlu0 %1820
        %1824 = vset.pattern.permute.xlu0 0
        %1825 = vperm.xlu0 %1824, %v1355
        %v1826 = vpop.permute.xlu0 %1825
        %1829 = vset.pattern.permute.xlu0 0
        %1830 = vperm.xlu0 %1829, %v1356
        %v1831 = vpop.permute.xlu0 %1830
        %1834 = vset.pattern.permute.xlu0 0
        %1835 = vperm.xlu0 %1834, %v1357
        %v1836 = vpop.permute.xlu0 %1835
        %1839 = vset.pattern.permute.xlu0 0
        %1840 = vperm.xlu0 %1839, %v1358
        %v1841 = vpop.permute.xlu0 %1840
        %1844 = vset.pattern.permute.xlu0 0
        %1845 = vperm.xlu0 %1844, %v1359
        %v1846 = vpop.permute.xlu0 %1845
        %1849 = vset.pattern.permute.xlu0 0
        %1850 = vperm.xlu0 %1849, %v1360
        %v1851 = vpop.permute.xlu0 %1850
        %1854 = vset.pattern.permute.xlu0 0
        %1855 = vperm.xlu0 %1854, %v1361
        %v1856 = vpop.permute.xlu0 %1855
        %1859 = vset.pattern.permute.xlu0 0
        %1860 = vperm.xlu0 %1859, %v1362
        %v1861 = vpop.permute.xlu0 %1860
        %1864 = vset.pattern.permute.xlu0 0
        %1865 = vperm.xlu0 %1864, %v1363
        %v1866 = vpop.permute.xlu0 %1865
        %1869 = vset.pattern.permute.xlu0 0
        %1870 = vperm.xlu0 %1869, %v1364
        %v1871 = vpop.permute.xlu0 %1870
        %1874 = vset.pattern.permute.xlu0 0
        %1875 = vperm.xlu0 %1874, %v1365
        %v1876 = vpop.permute.xlu0 %1875
        %v1878 = vsub.f32 %v619, %v1561
        %v1879 = vsub.f32 %v622, %v1566
        %v1880 = vsub.f32 %v625, %v1571
        %v1881 = vsub.f32 %v628, %v1576
        %v1882 = vsub.f32 %v631, %v1581
        %v1883 = vsub.f32 %v634, %v1586
        %v1884 = vsub.f32 %v637, %v1591
        %v1885 = vsub.f32 %v640, %v1596
        %v1886 = vsub.f32 %v643, %v1601
        %v1887 = vsub.f32 %v646, %v1606
        %v1888 = vsub.f32 %v649, %v1611
        %v1889 = vsub.f32 %v652, %v1616
        %v1890 = vsub.f32 %v655, %v1621
        %v1891 = vsub.f32 %v658, %v1626
        %v1892 = vsub.f32 %v661, %v1631
        %v1893 = vsub.f32 %v664, %v1636
        %v1894 = vsub.f32 %v767, %v1641
        %v1895 = vsub.f32 %v770, %v1646
        %v1896 = vsub.f32 %v773, %v1651
        %v1897 = vsub.f32 %v776, %v1656
        %v1898 = vsub.f32 %v779, %v1661
        %v1899 = vsub.f32 %v782, %v1666
        %v1900 = vsub.f32 %v785, %v1671
        %v1901 = vsub.f32 %v788, %v1676
        %v1902 = vsub.f32 %v791, %v1681
        %v1903 = vsub.f32 %v794, %v1686
        %v1904 = vsub.f32 %v797, %v1691
        %v1905 = vsub.f32 %v800, %v1696
        %v1906 = vsub.f32 %v803, %v1701
        %v1907 = vsub.f32 %v806, %v1706
        %v1908 = vsub.f32 %v809, %v1711
        %v1909 = vsub.f32 %v812, %v1716
        %v1910 = vsub.f32 %v915, %v1721
        %v1911 = vsub.f32 %v918, %v1726
        %v1912 = vsub.f32 %v921, %v1731
        %v1913 = vsub.f32 %v924, %v1736
        %v1914 = vsub.f32 %v927, %v1741
        %v1915 = vsub.f32 %v930, %v1746
        %v1916 = vsub.f32 %v933, %v1751
        %v1917 = vsub.f32 %v936, %v1756
        %v1918 = vsub.f32 %v939, %v1761
        %v1919 = vsub.f32 %v942, %v1766
        %v1920 = vsub.f32 %v945, %v1771
        %v1921 = vsub.f32 %v948, %v1776
        %v1922 = vsub.f32 %v951, %v1781
        %v1923 = vsub.f32 %v954, %v1786
        %v1924 = vsub.f32 %v957, %v1791
        %v1925 = vsub.f32 %v960, %v1796
        %v1926 = vsub.f32 %v1063, %v1801
        %v1927 = vsub.f32 %v1066, %v1806
        %v1928 = vsub.f32 %v1069, %v1811
        %v1929 = vsub.f32 %v1072, %v1816
        %v1930 = vsub.f32 %v1075, %v1821
        %v1931 = vsub.f32 %v1078, %v1826
        %v1932 = vsub.f32 %v1081, %v1831
        %v1933 = vsub.f32 %v1084, %v1836
        %v1934 = vsub.f32 %v1087, %v1841
        %v1935 = vsub.f32 %v1090, %v1846
        %v1936 = vsub.f32 %v1093, %v1851
        %v1937 = vsub.f32 %v1096, %v1856
        %v1938 = vsub.f32 %v1099, %v1861
        %v1939 = vsub.f32 %v1102, %v1866
        %v1940 = vsub.f32 %v1105, %v1871
        %v1941 = vsub.f32 %v1108, %v1876
        %v1942 = vmul.f32 %v1878, 1.442695
        %v1943 = vpow.pop %v1942
        %v1944 = vmul.f32 %v1879, 1.442695
        %v1945 = vpow.pop %v1944
        %v1946 = vmul.f32 %v1880, 1.442695
        %v1947 = vpow.pop %v1946
        %v1948 = vmul.f32 %v1881, 1.442695
        %v1949 = vpow.pop %v1948
        %v1950 = vmul.f32 %v1882, 1.442695
        %v1951 = vpow.pop %v1950
        %v1952 = vmul.f32 %v1883, 1.442695
        %v1953 = vpow.pop %v1952
        %v1954 = vmul.f32 %v1884, 1.442695
        %v1955 = vpow.pop %v1954
        %v1956 = vmul.f32 %v1885, 1.442695
        %v1957 = vpow.pop %v1956
        %v1958 = vmul.f32 %v1886, 1.442695
        %v1959 = vpow.pop %v1958
        %v1960 = vmul.f32 %v1887, 1.442695
        %v1961 = vpow.pop %v1960
        %v1962 = vmul.f32 %v1888, 1.442695
        %v1963 = vpow.pop %v1962
        %v1964 = vmul.f32 %v1889, 1.442695
        %v1965 = vpow.pop %v1964
        %v1966 = vmul.f32 %v1890, 1.442695
        %v1967 = vpow.pop %v1966
        %v1968 = vmul.f32 %v1891, 1.442695
        %v1969 = vpow.pop %v1968
        %v1970 = vmul.f32 %v1892, 1.442695
        %v1971 = vpow.pop %v1970
        %v1972 = vmul.f32 %v1893, 1.442695
        %v1973 = vpow.pop %v1972
        %v1974 = vmul.f32 %v1894, 1.442695
        %v1975 = vpow.pop %v1974
        %v1976 = vmul.f32 %v1895, 1.442695
        %v1977 = vpow.pop %v1976
        %v1978 = vmul.f32 %v1896, 1.442695
        %v1979 = vpow.pop %v1978
        %v1980 = vmul.f32 %v1897, 1.442695
        %v1981 = vpow.pop %v1980
        %v1982 = vmul.f32 %v1898, 1.442695
        %v1983 = vpow.pop %v1982
        %v1984 = vmul.f32 %v1899, 1.442695
        %v1985 = vpow.pop %v1984
        %v1986 = vmul.f32 %v1900, 1.442695
        %v1987 = vpow.pop %v1986
        %v1988 = vmul.f32 %v1901, 1.442695
        %v1989 = vpow.pop %v1988
        %v1990 = vmul.f32 %v1902, 1.442695
        %v1991 = vpow.pop %v1990
        %v1992 = vmul.f32 %v1903, 1.442695
        %v1993 = vpow.pop %v1992
        %v1994 = vmul.f32 %v1904, 1.442695
        %v1995 = vpow.pop %v1994
        %v1996 = vmul.f32 %v1905, 1.442695
        %v1997 = vpow.pop %v1996
        %v1998 = vmul.f32 %v1906, 1.442695
        %v1999 = vpow.pop %v1998
        %v2000 = vmul.f32 %v1907, 1.442695
        %v2001 = vpow.pop %v2000
        %v2002 = vmul.f32 %v1908, 1.442695
        %v2003 = vpow.pop %v2002
        %v2004 = vmul.f32 %v1909, 1.442695
        %v2005 = vpow.pop %v2004
        %v2006 = vmul.f32 %v1910, 1.442695
        %v2007 = vpow.pop %v2006
        %v2008 = vmul.f32 %v1911, 1.442695
        %v2009 = vpow.pop %v2008
        %v2010 = vmul.f32 %v1912, 1.442695
        %v2011 = vpow.pop %v2010
        %v2012 = vmul.f32 %v1913, 1.442695
        %v2013 = vpow.pop %v2012
        %v2014 = vmul.f32 %v1914, 1.442695
        %v2015 = vpow.pop %v2014
        %v2016 = vmul.f32 %v1915, 1.442695
        %v2017 = vpow.pop %v2016
        %v2018 = vmul.f32 %v1916, 1.442695
        %v2019 = vpow.pop %v2018
        %v2020 = vmul.f32 %v1917, 1.442695
        %v2021 = vpow.pop %v2020
        %v2022 = vmul.f32 %v1918, 1.442695
        %v2023 = vpow.pop %v2022
        %v2024 = vmul.f32 %v1919, 1.442695
        %v2025 = vpow.pop %v2024
        %v2026 = vmul.f32 %v1920, 1.442695
        %v2027 = vpow.pop %v2026
        %v2028 = vmul.f32 %v1921, 1.442695
        %v2029 = vpow.pop %v2028
        %v2030 = vmul.f32 %v1922, 1.442695
        %v2031 = vpow.pop %v2030
        %v2032 = vmul.f32 %v1923, 1.442695
        %v2033 = vpow.pop %v2032
        %v2034 = vmul.f32 %v1924, 1.442695
        %v2035 = vpow.pop %v2034
        %v2036 = vmul.f32 %v1925, 1.442695
        %v2037 = vpow.pop %v2036
        %v2038 = vmul.f32 %v1926, 1.442695
        %v2039 = vpow.pop %v2038
        %v2040 = vmul.f32 %v1927, 1.442695
        %v2041 = vpow.pop %v2040
        %v2042 = vmul.f32 %v1928, 1.442695
        %v2043 = vpow.pop %v2042
        %v2044 = vmul.f32 %v1929, 1.442695
        %v2045 = vpow.pop %v2044
        %v2046 = vmul.f32 %v1930, 1.442695
        %v2047 = vpow.pop %v2046
        %v2048 = vmul.f32 %v1931, 1.442695
        %v2049 = vpow.pop %v2048
        %v2050 = vmul.f32 %v1932, 1.442695
        %v2051 = vpow.pop %v2050
        %v2052 = vmul.f32 %v1933, 1.442695
        %v2053 = vpow.pop %v2052
        %v2054 = vmul.f32 %v1934, 1.442695
        %v2055 = vpow.pop %v2054
        %v2056 = vmul.f32 %v1935, 1.442695
        %v2057 = vpow.pop %v2056
        %v2058 = vmul.f32 %v1936, 1.442695
        %v2059 = vpow.pop %v2058
        %v2060 = vmul.f32 %v1937, 1.442695
        %v2061 = vpow.pop %v2060
        %v2062 = vmul.f32 %v1938, 1.442695
        %v2063 = vpow.pop %v2062
        %v2064 = vmul.f32 %v1939, 1.442695
        %v2065 = vpow.pop %v2064
        %v2066 = vmul.f32 %v1940, 1.442695
        %v2067 = vpow.pop %v2066
        %v2068 = vmul.f32 %v1941, 1.442695
        %v2069 = vpow.pop %v2068
        %v2070 = vld [vmem:[#allocation3] sm:$0xff]
        %v2071 = vld [vmem:[#allocation3 + $0x8] sm:$0xff]
        %v2072 = vld [vmem:[#allocation3 + $0x10] sm:$0xff]
        %v2073 = vld [vmem:[#allocation3 + $0x18] sm:$0xff]
        %v2074 = vld [vmem:[#allocation3 + $0x20] sm:$0xff]
        %v2075 = vld [vmem:[#allocation3 + $0x28] sm:$0xff]
        %v2076 = vld [vmem:[#allocation3 + $0x30] sm:$0xff]
        %v2077 = vld [vmem:[#allocation3 + $0x38] sm:$0xff]
        %v2078 = vld [vmem:[#allocation3 + $0x40] sm:$0xff]
        %v2079 = vld [vmem:[#allocation3 + $0x48] sm:$0xff]
        %v2080 = vld [vmem:[#allocation3 + $0x50] sm:$0xff]
        %v2081 = vld [vmem:[#allocation3 + $0x58] sm:$0xff]
        %v2082 = vld [vmem:[#allocation3 + $0x60] sm:$0xff]
        %v2083 = vld [vmem:[#allocation3 + $0x68] sm:$0xff]
        %v2084 = vld [vmem:[#allocation3 + $0x70] sm:$0xff]
        %v2085 = vld [vmem:[#allocation3 + $0x78] sm:$0xff]
        %v2086 = vld [vmem:[#allocation3 + $0x80] sm:$0xff]
        %v2087 = vld [vmem:[#allocation3 + $0x88] sm:$0xff]
        %v2088 = vld [vmem:[#allocation3 + $0x90] sm:$0xff]
        %v2089 = vld [vmem:[#allocation3 + $0x98] sm:$0xff]
        %v2090 = vld [vmem:[#allocation3 + $0xa0] sm:$0xff]
        %v2091 = vld [vmem:[#allocation3 + $0xa8] sm:$0xff]
        %v2092 = vld [vmem:[#allocation3 + $0xb0] sm:$0xff]
        %v2093 = vld [vmem:[#allocation3 + $0xb8] sm:$0xff]
        %v2094 = vld [vmem:[#allocation3 + $0xc0] sm:$0xff]
        %v2095 = vld [vmem:[#allocation3 + $0xc8] sm:$0xff]
        %v2096 = vld [vmem:[#allocation3 + $0xd0] sm:$0xff]
        %v2097 = vld [vmem:[#allocation3 + $0xd8] sm:$0xff]
        %v2098 = vld [vmem:[#allocation3 + $0xe0] sm:$0xff]
        %v2099 = vld [vmem:[#allocation3 + $0xe8] sm:$0xff]
        %v2100 = vld [vmem:[#allocation3 + $0xf0] sm:$0xff]
        %v2101 = vld [vmem:[#allocation3 + $0xf8] sm:$0xff]
        %v2102 = vld [vmem:[#allocation3 + $0x100] sm:$0xff]
        %v2103 = vld [vmem:[#allocation3 + $0x108] sm:$0xff]
        %v2104 = vld [vmem:[#allocation3 + $0x110] sm:$0xff]
        %v2105 = vld [vmem:[#allocation3 + $0x118] sm:$0xff]
        %v2106 = vld [vmem:[#allocation3 + $0x120] sm:$0xff]
        %v2107 = vld [vmem:[#allocation3 + $0x128] sm:$0xff]
        %v2108 = vld [vmem:[#allocation3 + $0x130] sm:$0xff]
        %v2109 = vld [vmem:[#allocation3 + $0x138] sm:$0xff]
        %v2110 = vld [vmem:[#allocation3 + $0x140] sm:$0xff]
        %v2111 = vld [vmem:[#allocation3 + $0x148] sm:$0xff]
        %v2112 = vld [vmem:[#allocation3 + $0x150] sm:$0xff]
        %v2113 = vld [vmem:[#allocation3 + $0x158] sm:$0xff]
        %v2114 = vld [vmem:[#allocation3 + $0x160] sm:$0xff]
        %v2115 = vld [vmem:[#allocation3 + $0x168] sm:$0xff]
        %v2116 = vld [vmem:[#allocation3 + $0x170] sm:$0xff]
        %v2117 = vld [vmem:[#allocation3 + $0x178] sm:$0xff]
        %v2118 = vld [vmem:[#allocation3 + $0x180] sm:$0xff]
        %v2119 = vld [vmem:[#allocation3 + $0x188] sm:$0xff]
        %v2120 = vld [vmem:[#allocation3 + $0x190] sm:$0xff]
        %v2121 = vld [vmem:[#allocation3 + $0x198] sm:$0xff]
        %v2122 = vld [vmem:[#allocation3 + $0x1a0] sm:$0xff]
        %v2123 = vld [vmem:[#allocation3 + $0x1a8] sm:$0xff]
        %v2124 = vld [vmem:[#allocation3 + $0x1b0] sm:$0xff]
        %v2125 = vld [vmem:[#allocation3 + $0x1b8] sm:$0xff]
        %v2126 = vld [vmem:[#allocation3 + $0x1c0] sm:$0xff]
        %v2127 = vld [vmem:[#allocation3 + $0x1c8] sm:$0xff]
        %v2128 = vld [vmem:[#allocation3 + $0x1d0] sm:$0xff]
        %v2129 = vld [vmem:[#allocation3 + $0x1d8] sm:$0xff]
        %v2130 = vld [vmem:[#allocation3 + $0x1e0] sm:$0xff]
        %v2131 = vld [vmem:[#allocation3 + $0x1e8] sm:$0xff]
        %v2132 = vld [vmem:[#allocation3 + $0x1f0] sm:$0xff]
        %v2133 = vld [vmem:[#allocation3 + $0x1f8] sm:$0xff]
        %v2134 = vmul.f32 %v1431, %v2070
        %v2135 = vmul.f32 %v1433, %v2071
        %v2136 = vmul.f32 %v1435, %v2072
        %v2137 = vmul.f32 %v1437, %v2073
        %v2138 = vmul.f32 %v1439, %v2074
        %v2139 = vmul.f32 %v1441, %v2075
        %v2140 = vmul.f32 %v1443, %v2076
        %v2141 = vmul.f32 %v1445, %v2077
        %v2142 = vmul.f32 %v1447, %v2078
        %v2143 = vmul.f32 %v1449, %v2079
        %v2144 = vmul.f32 %v1451, %v2080
        %v2145 = vmul.f32 %v1453, %v2081
        %v2146 = vmul.f32 %v1455, %v2082
        %v2147 = vmul.f32 %v1457, %v2083
        %v2148 = vmul.f32 %v1459, %v2084
        %v2149 = vmul.f32 %v1461, %v2085
        %v2150 = vmul.f32 %v1463, %v2086
        %v2151 = vmul.f32 %v1465, %v2087
        %v2152 = vmul.f32 %v1467, %v2088
        %v2153 = vmul.f32 %v1469, %v2089
        %v2154 = vmul.f32 %v1471, %v2090
        %v2155 = vmul.f32 %v1473, %v2091
        %v2156 = vmul.f32 %v1475, %v2092
        %v2157 = vmul.f32 %v1477, %v2093
        %v2158 = vmul.f32 %v1479, %v2094
        %v2159 = vmul.f32 %v1481, %v2095
        %v2160 = vmul.f32 %v1483, %v2096
        %v2161 = vmul.f32 %v1485, %v2097
        %v2162 = vmul.f32 %v1487, %v2098
        %v2163 = vmul.f32 %v1489, %v2099
        %v2164 = vmul.f32 %v1491, %v2100
        %v2165 = vmul.f32 %v1493, %v2101
        %v2166 = vmul.f32 %v1495, %v2102
        %v2167 = vmul.f32 %v1497, %v2103
        %v2168 = vmul.f32 %v1499, %v2104
        %v2169 = vmul.f32 %v1501, %v2105
        %v2170 = vmul.f32 %v1503, %v2106
        %v2171 = vmul.f32 %v1505, %v2107
        %v2172 = vmul.f32 %v1507, %v2108
        %v2173 = vmul.f32 %v1509, %v2109
        %v2174 = vmul.f32 %v1511, %v2110
        %v2175 = vmul.f32 %v1513, %v2111
        %v2176 = vmul.f32 %v1515, %v2112
        %v2177 = vmul.f32 %v1517, %v2113
        %v2178 = vmul.f32 %v1519, %v2114
        %v2179 = vmul.f32 %v1521, %v2115
        %v2180 = vmul.f32 %v1523, %v2116
        %v2181 = vmul.f32 %v1525, %v2117
        %v2182 = vmul.f32 %v1527, %v2118
        %v2183 = vmul.f32 %v1529, %v2119
        %v2184 = vmul.f32 %v1531, %v2120
        %v2185 = vmul.f32 %v1533, %v2121
        %v2186 = vmul.f32 %v1535, %v2122
        %v2187 = vmul.f32 %v1537, %v2123
        %v2188 = vmul.f32 %v1539, %v2124
        %v2189 = vmul.f32 %v1541, %v2125
        %v2190 = vmul.f32 %v1543, %v2126
        %v2191 = vmul.f32 %v1545, %v2127
        %v2192 = vmul.f32 %v1547, %v2128
        %v2193 = vmul.f32 %v1549, %v2129
        %v2194 = vmul.f32 %v1551, %v2130
        %v2195 = vmul.f32 %v1553, %v2131
        %v2196 = vmul.f32 %v1555, %v2132
        %v2197 = vmul.f32 %v1557, %v2133
        %2198 = vadd.xlane.f32.xlu0 %v1943
        %v2199 = vpop.xlane.xlu0 %2198
        %2200 = vadd.xlane.f32.xlu0 %v1945
        %v2201 = vpop.xlane.xlu0 %2200
        %2202 = vadd.xlane.f32.xlu0 %v1947
        %v2203 = vpop.xlane.xlu0 %2202
        %2204 = vadd.xlane.f32.xlu0 %v1949
        %v2205 = vpop.xlane.xlu0 %2204
        %2206 = vadd.xlane.f32.xlu0 %v1951
        %v2207 = vpop.xlane.xlu0 %2206
        %2208 = vadd.xlane.f32.xlu0 %v1953
        %v2209 = vpop.xlane.xlu0 %2208
        %2210 = vadd.xlane.f32.xlu0 %v1955
        %v2211 = vpop.xlane.xlu0 %2210
        %2212 = vadd.xlane.f32.xlu0 %v1957
        %v2213 = vpop.xlane.xlu0 %2212
        %2214 = vadd.xlane.f32.xlu0 %v1959
        %v2215 = vpop.xlane.xlu0 %2214
        %2216 = vadd.xlane.f32.xlu0 %v1961
        %v2217 = vpop.xlane.xlu0 %2216
        %2218 = vadd.xlane.f32.xlu0 %v1963
        %v2219 = vpop.xlane.xlu0 %2218
        %2220 = vadd.xlane.f32.xlu0 %v1965
        %v2221 = vpop.xlane.xlu0 %2220
        %2222 = vadd.xlane.f32.xlu0 %v1967
        %v2223 = vpop.xlane.xlu0 %2222
        %2224 = vadd.xlane.f32.xlu0 %v1969
        %v2225 = vpop.xlane.xlu0 %2224
        %2226 = vadd.xlane.f32.xlu0 %v1971
        %v2227 = vpop.xlane.xlu0 %2226
        %2228 = vadd.xlane.f32.xlu0 %v1973
        %v2229 = vpop.xlane.xlu0 %2228
        %2230 = vadd.xlane.f32.xlu0 %v1975
        %v2231 = vpop.xlane.xlu0 %2230
        %2232 = vadd.xlane.f32.xlu0 %v1977
        %v2233 = vpop.xlane.xlu0 %2232
        %2234 = vadd.xlane.f32.xlu0 %v1979
        %v2235 = vpop.xlane.xlu0 %2234
        %2236 = vadd.xlane.f32.xlu0 %v1981
        %v2237 = vpop.xlane.xlu0 %2236
        %2238 = vadd.xlane.f32.xlu0 %v1983
        %v2239 = vpop.xlane.xlu0 %2238
        %2240 = vadd.xlane.f32.xlu0 %v1985
        %v2241 = vpop.xlane.xlu0 %2240
        %2242 = vadd.xlane.f32.xlu0 %v1987
        %v2243 = vpop.xlane.xlu0 %2242
        %2244 = vadd.xlane.f32.xlu0 %v1989
        %v2245 = vpop.xlane.xlu0 %2244
        %2246 = vadd.xlane.f32.xlu0 %v1991
        %v2247 = vpop.xlane.xlu0 %2246
        %2248 = vadd.xlane.f32.xlu0 %v1993
        %v2249 = vpop.xlane.xlu0 %2248
        %2250 = vadd.xlane.f32.xlu0 %v1995
        %v2251 = vpop.xlane.xlu0 %2250
        %2252 = vadd.xlane.f32.xlu0 %v1997
        %v2253 = vpop.xlane.xlu0 %2252
        %2254 = vadd.xlane.f32.xlu0 %v1999
        %v2255 = vpop.xlane.xlu0 %2254
        %2256 = vadd.xlane.f32.xlu0 %v2001
        %v2257 = vpop.xlane.xlu0 %2256
        %2258 = vadd.xlane.f32.xlu0 %v2003
        %v2259 = vpop.xlane.xlu0 %2258
        %2260 = vadd.xlane.f32.xlu0 %v2005
        %v2261 = vpop.xlane.xlu0 %2260
        %2262 = vadd.xlane.f32.xlu0 %v2007
        %v2263 = vpop.xlane.xlu0 %2262
        %2264 = vadd.xlane.f32.xlu0 %v2009
        %v2265 = vpop.xlane.xlu0 %2264
        %2266 = vadd.xlane.f32.xlu0 %v2011
        %v2267 = vpop.xlane.xlu0 %2266
        %2268 = vadd.xlane.f32.xlu0 %v2013
        %v2269 = vpop.xlane.xlu0 %2268
        %2270 = vadd.xlane.f32.xlu0 %v2015
        %v2271 = vpop.xlane.xlu0 %2270
        %2272 = vadd.xlane.f32.xlu0 %v2017
        %v2273 = vpop.xlane.xlu0 %2272
        %2274 = vadd.xlane.f32.xlu0 %v2019
        %v2275 = vpop.xlane.xlu0 %2274
        %2276 = vadd.xlane.f32.xlu0 %v2021
        %v2277 = vpop.xlane.xlu0 %2276
        %2278 = vadd.xlane.f32.xlu0 %v2023
        %v2279 = vpop.xlane.xlu0 %2278
        %2280 = vadd.xlane.f32.xlu0 %v2025
        %v2281 = vpop.xlane.xlu0 %2280
        %2282 = vadd.xlane.f32.xlu0 %v2027
        %v2283 = vpop.xlane.xlu0 %2282
        %2284 = vadd.xlane.f32.xlu0 %v2029
        %v2285 = vpop.xlane.xlu0 %2284
        %2286 = vadd.xlane.f32.xlu0 %v2031
        %v2287 = vpop.xlane.xlu0 %2286
        %2288 = vadd.xlane.f32.xlu0 %v2033
        %v2289 = vpop.xlane.xlu0 %2288
        %2290 = vadd.xlane.f32.xlu0 %v2035
        %v2291 = vpop.xlane.xlu0 %2290
        %2292 = vadd.xlane.f32.xlu0 %v2037
        %v2293 = vpop.xlane.xlu0 %2292
        %2294 = vadd.xlane.f32.xlu0 %v2039
        %v2295 = vpop.xlane.xlu0 %2294
        %2296 = vadd.xlane.f32.xlu0 %v2041
        %v2297 = vpop.xlane.xlu0 %2296
        %2298 = vadd.xlane.f32.xlu0 %v2043
        %v2299 = vpop.xlane.xlu0 %2298
        %2300 = vadd.xlane.f32.xlu0 %v2045
        %v2301 = vpop.xlane.xlu0 %2300
        %2302 = vadd.xlane.f32.xlu0 %v2047
        %v2303 = vpop.xlane.xlu0 %2302
        %2304 = vadd.xlane.f32.xlu0 %v2049
        %v2305 = vpop.xlane.xlu0 %2304
        %2306 = vadd.xlane.f32.xlu0 %v2051
        %v2307 = vpop.xlane.xlu0 %2306
        %2308 = vadd.xlane.f32.xlu0 %v2053
        %v2309 = vpop.xlane.xlu0 %2308
        %2310 = vadd.xlane.f32.xlu0 %v2055
        %v2311 = vpop.xlane.xlu0 %2310
        %2312 = vadd.xlane.f32.xlu0 %v2057
        %v2313 = vpop.xlane.xlu0 %2312
        %2314 = vadd.xlane.f32.xlu0 %v2059
        %v2315 = vpop.xlane.xlu0 %2314
        %2316 = vadd.xlane.f32.xlu0 %v2061
        %v2317 = vpop.xlane.xlu0 %2316
        %2318 = vadd.xlane.f32.xlu0 %v2063
        %v2319 = vpop.xlane.xlu0 %2318
        %2320 = vadd.xlane.f32.xlu0 %v2065
        %v2321 = vpop.xlane.xlu0 %2320
        %2322 = vadd.xlane.f32.xlu0 %v2067
        %v2323 = vpop.xlane.xlu0 %2322
        %2324 = vadd.xlane.f32.xlu0 %v2069
        %v2325 = vpop.xlane.xlu0 %2324
        %v2326 = vadd.f32 %v2134, %v2199
        %v2327 = vadd.f32 %v2135, %v2201
        %v2328 = vadd.f32 %v2136, %v2203
        %v2329 = vadd.f32 %v2137, %v2205
        %v2330 = vadd.f32 %v2138, %v2207
        %v2331 = vadd.f32 %v2139, %v2209
        %v2332 = vadd.f32 %v2140, %v2211
        %v2333 = vadd.f32 %v2141, %v2213
        %v2334 = vadd.f32 %v2142, %v2215
        %v2335 = vadd.f32 %v2143, %v2217
        %v2336 = vadd.f32 %v2144, %v2219
        %v2337 = vadd.f32 %v2145, %v2221
        %v2338 = vadd.f32 %v2146, %v2223
        %v2339 = vadd.f32 %v2147, %v2225
        %v2340 = vadd.f32 %v2148, %v2227
        %v2341 = vadd.f32 %v2149, %v2229
        %v2342 = vadd.f32 %v2150, %v2231
        %v2343 = vadd.f32 %v2151, %v2233
        %v2344 = vadd.f32 %v2152, %v2235
        %v2345 = vadd.f32 %v2153, %v2237
        %v2346 = vadd.f32 %v2154, %v2239
        %v2347 = vadd.f32 %v2155, %v2241
        %v2348 = vadd.f32 %v2156, %v2243
        %v2349 = vadd.f32 %v2157, %v2245
        %v2350 = vadd.f32 %v2158, %v2247
        %v2351 = vadd.f32 %v2159, %v2249
        %v2352 = vadd.f32 %v2160, %v2251
        %v2353 = vadd.f32 %v2161, %v2253
        %v2354 = vadd.f32 %v2162, %v2255
        %v2355 = vadd.f32 %v2163, %v2257
        %v2356 = vadd.f32 %v2164, %v2259
        %v2357 = vadd.f32 %v2165, %v2261
        %v2358 = vadd.f32 %v2166, %v2263
        %v2359 = vadd.f32 %v2167, %v2265
        %v2360 = vadd.f32 %v2168, %v2267
        %v2361 = vadd.f32 %v2169, %v2269
        %v2362 = vadd.f32 %v2170, %v2271
        %v2363 = vadd.f32 %v2171, %v2273
        %v2364 = vadd.f32 %v2172, %v2275
        %v2365 = vadd.f32 %v2173, %v2277
        %v2366 = vadd.f32 %v2174, %v2279
        %v2367 = vadd.f32 %v2175, %v2281
        %v2368 = vadd.f32 %v2176, %v2283
        %v2369 = vadd.f32 %v2177, %v2285
        %v2370 = vadd.f32 %v2178, %v2287
        %v2371 = vadd.f32 %v2179, %v2289
        %v2372 = vadd.f32 %v2180, %v2291
        %v2373 = vadd.f32 %v2181, %v2293
        %v2374 = vadd.f32 %v2182, %v2295
        %v2375 = vadd.f32 %v2183, %v2297
        %v2376 = vadd.f32 %v2184, %v2299
        %v2377 = vadd.f32 %v2185, %v2301
        %v2378 = vadd.f32 %v2186, %v2303
        %v2379 = vadd.f32 %v2187, %v2305
        %v2380 = vadd.f32 %v2188, %v2307
        %v2381 = vadd.f32 %v2189, %v2309
        %v2382 = vadd.f32 %v2190, %v2311
        %v2383 = vadd.f32 %v2191, %v2313
        %v2384 = vadd.f32 %v2192, %v2315
        %v2385 = vadd.f32 %v2193, %v2317
        %v2386 = vadd.f32 %v2194, %v2319
        %v2387 = vadd.f32 %v2195, %v2321
        %v2388 = vadd.f32 %v2196, %v2323
        %v2389 = vadd.f32 %v2197, %v2325
        %vm2390 = vcmask 7168
        %2391 = vst.msk [vmem:[#allocation3] sm:$0xff] %vm2390, %v2326
        %2392 = vst.msk [vmem:[#allocation3 + $0x8] sm:$0xff] %vm2390, %v2327
        %2393 = vst.msk [vmem:[#allocation3 + $0x10] sm:$0xff] %vm2390, %v2328
        %2394 = vst.msk [vmem:[#allocation3 + $0x18] sm:$0xff] %vm2390, %v2329
        %2395 = vst.msk [vmem:[#allocation3 + $0x20] sm:$0xff] %vm2390, %v2330
        %2396 = vst.msk [vmem:[#allocation3 + $0x28] sm:$0xff] %vm2390, %v2331
        %2397 = vst.msk [vmem:[#allocation3 + $0x30] sm:$0xff] %vm2390, %v2332
        %2398 = vst.msk [vmem:[#allocation3 + $0x38] sm:$0xff] %vm2390, %v2333
        %2399 = vst.msk [vmem:[#allocation3 + $0x40] sm:$0xff] %vm2390, %v2334
        %2400 = vst.msk [vmem:[#allocation3 + $0x48] sm:$0xff] %vm2390, %v2335
        %2401 = vst.msk [vmem:[#allocation3 + $0x50] sm:$0xff] %vm2390, %v2336
        %2402 = vst.msk [vmem:[#allocation3 + $0x58] sm:$0xff] %vm2390, %v2337
        %2403 = vst.msk [vmem:[#allocation3 + $0x60] sm:$0xff] %vm2390, %v2338
        %2404 = vst.msk [vmem:[#allocation3 + $0x68] sm:$0xff] %vm2390, %v2339
        %2405 = vst.msk [vmem:[#allocation3 + $0x70] sm:$0xff] %vm2390, %v2340
        %2406 = vst.msk [vmem:[#allocation3 + $0x78] sm:$0xff] %vm2390, %v2341
        %2407 = vst.msk [vmem:[#allocation3 + $0x80] sm:$0xff] %vm2390, %v2342
        %2408 = vst.msk [vmem:[#allocation3 + $0x88] sm:$0xff] %vm2390, %v2343
        %2409 = vst.msk [vmem:[#allocation3 + $0x90] sm:$0xff] %vm2390, %v2344
        %2410 = vst.msk [vmem:[#allocation3 + $0x98] sm:$0xff] %vm2390, %v2345
        %2411 = vst.msk [vmem:[#allocation3 + $0xa0] sm:$0xff] %vm2390, %v2346
        %2412 = vst.msk [vmem:[#allocation3 + $0xa8] sm:$0xff] %vm2390, %v2347
        %2413 = vst.msk [vmem:[#allocation3 + $0xb0] sm:$0xff] %vm2390, %v2348
        %2414 = vst.msk [vmem:[#allocation3 + $0xb8] sm:$0xff] %vm2390, %v2349
        %2415 = vst.msk [vmem:[#allocation3 + $0xc0] sm:$0xff] %vm2390, %v2350
        %2416 = vst.msk [vmem:[#allocation3 + $0xc8] sm:$0xff] %vm2390, %v2351
        %2417 = vst.msk [vmem:[#allocation3 + $0xd0] sm:$0xff] %vm2390, %v2352
        %2418 = vst.msk [vmem:[#allocation3 + $0xd8] sm:$0xff] %vm2390, %v2353
        %2419 = vst.msk [vmem:[#allocation3 + $0xe0] sm:$0xff] %vm2390, %v2354
        %2420 = vst.msk [vmem:[#allocation3 + $0xe8] sm:$0xff] %vm2390, %v2355
        %2421 = vst.msk [vmem:[#allocation3 + $0xf0] sm:$0xff] %vm2390, %v2356
        %2422 = vst.msk [vmem:[#allocation3 + $0xf8] sm:$0xff] %vm2390, %v2357
        %2423 = vst.msk [vmem:[#allocation3 + $0x100] sm:$0xff] %vm2390, %v2358
        %2424 = vst.msk [vmem:[#allocation3 + $0x108] sm:$0xff] %vm2390, %v2359
        %2425 = vst.msk [vmem:[#allocation3 + $0x110] sm:$0xff] %vm2390, %v2360
        %2426 = vst.msk [vmem:[#allocation3 + $0x118] sm:$0xff] %vm2390, %v2361
        %2427 = vst.msk [vmem:[#allocation3 + $0x120] sm:$0xff] %vm2390, %v2362
        %2428 = vst.msk [vmem:[#allocation3 + $0x128] sm:$0xff] %vm2390, %v2363
        %2429 = vst.msk [vmem:[#allocation3 + $0x130] sm:$0xff] %vm2390, %v2364
        %2430 = vst.msk [vmem:[#allocation3 + $0x138] sm:$0xff] %vm2390, %v2365
        %2431 = vst.msk [vmem:[#allocation3 + $0x140] sm:$0xff] %vm2390, %v2366
        %2432 = vst.msk [vmem:[#allocation3 + $0x148] sm:$0xff] %vm2390, %v2367
        %2433 = vst.msk [vmem:[#allocation3 + $0x150] sm:$0xff] %vm2390, %v2368
        %2434 = vst.msk [vmem:[#allocation3 + $0x158] sm:$0xff] %vm2390, %v2369
        %2435 = vst.msk [vmem:[#allocation3 + $0x160] sm:$0xff] %vm2390, %v2370
        %2436 = vst.msk [vmem:[#allocation3 + $0x168] sm:$0xff] %vm2390, %v2371
        %2437 = vst.msk [vmem:[#allocation3 + $0x170] sm:$0xff] %vm2390, %v2372
        %2438 = vst.msk [vmem:[#allocation3 + $0x178] sm:$0xff] %vm2390, %v2373
        %2439 = vst.msk [vmem:[#allocation3 + $0x180] sm:$0xff] %vm2390, %v2374
        %2440 = vst.msk [vmem:[#allocation3 + $0x188] sm:$0xff] %vm2390, %v2375
        %2441 = vst.msk [vmem:[#allocation3 + $0x190] sm:$0xff] %vm2390, %v2376
        %2442 = vst.msk [vmem:[#allocation3 + $0x198] sm:$0xff] %vm2390, %v2377
        %2443 = vst.msk [vmem:[#allocation3 + $0x1a0] sm:$0xff] %vm2390, %v2378
        %2444 = vst.msk [vmem:[#allocation3 + $0x1a8] sm:$0xff] %vm2390, %v2379
        %2445 = vst.msk [vmem:[#allocation3 + $0x1b0] sm:$0xff] %vm2390, %v2380
        %2446 = vst.msk [vmem:[#allocation3 + $0x1b8] sm:$0xff] %vm2390, %v2381
        %2447 = vst.msk [vmem:[#allocation3 + $0x1c0] sm:$0xff] %vm2390, %v2382
        %2448 = vst.msk [vmem:[#allocation3 + $0x1c8] sm:$0xff] %vm2390, %v2383
        %2449 = vst.msk [vmem:[#allocation3 + $0x1d0] sm:$0xff] %vm2390, %v2384
        %2450 = vst.msk [vmem:[#allocation3 + $0x1d8] sm:$0xff] %vm2390, %v2385
        %2451 = vst.msk [vmem:[#allocation3 + $0x1e0] sm:$0xff] %vm2390, %v2386
        %2452 = vst.msk [vmem:[#allocation3 + $0x1e8] sm:$0xff] %vm2390, %v2387
        %2453 = vst.msk [vmem:[#allocation3 + $0x1f0] sm:$0xff] %vm2390, %v2388
        %2454 = vst.msk [vmem:[#allocation3 + $0x1f8] sm:$0xff] %vm2390, %v2389
        %2455 = vst.msk [vmem:[#allocation2] sm:$0xff] %vm2390, %v1302
        %2456 = vst.msk [vmem:[#allocation2 + $0x8] sm:$0xff] %vm2390, %v1303
        %2457 = vst.msk [vmem:[#allocation2 + $0x10] sm:$0xff] %vm2390, %v1304
        %2458 = vst.msk [vmem:[#allocation2 + $0x18] sm:$0xff] %vm2390, %v1305
        %2459 = vst.msk [vmem:[#allocation2 + $0x20] sm:$0xff] %vm2390, %v1306
        %2460 = vst.msk [vmem:[#allocation2 + $0x28] sm:$0xff] %vm2390, %v1307
        %2461 = vst.msk [vmem:[#allocation2 + $0x30] sm:$0xff] %vm2390, %v1308
        %2462 = vst.msk [vmem:[#allocation2 + $0x38] sm:$0xff] %vm2390, %v1309
        %2463 = vst.msk [vmem:[#allocation2 + $0x40] sm:$0xff] %vm2390, %v1310
        %2464 = vst.msk [vmem:[#allocation2 + $0x48] sm:$0xff] %vm2390, %v1311
        %2465 = vst.msk [vmem:[#allocation2 + $0x50] sm:$0xff] %vm2390, %v1312
        %2466 = vst.msk [vmem:[#allocation2 + $0x58] sm:$0xff] %vm2390, %v1313
        %2467 = vst.msk [vmem:[#allocation2 + $0x60] sm:$0xff] %vm2390, %v1314
        %2468 = vst.msk [vmem:[#allocation2 + $0x68] sm:$0xff] %vm2390, %v1315
        %2469 = vst.msk [vmem:[#allocation2 + $0x70] sm:$0xff] %vm2390, %v1316
        %2470 = vst.msk [vmem:[#allocation2 + $0x78] sm:$0xff] %vm2390, %v1317
        %2471 = vst.msk [vmem:[#allocation2 + $0x80] sm:$0xff] %vm2390, %v1318
        %2472 = vst.msk [vmem:[#allocation2 + $0x88] sm:$0xff] %vm2390, %v1319
        %2473 = vst.msk [vmem:[#allocation2 + $0x90] sm:$0xff] %vm2390, %v1320
        %2474 = vst.msk [vmem:[#allocation2 + $0x98] sm:$0xff] %vm2390, %v1321
        %2475 = vst.msk [vmem:[#allocation2 + $0xa0] sm:$0xff] %vm2390, %v1322
        %2476 = vst.msk [vmem:[#allocation2 + $0xa8] sm:$0xff] %vm2390, %v1323
        %2477 = vst.msk [vmem:[#allocation2 + $0xb0] sm:$0xff] %vm2390, %v1324
        %2478 = vst.msk [vmem:[#allocation2 + $0xb8] sm:$0xff] %vm2390, %v1325
        %2479 = vst.msk [vmem:[#allocation2 + $0xc0] sm:$0xff] %vm2390, %v1326
        %2480 = vst.msk [vmem:[#allocation2 + $0xc8] sm:$0xff] %vm2390, %v1327
        %2481 = vst.msk [vmem:[#allocation2 + $0xd0] sm:$0xff] %vm2390, %v1328
        %2482 = vst.msk [vmem:[#allocation2 + $0xd8] sm:$0xff] %vm2390, %v1329
        %2483 = vst.msk [vmem:[#allocation2 + $0xe0] sm:$0xff] %vm2390, %v1330
        %2484 = vst.msk [vmem:[#allocation2 + $0xe8] sm:$0xff] %vm2390, %v1331
        %2485 = vst.msk [vmem:[#allocation2 + $0xf0] sm:$0xff] %vm2390, %v1332
        %2486 = vst.msk [vmem:[#allocation2 + $0xf8] sm:$0xff] %vm2390, %v1333
        %2487 = vst.msk [vmem:[#allocation2 + $0x100] sm:$0xff] %vm2390, %v1334
        %2488 = vst.msk [vmem:[#allocation2 + $0x108] sm:$0xff] %vm2390, %v1335
        %2489 = vst.msk [vmem:[#allocation2 + $0x110] sm:$0xff] %vm2390, %v1336
        %2490 = vst.msk [vmem:[#allocation2 + $0x118] sm:$0xff] %vm2390, %v1337
        %2491 = vst.msk [vmem:[#allocation2 + $0x120] sm:$0xff] %vm2390, %v1338
        %2492 = vst.msk [vmem:[#allocation2 + $0x128] sm:$0xff] %vm2390, %v1339
        %2493 = vst.msk [vmem:[#allocation2 + $0x130] sm:$0xff] %vm2390, %v1340
        %2494 = vst.msk [vmem:[#allocation2 + $0x138] sm:$0xff] %vm2390, %v1341
        %2495 = vst.msk [vmem:[#allocation2 + $0x140] sm:$0xff] %vm2390, %v1342
        %2496 = vst.msk [vmem:[#allocation2 + $0x148] sm:$0xff] %vm2390, %v1343
        %2497 = vst.msk [vmem:[#allocation2 + $0x150] sm:$0xff] %vm2390, %v1344
        %2498 = vst.msk [vmem:[#allocation2 + $0x158] sm:$0xff] %vm2390, %v1345
        %2499 = vst.msk [vmem:[#allocation2 + $0x160] sm:$0xff] %vm2390, %v1346
        %2500 = vst.msk [vmem:[#allocation2 + $0x168] sm:$0xff] %vm2390, %v1347
        %2501 = vst.msk [vmem:[#allocation2 + $0x170] sm:$0xff] %vm2390, %v1348
        %2502 = vst.msk [vmem:[#allocation2 + $0x178] sm:$0xff] %vm2390, %v1349
        %2503 = vst.msk [vmem:[#allocation2 + $0x180] sm:$0xff] %vm2390, %v1350
        %2504 = vst.msk [vmem:[#allocation2 + $0x188] sm:$0xff] %vm2390, %v1351
        %2505 = vst.msk [vmem:[#allocation2 + $0x190] sm:$0xff] %vm2390, %v1352
        %2506 = vst.msk [vmem:[#allocation2 + $0x198] sm:$0xff] %vm2390, %v1353
        %2507 = vst.msk [vmem:[#allocation2 + $0x1a0] sm:$0xff] %vm2390, %v1354
        %2508 = vst.msk [vmem:[#allocation2 + $0x1a8] sm:$0xff] %vm2390, %v1355
        %2509 = vst.msk [vmem:[#allocation2 + $0x1b0] sm:$0xff] %vm2390, %v1356
        %2510 = vst.msk [vmem:[#allocation2 + $0x1b8] sm:$0xff] %vm2390, %v1357
        %2511 = vst.msk [vmem:[#allocation2 + $0x1c0] sm:$0xff] %vm2390, %v1358
        %2512 = vst.msk [vmem:[#allocation2 + $0x1c8] sm:$0xff] %vm2390, %v1359
        %2513 = vst.msk [vmem:[#allocation2 + $0x1d0] sm:$0xff] %vm2390, %v1360
        %2514 = vst.msk [vmem:[#allocation2 + $0x1d8] sm:$0xff] %vm2390, %v1361
        %2515 = vst.msk [vmem:[#allocation2 + $0x1e0] sm:$0xff] %vm2390, %v1362
        %2516 = vst.msk [vmem:[#allocation2 + $0x1e8] sm:$0xff] %vm2390, %v1363
        %2517 = vst.msk [vmem:[#allocation2 + $0x1f0] sm:$0xff] %vm2390, %v1364
        %2518 = vst.msk [vmem:[#allocation2 + $0x1f8] sm:$0xff] %vm2390, %v1365
        %2519 = vmatpush.xpose.msra.mxu0 0.0
        %2520 = vmatpush.xpose.msra.mxu0 0.0
        %2521 = vmatpush.xpose.msra.mxu0 0.0
        %2522 = vmatpush.xpose.msra.mxu0 0.0
        %2523 = vmatpush.xpose.msra.mxu0 0.0
        %2524 = vmatpush.xpose.msra.mxu0 0.0
        %2525 = vmatpush.xpose.msra.mxu0 0.0
        %2526 = vmatpush.xpose.msra.mxu0 0.0
        %2527 = vmatpush.xpose.msra.mxu0 0.0
        %2528 = vmatpush.xpose.msra.mxu0 0.0
        %2529 = vmatpush.xpose.msra.mxu0 0.0
        %2530 = vmatpush.xpose.msra.mxu0 0.0
        %2531 = vmatpush.xpose.msra.mxu0 0.0
        %2532 = vmatpush.xpose.msra.mxu0 0.0
        %2533 = vmatpush.xpose.msra.mxu0 0.0
        %2534 = vmatpush.xpose.msra.mxu0 %v512
        %2535 = vmatmul.f32.gmra.mxu0 %v1943
        %v2536 = vpop.f32.mrf.mxu0
        %v2537 = vadd.f32 0.0, %v2536
        %2538 = vmatmul.f32.gmra.mxu0 %v1945
        %v2539 = vpop.f32.mrf.mxu0
        %v2540 = vadd.f32 0.0, %v2539
        %2541 = vmatmul.f32.gmra.mxu0 %v1947
        %v2542 = vpop.f32.mrf.mxu0
        %v2543 = vadd.f32 0.0, %v2542
        %2544 = vmatmul.f32.gmra.mxu0 %v1949
        %v2545 = vpop.f32.mrf.mxu0
        %v2546 = vadd.f32 0.0, %v2545
        %2547 = vmatmul.f32.gmra.mxu0 %v1951
        %v2548 = vpop.f32.mrf.mxu0
        %v2549 = vadd.f32 0.0, %v2548
        %2550 = vmatmul.f32.gmra.mxu0 %v1953
        %v2551 = vpop.f32.mrf.mxu0
        %v2552 = vadd.f32 0.0, %v2551
        %2553 = vmatmul.f32.gmra.mxu0 %v1955
        %v2554 = vpop.f32.mrf.mxu0
        %v2555 = vadd.f32 0.0, %v2554
        %2556 = vmatmul.f32.gmra.mxu0 %v1957
        %v2557 = vpop.f32.mrf.mxu0
        %v2558 = vadd.f32 0.0, %v2557
        %2559 = vmatmul.f32.gmra.mxu0 %v1959
        %v2560 = vpop.f32.mrf.mxu0
        %v2561 = vadd.f32 0.0, %v2560
        %2562 = vmatmul.f32.gmra.mxu0 %v1961
        %v2563 = vpop.f32.mrf.mxu0
        %v2564 = vadd.f32 0.0, %v2563
        %2565 = vmatmul.f32.gmra.mxu0 %v1963
        %v2566 = vpop.f32.mrf.mxu0
        %v2567 = vadd.f32 0.0, %v2566
        %2568 = vmatmul.f32.gmra.mxu0 %v1965
        %v2569 = vpop.f32.mrf.mxu0
        %v2570 = vadd.f32 0.0, %v2569
        %2571 = vmatmul.f32.gmra.mxu0 %v1967
        %v2572 = vpop.f32.mrf.mxu0
        %v2573 = vadd.f32 0.0, %v2572
        %2574 = vmatmul.f32.gmra.mxu0 %v1969
        %v2575 = vpop.f32.mrf.mxu0
        %v2576 = vadd.f32 0.0, %v2575
        %2577 = vmatmul.f32.gmra.mxu0 %v1971
        %v2578 = vpop.f32.mrf.mxu0
        %v2579 = vadd.f32 0.0, %v2578
        %2580 = vmatmul.f32.gmra.mxu0 %v1973
        %v2581 = vpop.f32.mrf.mxu0
        %v2582 = vadd.f32 0.0, %v2581
        %2583 = vdwg.mxu0
        %2584 = vmatpush.xpose.msra.mxu0 0.0
        %2585 = vmatpush.xpose.msra.mxu0 0.0
        %2586 = vmatpush.xpose.msra.mxu0 0.0
        %2587 = vmatpush.xpose.msra.mxu0 0.0
        %2588 = vmatpush.xpose.msra.mxu0 0.0
        %2589 = vmatpush.xpose.msra.mxu0 0.0
        %2590 = vmatpush.xpose.msra.mxu0 0.0
        %2591 = vmatpush.xpose.msra.mxu0 0.0
        %2592 = vmatpush.xpose.msra.mxu0 0.0
        %2593 = vmatpush.xpose.msra.mxu0 0.0
        %2594 = vmatpush.xpose.msra.mxu0 0.0
        %2595 = vmatpush.xpose.msra.mxu0 0.0
        %2596 = vmatpush.xpose.msra.mxu0 0.0
        %2597 = vmatpush.xpose.msra.mxu0 0.0
        %2598 = vmatpush.xpose.msra.mxu0 0.0
        %2599 = vmatpush.xpose.msra.mxu0 %v513
        %2600 = vmatmul.f32.gmra.mxu0 %v1975
        %v2601 = vpop.f32.mrf.mxu0
        %v2602 = vadd.f32 0.0, %v2601
        %2603 = vmatmul.f32.gmra.mxu0 %v1977
        %v2604 = vpop.f32.mrf.mxu0
        %v2605 = vadd.f32 0.0, %v2604
        %2606 = vmatmul.f32.gmra.mxu0 %v1979
        %v2607 = vpop.f32.mrf.mxu0
        %v2608 = vadd.f32 0.0, %v2607
        %2609 = vmatmul.f32.gmra.mxu0 %v1981
        %v2610 = vpop.f32.mrf.mxu0
        %v2611 = vadd.f32 0.0, %v2610
        %2612 = vmatmul.f32.gmra.mxu0 %v1983
        %v2613 = vpop.f32.mrf.mxu0
        %v2614 = vadd.f32 0.0, %v2613
        %2615 = vmatmul.f32.gmra.mxu0 %v1985
        %v2616 = vpop.f32.mrf.mxu0
        %v2617 = vadd.f32 0.0, %v2616
        %2618 = vmatmul.f32.gmra.mxu0 %v1987
        %v2619 = vpop.f32.mrf.mxu0
        %v2620 = vadd.f32 0.0, %v2619
        %2621 = vmatmul.f32.gmra.mxu0 %v1989
        %v2622 = vpop.f32.mrf.mxu0
        %v2623 = vadd.f32 0.0, %v2622
        %2624 = vmatmul.f32.gmra.mxu0 %v1991
        %v2625 = vpop.f32.mrf.mxu0
        %v2626 = vadd.f32 0.0, %v2625
        %2627 = vmatmul.f32.gmra.mxu0 %v1993
        %v2628 = vpop.f32.mrf.mxu0
        %v2629 = vadd.f32 0.0, %v2628
        %2630 = vmatmul.f32.gmra.mxu0 %v1995
        %v2631 = vpop.f32.mrf.mxu0
        %v2632 = vadd.f32 0.0, %v2631
        %2633 = vmatmul.f32.gmra.mxu0 %v1997
        %v2634 = vpop.f32.mrf.mxu0
        %v2635 = vadd.f32 0.0, %v2634
        %2636 = vmatmul.f32.gmra.mxu0 %v1999
        %v2637 = vpop.f32.mrf.mxu0
        %v2638 = vadd.f32 0.0, %v2637
        %2639 = vmatmul.f32.gmra.mxu0 %v2001
        %v2640 = vpop.f32.mrf.mxu0
        %v2641 = vadd.f32 0.0, %v2640
        %2642 = vmatmul.f32.gmra.mxu0 %v2003
        %v2643 = vpop.f32.mrf.mxu0
        %v2644 = vadd.f32 0.0, %v2643
        %2645 = vmatmul.f32.gmra.mxu0 %v2005
        %v2646 = vpop.f32.mrf.mxu0
        %v2647 = vadd.f32 0.0, %v2646
        %2648 = vdwg.mxu0
        %2649 = vmatpush.xpose.msra.mxu0 0.0
        %2650 = vmatpush.xpose.msra.mxu0 0.0
        %2651 = vmatpush.xpose.msra.mxu0 0.0
        %2652 = vmatpush.xpose.msra.mxu0 0.0
        %2653 = vmatpush.xpose.msra.mxu0 0.0
        %2654 = vmatpush.xpose.msra.mxu0 0.0
        %2655 = vmatpush.xpose.msra.mxu0 0.0
        %2656 = vmatpush.xpose.msra.mxu0 0.0
        %2657 = vmatpush.xpose.msra.mxu0 0.0
        %2658 = vmatpush.xpose.msra.mxu0 0.0
        %2659 = vmatpush.xpose.msra.mxu0 0.0
        %2660 = vmatpush.xpose.msra.mxu0 0.0
        %2661 = vmatpush.xpose.msra.mxu0 0.0
        %2662 = vmatpush.xpose.msra.mxu0 0.0
        %2663 = vmatpush.xpose.msra.mxu0 0.0
        %2664 = vmatpush.xpose.msra.mxu0 %v514
        %2665 = vmatmul.f32.gmra.mxu0 %v2007
        %v2666 = vpop.f32.mrf.mxu0
        %v2667 = vadd.f32 0.0, %v2666
        %2668 = vmatmul.f32.gmra.mxu0 %v2009
        %v2669 = vpop.f32.mrf.mxu0
        %v2670 = vadd.f32 0.0, %v2669
        %2671 = vmatmul.f32.gmra.mxu0 %v2011
        %v2672 = vpop.f32.mrf.mxu0
        %v2673 = vadd.f32 0.0, %v2672
        %2674 = vmatmul.f32.gmra.mxu0 %v2013
        %v2675 = vpop.f32.mrf.mxu0
        %v2676 = vadd.f32 0.0, %v2675
        %2677 = vmatmul.f32.gmra.mxu0 %v2015
        %v2678 = vpop.f32.mrf.mxu0
        %v2679 = vadd.f32 0.0, %v2678
        %2680 = vmatmul.f32.gmra.mxu0 %v2017
        %v2681 = vpop.f32.mrf.mxu0
        %v2682 = vadd.f32 0.0, %v2681
        %2683 = vmatmul.f32.gmra.mxu0 %v2019
        %v2684 = vpop.f32.mrf.mxu0
        %v2685 = vadd.f32 0.0, %v2684
        %2686 = vmatmul.f32.gmra.mxu0 %v2021
        %v2687 = vpop.f32.mrf.mxu0
        %v2688 = vadd.f32 0.0, %v2687
        %2689 = vmatmul.f32.gmra.mxu0 %v2023
        %v2690 = vpop.f32.mrf.mxu0
        %v2691 = vadd.f32 0.0, %v2690
        %2692 = vmatmul.f32.gmra.mxu0 %v2025
        %v2693 = vpop.f32.mrf.mxu0
        %v2694 = vadd.f32 0.0, %v2693
        %2695 = vmatmul.f32.gmra.mxu0 %v2027
        %v2696 = vpop.f32.mrf.mxu0
        %v2697 = vadd.f32 0.0, %v2696
        %2698 = vmatmul.f32.gmra.mxu0 %v2029
        %v2699 = vpop.f32.mrf.mxu0
        %v2700 = vadd.f32 0.0, %v2699
        %2701 = vmatmul.f32.gmra.mxu0 %v2031
        %v2702 = vpop.f32.mrf.mxu0
        %v2703 = vadd.f32 0.0, %v2702
        %2704 = vmatmul.f32.gmra.mxu0 %v2033
        %v2705 = vpop.f32.mrf.mxu0
        %v2706 = vadd.f32 0.0, %v2705
        %2707 = vmatmul.f32.gmra.mxu0 %v2035
        %v2708 = vpop.f32.mrf.mxu0
        %v2709 = vadd.f32 0.0, %v2708
        %2710 = vmatmul.f32.gmra.mxu0 %v2037
        %v2711 = vpop.f32.mrf.mxu0
        %v2712 = vadd.f32 0.0, %v2711
        %2713 = vdwg.mxu0
        %2714 = vmatpush.xpose.msra.mxu0 0.0
        %2715 = vmatpush.xpose.msra.mxu0 0.0
        %2716 = vmatpush.xpose.msra.mxu0 0.0
        %2717 = vmatpush.xpose.msra.mxu0 0.0
        %2718 = vmatpush.xpose.msra.mxu0 0.0
        %2719 = vmatpush.xpose.msra.mxu0 0.0
        %2720 = vmatpush.xpose.msra.mxu0 0.0
        %2721 = vmatpush.xpose.msra.mxu0 0.0
        %2722 = vmatpush.xpose.msra.mxu0 0.0
        %2723 = vmatpush.xpose.msra.mxu0 0.0
        %2724 = vmatpush.xpose.msra.mxu0 0.0
        %2725 = vmatpush.xpose.msra.mxu0 0.0
        %2726 = vmatpush.xpose.msra.mxu0 0.0
        %2727 = vmatpush.xpose.msra.mxu0 0.0
        %2728 = vmatpush.xpose.msra.mxu0 0.0
        %2729 = vmatpush.xpose.msra.mxu0 %v515
        %2730 = vmatmul.f32.gmra.mxu0 %v2039
        %v2731 = vpop.f32.mrf.mxu0
        %v2732 = vadd.f32 0.0, %v2731
        %2733 = vmatmul.f32.gmra.mxu0 %v2041
        %v2734 = vpop.f32.mrf.mxu0
        %v2735 = vadd.f32 0.0, %v2734
        %2736 = vmatmul.f32.gmra.mxu0 %v2043
        %v2737 = vpop.f32.mrf.mxu0
        %v2738 = vadd.f32 0.0, %v2737
        %2739 = vmatmul.f32.gmra.mxu0 %v2045
        %v2740 = vpop.f32.mrf.mxu0
        %v2741 = vadd.f32 0.0, %v2740
        %2742 = vmatmul.f32.gmra.mxu0 %v2047
        %v2743 = vpop.f32.mrf.mxu0
        %v2744 = vadd.f32 0.0, %v2743
        %2745 = vmatmul.f32.gmra.mxu0 %v2049
        %v2746 = vpop.f32.mrf.mxu0
        %v2747 = vadd.f32 0.0, %v2746
        %2748 = vmatmul.f32.gmra.mxu0 %v2051
        %v2749 = vpop.f32.mrf.mxu0
        %v2750 = vadd.f32 0.0, %v2749
        %2751 = vmatmul.f32.gmra.mxu0 %v2053
        %v2752 = vpop.f32.mrf.mxu0
        %v2753 = vadd.f32 0.0, %v2752
        %2754 = vmatmul.f32.gmra.mxu0 %v2055
        %v2755 = vpop.f32.mrf.mxu0
        %v2756 = vadd.f32 0.0, %v2755
        %2757 = vmatmul.f32.gmra.mxu0 %v2057
        %v2758 = vpop.f32.mrf.mxu0
        %v2759 = vadd.f32 0.0, %v2758
        %2760 = vmatmul.f32.gmra.mxu0 %v2059
        %v2761 = vpop.f32.mrf.mxu0
        %v2762 = vadd.f32 0.0, %v2761
        %2763 = vmatmul.f32.gmra.mxu0 %v2061
        %v2764 = vpop.f32.mrf.mxu0
        %v2765 = vadd.f32 0.0, %v2764
        %2766 = vmatmul.f32.gmra.mxu0 %v2063
        %v2767 = vpop.f32.mrf.mxu0
        %v2768 = vadd.f32 0.0, %v2767
        %2769 = vmatmul.f32.gmra.mxu0 %v2065
        %v2770 = vpop.f32.mrf.mxu0
        %v2771 = vadd.f32 0.0, %v2770
        %2772 = vmatmul.f32.gmra.mxu0 %v2067
        %v2773 = vpop.f32.mrf.mxu0
        %v2774 = vadd.f32 0.0, %v2773
        %2775 = vmatmul.f32.gmra.mxu0 %v2069
        %v2776 = vpop.f32.mrf.mxu0
        %v2777 = vadd.f32 0.0, %v2776
        %2778 = vdwg.mxu0
        %v2779 = vld [vmem:[#allocation4] sm:$0xff]
        %v2780 = vld [vmem:[#allocation4 + $0x8] sm:$0xff]
        %v2781 = vld [vmem:[#allocation4 + $0x10] sm:$0xff]
        %v2782 = vld [vmem:[#allocation4 + $0x18] sm:$0xff]
        %v2783 = vld [vmem:[#allocation4 + $0x20] sm:$0xff]
        %v2784 = vld [vmem:[#allocation4 + $0x28] sm:$0xff]
        %v2785 = vld [vmem:[#allocation4 + $0x30] sm:$0xff]
        %v2786 = vld [vmem:[#allocation4 + $0x38] sm:$0xff]
        %v2787 = vld [vmem:[#allocation4 + $0x40] sm:$0xff]
        %v2788 = vld [vmem:[#allocation4 + $0x48] sm:$0xff]
        %v2789 = vld [vmem:[#allocation4 + $0x50] sm:$0xff]
        %v2790 = vld [vmem:[#allocation4 + $0x58] sm:$0xff]
        %v2791 = vld [vmem:[#allocation4 + $0x60] sm:$0xff]
        %v2792 = vld [vmem:[#allocation4 + $0x68] sm:$0xff]
        %v2793 = vld [vmem:[#allocation4 + $0x70] sm:$0xff]
        %v2794 = vld [vmem:[#allocation4 + $0x78] sm:$0xff]
        %v2795 = vld [vmem:[#allocation4 + $0x80] sm:$0xff]
        %v2796 = vld [vmem:[#allocation4 + $0x88] sm:$0xff]
        %v2797 = vld [vmem:[#allocation4 + $0x90] sm:$0xff]
        %v2798 = vld [vmem:[#allocation4 + $0x98] sm:$0xff]
        %v2799 = vld [vmem:[#allocation4 + $0xa0] sm:$0xff]
        %v2800 = vld [vmem:[#allocation4 + $0xa8] sm:$0xff]
        %v2801 = vld [vmem:[#allocation4 + $0xb0] sm:$0xff]
        %v2802 = vld [vmem:[#allocation4 + $0xb8] sm:$0xff]
        %v2803 = vld [vmem:[#allocation4 + $0xc0] sm:$0xff]
        %v2804 = vld [vmem:[#allocation4 + $0xc8] sm:$0xff]
        %v2805 = vld [vmem:[#allocation4 + $0xd0] sm:$0xff]
        %v2806 = vld [vmem:[#allocation4 + $0xd8] sm:$0xff]
        %v2807 = vld [vmem:[#allocation4 + $0xe0] sm:$0xff]
        %v2808 = vld [vmem:[#allocation4 + $0xe8] sm:$0xff]
        %v2809 = vld [vmem:[#allocation4 + $0xf0] sm:$0xff]
        %v2810 = vld [vmem:[#allocation4 + $0xf8] sm:$0xff]
        %v2811 = vld [vmem:[#allocation4 + $0x100] sm:$0xff]
        %v2812 = vld [vmem:[#allocation4 + $0x108] sm:$0xff]
        %v2813 = vld [vmem:[#allocation4 + $0x110] sm:$0xff]
        %v2814 = vld [vmem:[#allocation4 + $0x118] sm:$0xff]
        %v2815 = vld [vmem:[#allocation4 + $0x120] sm:$0xff]
        %v2816 = vld [vmem:[#allocation4 + $0x128] sm:$0xff]
        %v2817 = vld [vmem:[#allocation4 + $0x130] sm:$0xff]
        %v2818 = vld [vmem:[#allocation4 + $0x138] sm:$0xff]
        %v2819 = vld [vmem:[#allocation4 + $0x140] sm:$0xff]
        %v2820 = vld [vmem:[#allocation4 + $0x148] sm:$0xff]
        %v2821 = vld [vmem:[#allocation4 + $0x150] sm:$0xff]
        %v2822 = vld [vmem:[#allocation4 + $0x158] sm:$0xff]
        %v2823 = vld [vmem:[#allocation4 + $0x160] sm:$0xff]
        %v2824 = vld [vmem:[#allocation4 + $0x168] sm:$0xff]
        %v2825 = vld [vmem:[#allocation4 + $0x170] sm:$0xff]
        %v2826 = vld [vmem:[#allocation4 + $0x178] sm:$0xff]
        %v2827 = vld [vmem:[#allocation4 + $0x180] sm:$0xff]
        %v2828 = vld [vmem:[#allocation4 + $0x188] sm:$0xff]
        %v2829 = vld [vmem:[#allocation4 + $0x190] sm:$0xff]
        %v2830 = vld [vmem:[#allocation4 + $0x198] sm:$0xff]
        %v2831 = vld [vmem:[#allocation4 + $0x1a0] sm:$0xff]
        %v2832 = vld [vmem:[#allocation4 + $0x1a8] sm:$0xff]
        %v2833 = vld [vmem:[#allocation4 + $0x1b0] sm:$0xff]
        %v2834 = vld [vmem:[#allocation4 + $0x1b8] sm:$0xff]
        %v2835 = vld [vmem:[#allocation4 + $0x1c0] sm:$0xff]
        %v2836 = vld [vmem:[#allocation4 + $0x1c8] sm:$0xff]
        %v2837 = vld [vmem:[#allocation4 + $0x1d0] sm:$0xff]
        %v2838 = vld [vmem:[#allocation4 + $0x1d8] sm:$0xff]
        %v2839 = vld [vmem:[#allocation4 + $0x1e0] sm:$0xff]
        %v2840 = vld [vmem:[#allocation4 + $0x1e8] sm:$0xff]
        %v2841 = vld [vmem:[#allocation4 + $0x1f0] sm:$0xff]
        %v2842 = vld [vmem:[#allocation4 + $0x1f8] sm:$0xff]
        %2844 = vset.pattern.permute.xlu0 0
        %2845 = vperm.xlu0 %2844, %v1431
        %v2846 = vpop.permute.xlu0 %2845
        %2849 = vset.pattern.permute.xlu0 0
        %2850 = vperm.xlu0 %2849, %v1433
        %v2851 = vpop.permute.xlu0 %2850
        %2854 = vset.pattern.permute.xlu0 0
        %2855 = vperm.xlu0 %2854, %v1435
        %v2856 = vpop.permute.xlu0 %2855
        %2859 = vset.pattern.permute.xlu0 0
        %2860 = vperm.xlu0 %2859, %v1437
        %v2861 = vpop.permute.xlu0 %2860
        %2864 = vset.pattern.permute.xlu0 0
        %2865 = vperm.xlu0 %2864, %v1439
        %v2866 = vpop.permute.xlu0 %2865
        %2869 = vset.pattern.permute.xlu0 0
        %2870 = vperm.xlu0 %2869, %v1441
        %v2871 = vpop.permute.xlu0 %2870
        %2874 = vset.pattern.permute.xlu0 0
        %2875 = vperm.xlu0 %2874, %v1443
        %v2876 = vpop.permute.xlu0 %2875
        %2879 = vset.pattern.permute.xlu0 0
        %2880 = vperm.xlu0 %2879, %v1445
        %v2881 = vpop.permute.xlu0 %2880
        %2884 = vset.pattern.permute.xlu0 0
        %2885 = vperm.xlu0 %2884, %v1447
        %v2886 = vpop.permute.xlu0 %2885
        %2889 = vset.pattern.permute.xlu0 0
        %2890 = vperm.xlu0 %2889, %v1449
        %v2891 = vpop.permute.xlu0 %2890
        %2894 = vset.pattern.permute.xlu0 0
        %2895 = vperm.xlu0 %2894, %v1451
        %v2896 = vpop.permute.xlu0 %2895
        %2899 = vset.pattern.permute.xlu0 0
        %2900 = vperm.xlu0 %2899, %v1453
        %v2901 = vpop.permute.xlu0 %2900
        %2904 = vset.pattern.permute.xlu0 0
        %2905 = vperm.xlu0 %2904, %v1455
        %v2906 = vpop.permute.xlu0 %2905
        %2909 = vset.pattern.permute.xlu0 0
        %2910 = vperm.xlu0 %2909, %v1457
        %v2911 = vpop.permute.xlu0 %2910
        %2914 = vset.pattern.permute.xlu0 0
        %2915 = vperm.xlu0 %2914, %v1459
        %v2916 = vpop.permute.xlu0 %2915
        %2919 = vset.pattern.permute.xlu0 0
        %2920 = vperm.xlu0 %2919, %v1461
        %v2921 = vpop.permute.xlu0 %2920
        %2924 = vset.pattern.permute.xlu0 0
        %2925 = vperm.xlu0 %2924, %v1463
        %v2926 = vpop.permute.xlu0 %2925
        %2929 = vset.pattern.permute.xlu0 0
        %2930 = vperm.xlu0 %2929, %v1465
        %v2931 = vpop.permute.xlu0 %2930
        %2934 = vset.pattern.permute.xlu0 0
        %2935 = vperm.xlu0 %2934, %v1467
        %v2936 = vpop.permute.xlu0 %2935
        %2939 = vset.pattern.permute.xlu0 0
        %2940 = vperm.xlu0 %2939, %v1469
        %v2941 = vpop.permute.xlu0 %2940
        %2944 = vset.pattern.permute.xlu0 0
        %2945 = vperm.xlu0 %2944, %v1471
        %v2946 = vpop.permute.xlu0 %2945
        %2949 = vset.pattern.permute.xlu0 0
        %2950 = vperm.xlu0 %2949, %v1473
        %v2951 = vpop.permute.xlu0 %2950
        %2954 = vset.pattern.permute.xlu0 0
        %2955 = vperm.xlu0 %2954, %v1475
        %v2956 = vpop.permute.xlu0 %2955
        %2959 = vset.pattern.permute.xlu0 0
        %2960 = vperm.xlu0 %2959, %v1477
        %v2961 = vpop.permute.xlu0 %2960
        %2964 = vset.pattern.permute.xlu0 0
        %2965 = vperm.xlu0 %2964, %v1479
        %v2966 = vpop.permute.xlu0 %2965
        %2969 = vset.pattern.permute.xlu0 0
        %2970 = vperm.xlu0 %2969, %v1481
        %v2971 = vpop.permute.xlu0 %2970
        %2974 = vset.pattern.permute.xlu0 0
        %2975 = vperm.xlu0 %2974, %v1483
        %v2976 = vpop.permute.xlu0 %2975
        %2979 = vset.pattern.permute.xlu0 0
        %2980 = vperm.xlu0 %2979, %v1485
        %v2981 = vpop.permute.xlu0 %2980
        %2984 = vset.pattern.permute.xlu0 0
        %2985 = vperm.xlu0 %2984, %v1487
        %v2986 = vpop.permute.xlu0 %2985
        %2989 = vset.pattern.permute.xlu0 0
        %2990 = vperm.xlu0 %2989, %v1489
        %v2991 = vpop.permute.xlu0 %2990
        %2994 = vset.pattern.permute.xlu0 0
        %2995 = vperm.xlu0 %2994, %v1491
        %v2996 = vpop.permute.xlu0 %2995
        %2999 = vset.pattern.permute.xlu0 0
        %3000 = vperm.xlu0 %2999, %v1493
        %v3001 = vpop.permute.xlu0 %3000
        %3004 = vset.pattern.permute.xlu0 0
        %3005 = vperm.xlu0 %3004, %v1495
        %v3006 = vpop.permute.xlu0 %3005
        %3009 = vset.pattern.permute.xlu0 0
        %3010 = vperm.xlu0 %3009, %v1497
        %v3011 = vpop.permute.xlu0 %3010
        %3014 = vset.pattern.permute.xlu0 0
        %3015 = vperm.xlu0 %3014, %v1499
        %v3016 = vpop.permute.xlu0 %3015
        %3019 = vset.pattern.permute.xlu0 0
        %3020 = vperm.xlu0 %3019, %v1501
        %v3021 = vpop.permute.xlu0 %3020
        %3024 = vset.pattern.permute.xlu0 0
        %3025 = vperm.xlu0 %3024, %v1503
        %v3026 = vpop.permute.xlu0 %3025
        %3029 = vset.pattern.permute.xlu0 0
        %3030 = vperm.xlu0 %3029, %v1505
        %v3031 = vpop.permute.xlu0 %3030
        %3034 = vset.pattern.permute.xlu0 0
        %3035 = vperm.xlu0 %3034, %v1507
        %v3036 = vpop.permute.xlu0 %3035
        %3039 = vset.pattern.permute.xlu0 0
        %3040 = vperm.xlu0 %3039, %v1509
        %v3041 = vpop.permute.xlu0 %3040
        %3044 = vset.pattern.permute.xlu0 0
        %3045 = vperm.xlu0 %3044, %v1511
        %v3046 = vpop.permute.xlu0 %3045
        %3049 = vset.pattern.permute.xlu0 0
        %3050 = vperm.xlu0 %3049, %v1513
        %v3051 = vpop.permute.xlu0 %3050
        %3054 = vset.pattern.permute.xlu0 0
        %3055 = vperm.xlu0 %3054, %v1515
        %v3056 = vpop.permute.xlu0 %3055
        %3059 = vset.pattern.permute.xlu0 0
        %3060 = vperm.xlu0 %3059, %v1517
        %v3061 = vpop.permute.xlu0 %3060
        %3064 = vset.pattern.permute.xlu0 0
        %3065 = vperm.xlu0 %3064, %v1519
        %v3066 = vpop.permute.xlu0 %3065
        %3069 = vset.pattern.permute.xlu0 0
        %3070 = vperm.xlu0 %3069, %v1521
        %v3071 = vpop.permute.xlu0 %3070
        %3074 = vset.pattern.permute.xlu0 0
        %3075 = vperm.xlu0 %3074, %v1523
        %v3076 = vpop.permute.xlu0 %3075
        %3079 = vset.pattern.permute.xlu0 0
        %3080 = vperm.xlu0 %3079, %v1525
        %v3081 = vpop.permute.xlu0 %3080
        %3084 = vset.pattern.permute.xlu0 0
        %3085 = vperm.xlu0 %3084, %v1527
        %v3086 = vpop.permute.xlu0 %3085
        %3089 = vset.pattern.permute.xlu0 0
        %3090 = vperm.xlu0 %3089, %v1529
        %v3091 = vpop.permute.xlu0 %3090
        %3094 = vset.pattern.permute.xlu0 0
        %3095 = vperm.xlu0 %3094, %v1531
        %v3096 = vpop.permute.xlu0 %3095
        %3099 = vset.pattern.permute.xlu0 0
        %3100 = vperm.xlu0 %3099, %v1533
        %v3101 = vpop.permute.xlu0 %3100
        %3104 = vset.pattern.permute.xlu0 0
        %3105 = vperm.xlu0 %3104, %v1535
        %v3106 = vpop.permute.xlu0 %3105
        %3109 = vset.pattern.permute.xlu0 0
        %3110 = vperm.xlu0 %3109, %v1537
        %v3111 = vpop.permute.xlu0 %3110
        %3114 = vset.pattern.permute.xlu0 0
        %3115 = vperm.xlu0 %3114, %v1539
        %v3116 = vpop.permute.xlu0 %3115
        %3119 = vset.pattern.permute.xlu0 0
        %3120 = vperm.xlu0 %3119, %v1541
        %v3121 = vpop.permute.xlu0 %3120
        %3124 = vset.pattern.permute.xlu0 0
        %3125 = vperm.xlu0 %3124, %v1543
        %v3126 = vpop.permute.xlu0 %3125
        %3129 = vset.pattern.permute.xlu0 0
        %3130 = vperm.xlu0 %3129, %v1545
        %v3131 = vpop.permute.xlu0 %3130
        %3134 = vset.pattern.permute.xlu0 0
        %3135 = vperm.xlu0 %3134, %v1547
        %v3136 = vpop.permute.xlu0 %3135
        %3139 = vset.pattern.permute.xlu0 0
        %3140 = vperm.xlu0 %3139, %v1549
        %v3141 = vpop.permute.xlu0 %3140
        %3144 = vset.pattern.permute.xlu0 0
        %3145 = vperm.xlu0 %3144, %v1551
        %v3146 = vpop.permute.xlu0 %3145
        %3149 = vset.pattern.permute.xlu0 0
        %3150 = vperm.xlu0 %3149, %v1553
        %v3151 = vpop.permute.xlu0 %3150
        %3154 = vset.pattern.permute.xlu0 0
        %3155 = vperm.xlu0 %3154, %v1555
        %v3156 = vpop.permute.xlu0 %3155
        %3159 = vset.pattern.permute.xlu0 0
        %3160 = vperm.xlu0 %3159, %v1557
        %v3161 = vpop.permute.xlu0 %3160
        %v3163 = vmul.f32 %v2846, %v2779
        %v3164 = vmul.f32 %v2851, %v2780
        %v3165 = vmul.f32 %v2856, %v2781
        %v3166 = vmul.f32 %v2861, %v2782
        %v3167 = vmul.f32 %v2866, %v2783
        %v3168 = vmul.f32 %v2871, %v2784
        %v3169 = vmul.f32 %v2876, %v2785
        %v3170 = vmul.f32 %v2881, %v2786
        %v3171 = vmul.f32 %v2886, %v2787
        %v3172 = vmul.f32 %v2891, %v2788
        %v3173 = vmul.f32 %v2896, %v2789
        %v3174 = vmul.f32 %v2901, %v2790
        %v3175 = vmul.f32 %v2906, %v2791
        %v3176 = vmul.f32 %v2911, %v2792
        %v3177 = vmul.f32 %v2916, %v2793
        %v3178 = vmul.f32 %v2921, %v2794
        %v3179 = vmul.f32 %v2926, %v2795
        %v3180 = vmul.f32 %v2931, %v2796
        %v3181 = vmul.f32 %v2936, %v2797
        %v3182 = vmul.f32 %v2941, %v2798
        %v3183 = vmul.f32 %v2946, %v2799
        %v3184 = vmul.f32 %v2951, %v2800
        %v3185 = vmul.f32 %v2956, %v2801
        %v3186 = vmul.f32 %v2961, %v2802
        %v3187 = vmul.f32 %v2966, %v2803
        %v3188 = vmul.f32 %v2971, %v2804
        %v3189 = vmul.f32 %v2976, %v2805
        %v3190 = vmul.f32 %v2981, %v2806
        %v3191 = vmul.f32 %v2986, %v2807
        %v3192 = vmul.f32 %v2991, %v2808
        %v3193 = vmul.f32 %v2996, %v2809
        %v3194 = vmul.f32 %v3001, %v2810
        %v3195 = vmul.f32 %v3006, %v2811
        %v3196 = vmul.f32 %v3011, %v2812
        %v3197 = vmul.f32 %v3016, %v2813
        %v3198 = vmul.f32 %v3021, %v2814
        %v3199 = vmul.f32 %v3026, %v2815
        %v3200 = vmul.f32 %v3031, %v2816
        %v3201 = vmul.f32 %v3036, %v2817
        %v3202 = vmul.f32 %v3041, %v2818
        %v3203 = vmul.f32 %v3046, %v2819
        %v3204 = vmul.f32 %v3051, %v2820
        %v3205 = vmul.f32 %v3056, %v2821
        %v3206 = vmul.f32 %v3061, %v2822
        %v3207 = vmul.f32 %v3066, %v2823
        %v3208 = vmul.f32 %v3071, %v2824
        %v3209 = vmul.f32 %v3076, %v2825
        %v3210 = vmul.f32 %v3081, %v2826
        %v3211 = vmul.f32 %v3086, %v2827
        %v3212 = vmul.f32 %v3091, %v2828
        %v3213 = vmul.f32 %v3096, %v2829
        %v3214 = vmul.f32 %v3101, %v2830
        %v3215 = vmul.f32 %v3106, %v2831
        %v3216 = vmul.f32 %v3111, %v2832
        %v3217 = vmul.f32 %v3116, %v2833
        %v3218 = vmul.f32 %v3121, %v2834
        %v3219 = vmul.f32 %v3126, %v2835
        %v3220 = vmul.f32 %v3131, %v2836
        %v3221 = vmul.f32 %v3136, %v2837
        %v3222 = vmul.f32 %v3141, %v2838
        %v3223 = vmul.f32 %v3146, %v2839
        %v3224 = vmul.f32 %v3151, %v2840
        %v3225 = vmul.f32 %v3156, %v2841
        %v3226 = vmul.f32 %v3161, %v2842
        %v3227 = vadd.f32 %v3163, %v2537
        %v3228 = vadd.f32 %v3164, %v2540
        %v3229 = vadd.f32 %v3165, %v2543
        %v3230 = vadd.f32 %v3166, %v2546
        %v3231 = vadd.f32 %v3167, %v2549
        %v3232 = vadd.f32 %v3168, %v2552
        %v3233 = vadd.f32 %v3169, %v2555
        %v3234 = vadd.f32 %v3170, %v2558
        %v3235 = vadd.f32 %v3171, %v2561
        %v3236 = vadd.f32 %v3172, %v2564
        %v3237 = vadd.f32 %v3173, %v2567
        %v3238 = vadd.f32 %v3174, %v2570
        %v3239 = vadd.f32 %v3175, %v2573
        %v3240 = vadd.f32 %v3176, %v2576
        %v3241 = vadd.f32 %v3177, %v2579
        %v3242 = vadd.f32 %v3178, %v2582
        %v3243 = vadd.f32 %v3179, %v2602
        %v3244 = vadd.f32 %v3180, %v2605
        %v3245 = vadd.f32 %v3181, %v2608
        %v3246 = vadd.f32 %v3182, %v2611
        %v3247 = vadd.f32 %v3183, %v2614
        %v3248 = vadd.f32 %v3184, %v2617
        %v3249 = vadd.f32 %v3185, %v2620
        %v3250 = vadd.f32 %v3186, %v2623
        %v3251 = vadd.f32 %v3187, %v2626
        %v3252 = vadd.f32 %v3188, %v2629
        %v3253 = vadd.f32 %v3189, %v2632
        %v3254 = vadd.f32 %v3190, %v2635
        %v3255 = vadd.f32 %v3191, %v2638
        %v3256 = vadd.f32 %v3192, %v2641
        %v3257 = vadd.f32 %v3193, %v2644
        %v3258 = vadd.f32 %v3194, %v2647
        %v3259 = vadd.f32 %v3195, %v2667
        %v3260 = vadd.f32 %v3196, %v2670
        %v3261 = vadd.f32 %v3197, %v2673
        %v3262 = vadd.f32 %v3198, %v2676
        %v3263 = vadd.f32 %v3199, %v2679
        %v3264 = vadd.f32 %v3200, %v2682
        %v3265 = vadd.f32 %v3201, %v2685
        %v3266 = vadd.f32 %v3202, %v2688
        %v3267 = vadd.f32 %v3203, %v2691
        %v3268 = vadd.f32 %v3204, %v2694
        %v3269 = vadd.f32 %v3205, %v2697
        %v3270 = vadd.f32 %v3206, %v2700
        %v3271 = vadd.f32 %v3207, %v2703
        %v3272 = vadd.f32 %v3208, %v2706
        %v3273 = vadd.f32 %v3209, %v2709
        %v3274 = vadd.f32 %v3210, %v2712
        %v3275 = vadd.f32 %v3211, %v2732
        %v3276 = vadd.f32 %v3212, %v2735
        %v3277 = vadd.f32 %v3213, %v2738
        %v3278 = vadd.f32 %v3214, %v2741
        %v3279 = vadd.f32 %v3215, %v2744
        %v3280 = vadd.f32 %v3216, %v2747
        %v3281 = vadd.f32 %v3217, %v2750
        %v3282 = vadd.f32 %v3218, %v2753
        %v3283 = vadd.f32 %v3219, %v2756
        %v3284 = vadd.f32 %v3220, %v2759
        %v3285 = vadd.f32 %v3221, %v2762
        %v3286 = vadd.f32 %v3222, %v2765
        %v3287 = vadd.f32 %v3223, %v2768
        %v3288 = vadd.f32 %v3224, %v2771
        %v3289 = vadd.f32 %v3225, %v2774
        %v3290 = vadd.f32 %v3226, %v2777
        %3291 = vst.msk [vmem:[#allocation4] sm:$0xff] %vm548, %v3227
        %3292 = vst.msk [vmem:[#allocation4 + $0x8] sm:$0xff] %vm548, %v3228
        %3293 = vst.msk [vmem:[#allocation4 + $0x10] sm:$0xff] %vm548, %v3229
        %3294 = vst.msk [vmem:[#allocation4 + $0x18] sm:$0xff] %vm548, %v3230
        %3295 = vst.msk [vmem:[#allocation4 + $0x20] sm:$0xff] %vm548, %v3231
        %3296 = vst.msk [vmem:[#allocation4 + $0x28] sm:$0xff] %vm548, %v3232
        %3297 = vst.msk [vmem:[#allocation4 + $0x30] sm:$0xff] %vm548, %v3233
        %3298 = vst.msk [vmem:[#allocation4 + $0x38] sm:$0xff] %vm548, %v3234
        %3299 = vst.msk [vmem:[#allocation4 + $0x40] sm:$0xff] %vm548, %v3235
        %3300 = vst.msk [vmem:[#allocation4 + $0x48] sm:$0xff] %vm548, %v3236
        %3301 = vst.msk [vmem:[#allocation4 + $0x50] sm:$0xff] %vm548, %v3237
        %3302 = vst.msk [vmem:[#allocation4 + $0x58] sm:$0xff] %vm548, %v3238
        %3303 = vst.msk [vmem:[#allocation4 + $0x60] sm:$0xff] %vm548, %v3239
        %3304 = vst.msk [vmem:[#allocation4 + $0x68] sm:$0xff] %vm548, %v3240
        %3305 = vst.msk [vmem:[#allocation4 + $0x70] sm:$0xff] %vm548, %v3241
        %3306 = vst.msk [vmem:[#allocation4 + $0x78] sm:$0xff] %vm548, %v3242
        %3307 = vst.msk [vmem:[#allocation4 + $0x80] sm:$0xff] %vm548, %v3243
        %3308 = vst.msk [vmem:[#allocation4 + $0x88] sm:$0xff] %vm548, %v3244
        %3309 = vst.msk [vmem:[#allocation4 + $0x90] sm:$0xff] %vm548, %v3245
        %3310 = vst.msk [vmem:[#allocation4 + $0x98] sm:$0xff] %vm548, %v3246
        %3311 = vst.msk [vmem:[#allocation4 + $0xa0] sm:$0xff] %vm548, %v3247
        %3312 = vst.msk [vmem:[#allocation4 + $0xa8] sm:$0xff] %vm548, %v3248
        %3313 = vst.msk [vmem:[#allocation4 + $0xb0] sm:$0xff] %vm548, %v3249
        %3314 = vst.msk [vmem:[#allocation4 + $0xb8] sm:$0xff] %vm548, %v3250
        %3315 = vst.msk [vmem:[#allocation4 + $0xc0] sm:$0xff] %vm548, %v3251
        %3316 = vst.msk [vmem:[#allocation4 + $0xc8] sm:$0xff] %vm548, %v3252
        %3317 = vst.msk [vmem:[#allocation4 + $0xd0] sm:$0xff] %vm548, %v3253
        %3318 = vst.msk [vmem:[#allocation4 + $0xd8] sm:$0xff] %vm548, %v3254
        %3319 = vst.msk [vmem:[#allocation4 + $0xe0] sm:$0xff] %vm548, %v3255
        %3320 = vst.msk [vmem:[#allocation4 + $0xe8] sm:$0xff] %vm548, %v3256
        %3321 = vst.msk [vmem:[#allocation4 + $0xf0] sm:$0xff] %vm548, %v3257
        %3322 = vst.msk [vmem:[#allocation4 + $0xf8] sm:$0xff] %vm548, %v3258
        %3323 = vst.msk [vmem:[#allocation4 + $0x100] sm:$0xff] %vm548, %v3259
        %3324 = vst.msk [vmem:[#allocation4 + $0x108] sm:$0xff] %vm548, %v3260
        %3325 = vst.msk [vmem:[#allocation4 + $0x110] sm:$0xff] %vm548, %v3261
        %3326 = vst.msk [vmem:[#allocation4 + $0x118] sm:$0xff] %vm548, %v3262
        %3327 = vst.msk [vmem:[#allocation4 + $0x120] sm:$0xff] %vm548, %v3263
        %3328 = vst.msk [vmem:[#allocation4 + $0x128] sm:$0xff] %vm548, %v3264
        %3329 = vst.msk [vmem:[#allocation4 + $0x130] sm:$0xff] %vm548, %v3265
        %3330 = vst.msk [vmem:[#allocation4 + $0x138] sm:$0xff] %vm548, %v3266
        %3331 = vst.msk [vmem:[#allocation4 + $0x140] sm:$0xff] %vm548, %v3267
        %3332 = vst.msk [vmem:[#allocation4 + $0x148] sm:$0xff] %vm548, %v3268
        %3333 = vst.msk [vmem:[#allocation4 + $0x150] sm:$0xff] %vm548, %v3269
        %3334 = vst.msk [vmem:[#allocation4 + $0x158] sm:$0xff] %vm548, %v3270
        %3335 = vst.msk [vmem:[#allocation4 + $0x160] sm:$0xff] %vm548, %v3271
        %3336 = vst.msk [vmem:[#allocation4 + $0x168] sm:$0xff] %vm548, %v3272
        %3337 = vst.msk [vmem:[#allocation4 + $0x170] sm:$0xff] %vm548, %v3273
        %3338 = vst.msk [vmem:[#allocation4 + $0x178] sm:$0xff] %vm548, %v3274
        %3339 = vst.msk [vmem:[#allocation4 + $0x180] sm:$0xff] %vm548, %v3275
        %3340 = vst.msk [vmem:[#allocation4 + $0x188] sm:$0xff] %vm548, %v3276
        %3341 = vst.msk [vmem:[#allocation4 + $0x190] sm:$0xff] %vm548, %v3277
        %3342 = vst.msk [vmem:[#allocation4 + $0x198] sm:$0xff] %vm548, %v3278
        %3343 = vst.msk [vmem:[#allocation4 + $0x1a0] sm:$0xff] %vm548, %v3279
        %3344 = vst.msk [vmem:[#allocation4 + $0x1a8] sm:$0xff] %vm548, %v3280
        %3345 = vst.msk [vmem:[#allocation4 + $0x1b0] sm:$0xff] %vm548, %v3281
        %3346 = vst.msk [vmem:[#allocation4 + $0x1b8] sm:$0xff] %vm548, %v3282
        %3347 = vst.msk [vmem:[#allocation4 + $0x1c0] sm:$0xff] %vm548, %v3283
        %3348 = vst.msk [vmem:[#allocation4 + $0x1c8] sm:$0xff] %vm548, %v3284
        %3349 = vst.msk [vmem:[#allocation4 + $0x1d0] sm:$0xff] %vm548, %v3285
        %3350 = vst.msk [vmem:[#allocation4 + $0x1d8] sm:$0xff] %vm548, %v3286
        %3351 = vst.msk [vmem:[#allocation4 + $0x1e0] sm:$0xff] %vm548, %v3287
        %3352 = vst.msk [vmem:[#allocation4 + $0x1e8] sm:$0xff] %vm548, %v3288
        %3353 = vst.msk [vmem:[#allocation4 + $0x1f0] sm:$0xff] %vm548, %v3289
        %3354 = vst.msk [vmem:[#allocation4 + $0x1f8] sm:$0xff] %vm548, %v3290
        // Predicated region
        $region49: #{tpu_custom_call.1} parent=31 // pred_check
          %p3355 = pneg %p302
        $region50: #{tpu_custom_call.1} parent=31 // pred_check_branch
          %3357 = sbr.rel (%p3355) target = $region52
        $region51: #{tpu_custom_call.1} parent=31 // pred_region
          %v3358 = vld [vmem:[#allocation3] sm:$0xff]
          %v3359 = vld [vmem:[#allocation3 + $0x8] sm:$0xff]
          %v3360 = vld [vmem:[#allocation3 + $0x10] sm:$0xff]
          %v3361 = vld [vmem:[#allocation3 + $0x18] sm:$0xff]
          %v3362 = vld [vmem:[#allocation3 + $0x20] sm:$0xff]
          %v3363 = vld [vmem:[#allocation3 + $0x28] sm:$0xff]
          %v3364 = vld [vmem:[#allocation3 + $0x30] sm:$0xff]
          %v3365 = vld [vmem:[#allocation3 + $0x38] sm:$0xff]
          %v3366 = vld [vmem:[#allocation3 + $0x40] sm:$0xff]
          %v3367 = vld [vmem:[#allocation3 + $0x48] sm:$0xff]
          %v3368 = vld [vmem:[#allocation3 + $0x50] sm:$0xff]
          %v3369 = vld [vmem:[#allocation3 + $0x58] sm:$0xff]
          %v3370 = vld [vmem:[#allocation3 + $0x60] sm:$0xff]
          %v3371 = vld [vmem:[#allocation3 + $0x68] sm:$0xff]
          %v3372 = vld [vmem:[#allocation3 + $0x70] sm:$0xff]
          %v3373 = vld [vmem:[#allocation3 + $0x78] sm:$0xff]
          %v3374 = vld [vmem:[#allocation3 + $0x80] sm:$0xff]
          %v3375 = vld [vmem:[#allocation3 + $0x88] sm:$0xff]
          %v3376 = vld [vmem:[#allocation3 + $0x90] sm:$0xff]
          %v3377 = vld [vmem:[#allocation3 + $0x98] sm:$0xff]
          %v3378 = vld [vmem:[#allocation3 + $0xa0] sm:$0xff]
          %v3379 = vld [vmem:[#allocation3 + $0xa8] sm:$0xff]
          %v3380 = vld [vmem:[#allocation3 + $0xb0] sm:$0xff]
          %v3381 = vld [vmem:[#allocation3 + $0xb8] sm:$0xff]
          %v3382 = vld [vmem:[#allocation3 + $0xc0] sm:$0xff]
          %v3383 = vld [vmem:[#allocation3 + $0xc8] sm:$0xff]
          %v3384 = vld [vmem:[#allocation3 + $0xd0] sm:$0xff]
          %v3385 = vld [vmem:[#allocation3 + $0xd8] sm:$0xff]
          %v3386 = vld [vmem:[#allocation3 + $0xe0] sm:$0xff]
          %v3387 = vld [vmem:[#allocation3 + $0xe8] sm:$0xff]
          %v3388 = vld [vmem:[#allocation3 + $0xf0] sm:$0xff]
          %v3389 = vld [vmem:[#allocation3 + $0xf8] sm:$0xff]
          %v3390 = vld [vmem:[#allocation3 + $0x100] sm:$0xff]
          %v3391 = vld [vmem:[#allocation3 + $0x108] sm:$0xff]
          %v3392 = vld [vmem:[#allocation3 + $0x110] sm:$0xff]
          %v3393 = vld [vmem:[#allocation3 + $0x118] sm:$0xff]
          %v3394 = vld [vmem:[#allocation3 + $0x120] sm:$0xff]
          %v3395 = vld [vmem:[#allocation3 + $0x128] sm:$0xff]
          %v3396 = vld [vmem:[#allocation3 + $0x130] sm:$0xff]
          %v3397 = vld [vmem:[#allocation3 + $0x138] sm:$0xff]
          %v3398 = vld [vmem:[#allocation3 + $0x140] sm:$0xff]
          %v3399 = vld [vmem:[#allocation3 + $0x148] sm:$0xff]
          %v3400 = vld [vmem:[#allocation3 + $0x150] sm:$0xff]
          %v3401 = vld [vmem:[#allocation3 + $0x158] sm:$0xff]
          %v3402 = vld [vmem:[#allocation3 + $0x160] sm:$0xff]
          %v3403 = vld [vmem:[#allocation3 + $0x168] sm:$0xff]
          %v3404 = vld [vmem:[#allocation3 + $0x170] sm:$0xff]
          %v3405 = vld [vmem:[#allocation3 + $0x178] sm:$0xff]
          %v3406 = vld [vmem:[#allocation3 + $0x180] sm:$0xff]
          %v3407 = vld [vmem:[#allocation3 + $0x188] sm:$0xff]
          %v3408 = vld [vmem:[#allocation3 + $0x190] sm:$0xff]
          %v3409 = vld [vmem:[#allocation3 + $0x198] sm:$0xff]
          %v3410 = vld [vmem:[#allocation3 + $0x1a0] sm:$0xff]
          %v3411 = vld [vmem:[#allocation3 + $0x1a8] sm:$0xff]
          %v3412 = vld [vmem:[#allocation3 + $0x1b0] sm:$0xff]
          %v3413 = vld [vmem:[#allocation3 + $0x1b8] sm:$0xff]
          %v3414 = vld [vmem:[#allocation3 + $0x1c0] sm:$0xff]
          %v3415 = vld [vmem:[#allocation3 + $0x1c8] sm:$0xff]
          %v3416 = vld [vmem:[#allocation3 + $0x1d0] sm:$0xff]
          %v3417 = vld [vmem:[#allocation3 + $0x1d8] sm:$0xff]
          %v3418 = vld [vmem:[#allocation3 + $0x1e0] sm:$0xff]
          %v3419 = vld [vmem:[#allocation3 + $0x1e8] sm:$0xff]
          %v3420 = vld [vmem:[#allocation3 + $0x1f0] sm:$0xff]
          %v3421 = vld [vmem:[#allocation3 + $0x1f8] sm:$0xff]
          %v3422 = vrcp.pop %v3358
          %v3423 = vrcp.pop %v3359
          %v3424 = vrcp.pop %v3360
          %v3425 = vrcp.pop %v3361
          %v3426 = vrcp.pop %v3362
          %v3427 = vrcp.pop %v3363
          %v3428 = vrcp.pop %v3364
          %v3429 = vrcp.pop %v3365
          %v3430 = vrcp.pop %v3366
          %v3431 = vrcp.pop %v3367
          %v3432 = vrcp.pop %v3368
          %v3433 = vrcp.pop %v3369
          %v3434 = vrcp.pop %v3370
          %v3435 = vrcp.pop %v3371
          %v3436 = vrcp.pop %v3372
          %v3437 = vrcp.pop %v3373
          %v3438 = vrcp.pop %v3374
          %v3439 = vrcp.pop %v3375
          %v3440 = vrcp.pop %v3376
          %v3441 = vrcp.pop %v3377
          %v3442 = vrcp.pop %v3378
          %v3443 = vrcp.pop %v3379
          %v3444 = vrcp.pop %v3380
          %v3445 = vrcp.pop %v3381
          %v3446 = vrcp.pop %v3382
          %v3447 = vrcp.pop %v3383
          %v3448 = vrcp.pop %v3384
          %v3449 = vrcp.pop %v3385
          %v3450 = vrcp.pop %v3386
          %v3451 = vrcp.pop %v3387
          %v3452 = vrcp.pop %v3388
          %v3453 = vrcp.pop %v3389
          %v3454 = vrcp.pop %v3390
          %v3455 = vrcp.pop %v3391
          %v3456 = vrcp.pop %v3392
          %v3457 = vrcp.pop %v3393
          %v3458 = vrcp.pop %v3394
          %v3459 = vrcp.pop %v3395
          %v3460 = vrcp.pop %v3396
          %v3461 = vrcp.pop %v3397
          %v3462 = vrcp.pop %v3398
          %v3463 = vrcp.pop %v3399
          %v3464 = vrcp.pop %v3400
          %v3465 = vrcp.pop %v3401
          %v3466 = vrcp.pop %v3402
          %v3467 = vrcp.pop %v3403
          %v3468 = vrcp.pop %v3404
          %v3469 = vrcp.pop %v3405
          %v3470 = vrcp.pop %v3406
          %v3471 = vrcp.pop %v3407
          %v3472 = vrcp.pop %v3408
          %v3473 = vrcp.pop %v3409
          %v3474 = vrcp.pop %v3410
          %v3475 = vrcp.pop %v3411
          %v3476 = vrcp.pop %v3412
          %v3477 = vrcp.pop %v3413
          %v3478 = vrcp.pop %v3414
          %v3479 = vrcp.pop %v3415
          %v3480 = vrcp.pop %v3416
          %v3481 = vrcp.pop %v3417
          %v3482 = vrcp.pop %v3418
          %v3483 = vrcp.pop %v3419
          %v3484 = vrcp.pop %v3420
          %v3485 = vrcp.pop %v3421
          %v3486 = vld [vmem:[#allocation4] sm:$0xff]
          %v3487 = vld [vmem:[#allocation4 + $0x8] sm:$0xff]
          %v3488 = vld [vmem:[#allocation4 + $0x10] sm:$0xff]
          %v3489 = vld [vmem:[#allocation4 + $0x18] sm:$0xff]
          %v3490 = vld [vmem:[#allocation4 + $0x20] sm:$0xff]
          %v3491 = vld [vmem:[#allocation4 + $0x28] sm:$0xff]
          %v3492 = vld [vmem:[#allocation4 + $0x30] sm:$0xff]
          %v3493 = vld [vmem:[#allocation4 + $0x38] sm:$0xff]
          %v3494 = vld [vmem:[#allocation4 + $0x40] sm:$0xff]
          %v3495 = vld [vmem:[#allocation4 + $0x48] sm:$0xff]
          %v3496 = vld [vmem:[#allocation4 + $0x50] sm:$0xff]
          %v3497 = vld [vmem:[#allocation4 + $0x58] sm:$0xff]
          %v3498 = vld [vmem:[#allocation4 + $0x60] sm:$0xff]
          %v3499 = vld [vmem:[#allocation4 + $0x68] sm:$0xff]
          %v3500 = vld [vmem:[#allocation4 + $0x70] sm:$0xff]
          %v3501 = vld [vmem:[#allocation4 + $0x78] sm:$0xff]
          %v3502 = vld [vmem:[#allocation4 + $0x80] sm:$0xff]
          %v3503 = vld [vmem:[#allocation4 + $0x88] sm:$0xff]
          %v3504 = vld [vmem:[#allocation4 + $0x90] sm:$0xff]
          %v3505 = vld [vmem:[#allocation4 + $0x98] sm:$0xff]
          %v3506 = vld [vmem:[#allocation4 + $0xa0] sm:$0xff]
          %v3507 = vld [vmem:[#allocation4 + $0xa8] sm:$0xff]
          %v3508 = vld [vmem:[#allocation4 + $0xb0] sm:$0xff]
          %v3509 = vld [vmem:[#allocation4 + $0xb8] sm:$0xff]
          %v3510 = vld [vmem:[#allocation4 + $0xc0] sm:$0xff]
          %v3511 = vld [vmem:[#allocation4 + $0xc8] sm:$0xff]
          %v3512 = vld [vmem:[#allocation4 + $0xd0] sm:$0xff]
          %v3513 = vld [vmem:[#allocation4 + $0xd8] sm:$0xff]
          %v3514 = vld [vmem:[#allocation4 + $0xe0] sm:$0xff]
          %v3515 = vld [vmem:[#allocation4 + $0xe8] sm:$0xff]
          %v3516 = vld [vmem:[#allocation4 + $0xf0] sm:$0xff]
          %v3517 = vld [vmem:[#allocation4 + $0xf8] sm:$0xff]
          %v3518 = vld [vmem:[#allocation4 + $0x100] sm:$0xff]
          %v3519 = vld [vmem:[#allocation4 + $0x108] sm:$0xff]
          %v3520 = vld [vmem:[#allocation4 + $0x110] sm:$0xff]
          %v3521 = vld [vmem:[#allocation4 + $0x118] sm:$0xff]
          %v3522 = vld [vmem:[#allocation4 + $0x120] sm:$0xff]
          %v3523 = vld [vmem:[#allocation4 + $0x128] sm:$0xff]
          %v3524 = vld [vmem:[#allocation4 + $0x130] sm:$0xff]
          %v3525 = vld [vmem:[#allocation4 + $0x138] sm:$0xff]
          %v3526 = vld [vmem:[#allocation4 + $0x140] sm:$0xff]
          %v3527 = vld [vmem:[#allocation4 + $0x148] sm:$0xff]
          %v3528 = vld [vmem:[#allocation4 + $0x150] sm:$0xff]
          %v3529 = vld [vmem:[#allocation4 + $0x158] sm:$0xff]
          %v3530 = vld [vmem:[#allocation4 + $0x160] sm:$0xff]
          %v3531 = vld [vmem:[#allocation4 + $0x168] sm:$0xff]
          %v3532 = vld [vmem:[#allocation4 + $0x170] sm:$0xff]
          %v3533 = vld [vmem:[#allocation4 + $0x178] sm:$0xff]
          %v3534 = vld [vmem:[#allocation4 + $0x180] sm:$0xff]
          %v3535 = vld [vmem:[#allocation4 + $0x188] sm:$0xff]
          %v3536 = vld [vmem:[#allocation4 + $0x190] sm:$0xff]
          %v3537 = vld [vmem:[#allocation4 + $0x198] sm:$0xff]
          %v3538 = vld [vmem:[#allocation4 + $0x1a0] sm:$0xff]
          %v3539 = vld [vmem:[#allocation4 + $0x1a8] sm:$0xff]
          %v3540 = vld [vmem:[#allocation4 + $0x1b0] sm:$0xff]
          %v3541 = vld [vmem:[#allocation4 + $0x1b8] sm:$0xff]
          %v3542 = vld [vmem:[#allocation4 + $0x1c0] sm:$0xff]
          %v3543 = vld [vmem:[#allocation4 + $0x1c8] sm:$0xff]
          %v3544 = vld [vmem:[#allocation4 + $0x1d0] sm:$0xff]
          %v3545 = vld [vmem:[#allocation4 + $0x1d8] sm:$0xff]
          %v3546 = vld [vmem:[#allocation4 + $0x1e0] sm:$0xff]
          %v3547 = vld [vmem:[#allocation4 + $0x1e8] sm:$0xff]
          %v3548 = vld [vmem:[#allocation4 + $0x1f0] sm:$0xff]
          %v3549 = vld [vmem:[#allocation4 + $0x1f8] sm:$0xff]
          %3551 = vset.pattern.permute.xlu0 0
          %3552 = vperm.xlu0 %3551, %v3422
          %v3553 = vpop.permute.xlu0 %3552
          %3556 = vset.pattern.permute.xlu0 0
          %3557 = vperm.xlu0 %3556, %v3423
          %v3558 = vpop.permute.xlu0 %3557
          %3561 = vset.pattern.permute.xlu0 0
          %3562 = vperm.xlu0 %3561, %v3424
          %v3563 = vpop.permute.xlu0 %3562
          %3566 = vset.pattern.permute.xlu0 0
          %3567 = vperm.xlu0 %3566, %v3425
          %v3568 = vpop.permute.xlu0 %3567
          %3571 = vset.pattern.permute.xlu0 0
          %3572 = vperm.xlu0 %3571, %v3426
          %v3573 = vpop.permute.xlu0 %3572
          %3576 = vset.pattern.permute.xlu0 0
          %3577 = vperm.xlu0 %3576, %v3427
          %v3578 = vpop.permute.xlu0 %3577
          %3581 = vset.pattern.permute.xlu0 0
          %3582 = vperm.xlu0 %3581, %v3428
          %v3583 = vpop.permute.xlu0 %3582
          %3586 = vset.pattern.permute.xlu0 0
          %3587 = vperm.xlu0 %3586, %v3429
          %v3588 = vpop.permute.xlu0 %3587
          %3591 = vset.pattern.permute.xlu0 0
          %3592 = vperm.xlu0 %3591, %v3430
          %v3593 = vpop.permute.xlu0 %3592
          %3596 = vset.pattern.permute.xlu0 0
          %3597 = vperm.xlu0 %3596, %v3431
          %v3598 = vpop.permute.xlu0 %3597
          %3601 = vset.pattern.permute.xlu0 0
          %3602 = vperm.xlu0 %3601, %v3432
          %v3603 = vpop.permute.xlu0 %3602
          %3606 = vset.pattern.permute.xlu0 0
          %3607 = vperm.xlu0 %3606, %v3433
          %v3608 = vpop.permute.xlu0 %3607
          %3611 = vset.pattern.permute.xlu0 0
          %3612 = vperm.xlu0 %3611, %v3434
          %v3613 = vpop.permute.xlu0 %3612
          %3616 = vset.pattern.permute.xlu0 0
          %3617 = vperm.xlu0 %3616, %v3435
          %v3618 = vpop.permute.xlu0 %3617
          %3621 = vset.pattern.permute.xlu0 0
          %3622 = vperm.xlu0 %3621, %v3436
          %v3623 = vpop.permute.xlu0 %3622
          %3626 = vset.pattern.permute.xlu0 0
          %3627 = vperm.xlu0 %3626, %v3437
          %v3628 = vpop.permute.xlu0 %3627
          %3631 = vset.pattern.permute.xlu0 0
          %3632 = vperm.xlu0 %3631, %v3438
          %v3633 = vpop.permute.xlu0 %3632
          %3636 = vset.pattern.permute.xlu0 0
          %3637 = vperm.xlu0 %3636, %v3439
          %v3638 = vpop.permute.xlu0 %3637
          %3641 = vset.pattern.permute.xlu0 0
          %3642 = vperm.xlu0 %3641, %v3440
          %v3643 = vpop.permute.xlu0 %3642
          %3646 = vset.pattern.permute.xlu0 0
          %3647 = vperm.xlu0 %3646, %v3441
          %v3648 = vpop.permute.xlu0 %3647
          %3651 = vset.pattern.permute.xlu0 0
          %3652 = vperm.xlu0 %3651, %v3442
          %v3653 = vpop.permute.xlu0 %3652
          %3656 = vset.pattern.permute.xlu0 0
          %3657 = vperm.xlu0 %3656, %v3443
          %v3658 = vpop.permute.xlu0 %3657
          %3661 = vset.pattern.permute.xlu0 0
          %3662 = vperm.xlu0 %3661, %v3444
          %v3663 = vpop.permute.xlu0 %3662
          %3666 = vset.pattern.permute.xlu0 0
          %3667 = vperm.xlu0 %3666, %v3445
          %v3668 = vpop.permute.xlu0 %3667
          %3671 = vset.pattern.permute.xlu0 0
          %3672 = vperm.xlu0 %3671, %v3446
          %v3673 = vpop.permute.xlu0 %3672
          %3676 = vset.pattern.permute.xlu0 0
          %3677 = vperm.xlu0 %3676, %v3447
          %v3678 = vpop.permute.xlu0 %3677
          %3681 = vset.pattern.permute.xlu0 0
          %3682 = vperm.xlu0 %3681, %v3448
          %v3683 = vpop.permute.xlu0 %3682
          %3686 = vset.pattern.permute.xlu0 0
          %3687 = vperm.xlu0 %3686, %v3449
          %v3688 = vpop.permute.xlu0 %3687
          %3691 = vset.pattern.permute.xlu0 0
          %3692 = vperm.xlu0 %3691, %v3450
          %v3693 = vpop.permute.xlu0 %3692
          %3696 = vset.pattern.permute.xlu0 0
          %3697 = vperm.xlu0 %3696, %v3451
          %v3698 = vpop.permute.xlu0 %3697
          %3701 = vset.pattern.permute.xlu0 0
          %3702 = vperm.xlu0 %3701, %v3452
          %v3703 = vpop.permute.xlu0 %3702
          %3706 = vset.pattern.permute.xlu0 0
          %3707 = vperm.xlu0 %3706, %v3453
          %v3708 = vpop.permute.xlu0 %3707
          %3711 = vset.pattern.permute.xlu0 0
          %3712 = vperm.xlu0 %3711, %v3454
          %v3713 = vpop.permute.xlu0 %3712
          %3716 = vset.pattern.permute.xlu0 0
          %3717 = vperm.xlu0 %3716, %v3455
          %v3718 = vpop.permute.xlu0 %3717
          %3721 = vset.pattern.permute.xlu0 0
          %3722 = vperm.xlu0 %3721, %v3456
          %v3723 = vpop.permute.xlu0 %3722
          %3726 = vset.pattern.permute.xlu0 0
          %3727 = vperm.xlu0 %3726, %v3457
          %v3728 = vpop.permute.xlu0 %3727
          %3731 = vset.pattern.permute.xlu0 0
          %3732 = vperm.xlu0 %3731, %v3458
          %v3733 = vpop.permute.xlu0 %3732
          %3736 = vset.pattern.permute.xlu0 0
          %3737 = vperm.xlu0 %3736, %v3459
          %v3738 = vpop.permute.xlu0 %3737
          %3741 = vset.pattern.permute.xlu0 0
          %3742 = vperm.xlu0 %3741, %v3460
          %v3743 = vpop.permute.xlu0 %3742
          %3746 = vset.pattern.permute.xlu0 0
          %3747 = vperm.xlu0 %3746, %v3461
          %v3748 = vpop.permute.xlu0 %3747
          %3751 = vset.pattern.permute.xlu0 0
          %3752 = vperm.xlu0 %3751, %v3462
          %v3753 = vpop.permute.xlu0 %3752
          %3756 = vset.pattern.permute.xlu0 0
          %3757 = vperm.xlu0 %3756, %v3463
          %v3758 = vpop.permute.xlu0 %3757
          %3761 = vset.pattern.permute.xlu0 0
          %3762 = vperm.xlu0 %3761, %v3464
          %v3763 = vpop.permute.xlu0 %3762
          %3766 = vset.pattern.permute.xlu0 0
          %3767 = vperm.xlu0 %3766, %v3465
          %v3768 = vpop.permute.xlu0 %3767
          %3771 = vset.pattern.permute.xlu0 0
          %3772 = vperm.xlu0 %3771, %v3466
          %v3773 = vpop.permute.xlu0 %3772
          %3776 = vset.pattern.permute.xlu0 0
          %3777 = vperm.xlu0 %3776, %v3467
          %v3778 = vpop.permute.xlu0 %3777
          %3781 = vset.pattern.permute.xlu0 0
          %3782 = vperm.xlu0 %3781, %v3468
          %v3783 = vpop.permute.xlu0 %3782
          %3786 = vset.pattern.permute.xlu0 0
          %3787 = vperm.xlu0 %3786, %v3469
          %v3788 = vpop.permute.xlu0 %3787
          %3791 = vset.pattern.permute.xlu0 0
          %3792 = vperm.xlu0 %3791, %v3470
          %v3793 = vpop.permute.xlu0 %3792
          %3796 = vset.pattern.permute.xlu0 0
          %3797 = vperm.xlu0 %3796, %v3471
          %v3798 = vpop.permute.xlu0 %3797
          %3801 = vset.pattern.permute.xlu0 0
          %3802 = vperm.xlu0 %3801, %v3472
          %v3803 = vpop.permute.xlu0 %3802
          %3806 = vset.pattern.permute.xlu0 0
          %3807 = vperm.xlu0 %3806, %v3473
          %v3808 = vpop.permute.xlu0 %3807
          %3811 = vset.pattern.permute.xlu0 0
          %3812 = vperm.xlu0 %3811, %v3474
          %v3813 = vpop.permute.xlu0 %3812
          %3816 = vset.pattern.permute.xlu0 0
          %3817 = vperm.xlu0 %3816, %v3475
          %v3818 = vpop.permute.xlu0 %3817
          %3821 = vset.pattern.permute.xlu0 0
          %3822 = vperm.xlu0 %3821, %v3476
          %v3823 = vpop.permute.xlu0 %3822
          %3826 = vset.pattern.permute.xlu0 0
          %3827 = vperm.xlu0 %3826, %v3477
          %v3828 = vpop.permute.xlu0 %3827
          %3831 = vset.pattern.permute.xlu0 0
          %3832 = vperm.xlu0 %3831, %v3478
          %v3833 = vpop.permute.xlu0 %3832
          %3836 = vset.pattern.permute.xlu0 0
          %3837 = vperm.xlu0 %3836, %v3479
          %v3838 = vpop.permute.xlu0 %3837
          %3841 = vset.pattern.permute.xlu0 0
          %3842 = vperm.xlu0 %3841, %v3480
          %v3843 = vpop.permute.xlu0 %3842
          %3846 = vset.pattern.permute.xlu0 0
          %3847 = vperm.xlu0 %3846, %v3481
          %v3848 = vpop.permute.xlu0 %3847
          %3851 = vset.pattern.permute.xlu0 0
          %3852 = vperm.xlu0 %3851, %v3482
          %v3853 = vpop.permute.xlu0 %3852
          %3856 = vset.pattern.permute.xlu0 0
          %3857 = vperm.xlu0 %3856, %v3483
          %v3858 = vpop.permute.xlu0 %3857
          %3861 = vset.pattern.permute.xlu0 0
          %3862 = vperm.xlu0 %3861, %v3484
          %v3863 = vpop.permute.xlu0 %3862
          %3866 = vset.pattern.permute.xlu0 0
          %3867 = vperm.xlu0 %3866, %v3485
          %v3868 = vpop.permute.xlu0 %3867
          %v3870 = vmul.f32 %v3486, %v3553
          %v3871 = vmul.f32 %v3487, %v3558
          %v3872 = vmul.f32 %v3488, %v3563
          %v3873 = vmul.f32 %v3489, %v3568
          %v3874 = vmul.f32 %v3490, %v3573
          %v3875 = vmul.f32 %v3491, %v3578
          %v3876 = vmul.f32 %v3492, %v3583
          %v3877 = vmul.f32 %v3493, %v3588
          %v3878 = vmul.f32 %v3494, %v3593
          %v3879 = vmul.f32 %v3495, %v3598
          %v3880 = vmul.f32 %v3496, %v3603
          %v3881 = vmul.f32 %v3497, %v3608
          %v3882 = vmul.f32 %v3498, %v3613
          %v3883 = vmul.f32 %v3499, %v3618
          %v3884 = vmul.f32 %v3500, %v3623
          %v3885 = vmul.f32 %v3501, %v3628
          %v3886 = vmul.f32 %v3502, %v3633
          %v3887 = vmul.f32 %v3503, %v3638
          %v3888 = vmul.f32 %v3504, %v3643
          %v3889 = vmul.f32 %v3505, %v3648
          %v3890 = vmul.f32 %v3506, %v3653
          %v3891 = vmul.f32 %v3507, %v3658
          %v3892 = vmul.f32 %v3508, %v3663
          %v3893 = vmul.f32 %v3509, %v3668
          %v3894 = vmul.f32 %v3510, %v3673
          %v3895 = vmul.f32 %v3511, %v3678
          %v3896 = vmul.f32 %v3512, %v3683
          %v3897 = vmul.f32 %v3513, %v3688
          %v3898 = vmul.f32 %v3514, %v3693
          %v3899 = vmul.f32 %v3515, %v3698
          %v3900 = vmul.f32 %v3516, %v3703
          %v3901 = vmul.f32 %v3517, %v3708
          %v3902 = vmul.f32 %v3518, %v3713
          %v3903 = vmul.f32 %v3519, %v3718
          %v3904 = vmul.f32 %v3520, %v3723
          %v3905 = vmul.f32 %v3521, %v3728
          %v3906 = vmul.f32 %v3522, %v3733
          %v3907 = vmul.f32 %v3523, %v3738
          %v3908 = vmul.f32 %v3524, %v3743
          %v3909 = vmul.f32 %v3525, %v3748
          %v3910 = vmul.f32 %v3526, %v3753
          %v3911 = vmul.f32 %v3527, %v3758
          %v3912 = vmul.f32 %v3528, %v3763
          %v3913 = vmul.f32 %v3529, %v3768
          %v3914 = vmul.f32 %v3530, %v3773
          %v3915 = vmul.f32 %v3531, %v3778
          %v3916 = vmul.f32 %v3532, %v3783
          %v3917 = vmul.f32 %v3533, %v3788
          %v3918 = vmul.f32 %v3534, %v3793
          %v3919 = vmul.f32 %v3535, %v3798
          %v3920 = vmul.f32 %v3536, %v3803
          %v3921 = vmul.f32 %v3537, %v3808
          %v3922 = vmul.f32 %v3538, %v3813
          %v3923 = vmul.f32 %v3539, %v3818
          %v3924 = vmul.f32 %v3540, %v3823
          %v3925 = vmul.f32 %v3541, %v3828
          %v3926 = vmul.f32 %v3542, %v3833
          %v3927 = vmul.f32 %v3543, %v3838
          %v3928 = vmul.f32 %v3544, %v3843
          %v3929 = vmul.f32 %v3545, %v3848
          %v3930 = vmul.f32 %v3546, %v3853
          %v3931 = vmul.f32 %v3547, %v3858
          %v3932 = vmul.f32 %v3548, %v3863
          %v3933 = vmul.f32 %v3549, %v3868
          %3934 = vxpose.xlu0.b32.start [1/16] %v3870, 128
          %3935 = vxpose.xlu0.b32.cont [2/16] %v3871, 128
          %3936 = vxpose.xlu0.b32.cont [3/16] %v3872, 128
          %3937 = vxpose.xlu0.b32.cont [4/16] %v3873, 128
          %3938 = vxpose.xlu0.b32.cont [5/16] %v3874, 128
          %3939 = vxpose.xlu0.b32.cont [6/16] %v3875, 128
          %3940 = vxpose.xlu0.b32.cont [7/16] %v3876, 128
          %3941 = vxpose.xlu0.b32.cont [8/16] %v3877, 128
          %3942 = vxpose.xlu0.b32.cont [9/16] %v3878, 128
          %3943 = vxpose.xlu0.b32.cont [10/16] %v3879, 128
          %3944 = vxpose.xlu0.b32.cont [11/16] %v3880, 128
          %3945 = vxpose.xlu0.b32.cont [12/16] %v3881, 128
          %3946 = vxpose.xlu0.b32.cont [13/16] %v3882, 128
          %3947 = vxpose.xlu0.b32.cont [14/16] %v3883, 128
          %3948 = vxpose.xlu0.b32.cont [15/16] %v3884, 128
          %3949 = vxpose.xlu0.b32.end [16/16] %v3885, 128
          %v3950 = vpop.trf.xlu0
          %v3951 = vpop.trf.xlu0
          %v3952 = vpop.trf.xlu0
          %v3953 = vpop.trf.xlu0
          %v3954 = vpop.trf.xlu0
          %v3955 = vpop.trf.xlu0
          %v3956 = vpop.trf.xlu0
          %v3957 = vpop.trf.xlu0
          %v3958 = vpop.trf.xlu0
          %v3959 = vpop.trf.xlu0
          %v3960 = vpop.trf.xlu0
          %v3961 = vpop.trf.xlu0
          %v3962 = vpop.trf.xlu0
          %v3963 = vpop.trf.xlu0
          %v3964 = vpop.trf.xlu0
          %v3965 = vpop.trf.xlu0
          %3966 = vst [vmem:[%s301] sm:$0xf] %v3950
          %3967 = vxpose.xlu0.b32.start [1/16] %v3886, 128
          %3968 = vxpose.xlu0.b32.cont [2/16] %v3887, 128
          %3969 = vxpose.xlu0.b32.cont [3/16] %v3888, 128
          %3970 = vxpose.xlu0.b32.cont [4/16] %v3889, 128
          %3971 = vxpose.xlu0.b32.cont [5/16] %v3890, 128
          %3972 = vxpose.xlu0.b32.cont [6/16] %v3891, 128
          %3973 = vxpose.xlu0.b32.cont [7/16] %v3892, 128
          %3974 = vxpose.xlu0.b32.cont [8/16] %v3893, 128
          %3975 = vxpose.xlu0.b32.cont [9/16] %v3894, 128
          %3976 = vxpose.xlu0.b32.cont [10/16] %v3895, 128
          %3977 = vxpose.xlu0.b32.cont [11/16] %v3896, 128
          %3978 = vxpose.xlu0.b32.cont [12/16] %v3897, 128
          %3979 = vxpose.xlu0.b32.cont [13/16] %v3898, 128
          %3980 = vxpose.xlu0.b32.cont [14/16] %v3899, 128
          %3981 = vxpose.xlu0.b32.cont [15/16] %v3900, 128
          %3982 = vxpose.xlu0.b32.end [16/16] %v3901, 128
          %v3983 = vpop.trf.xlu0
          %v3984 = vpop.trf.xlu0
          %v3985 = vpop.trf.xlu0
          %v3986 = vpop.trf.xlu0
          %v3987 = vpop.trf.xlu0
          %v3988 = vpop.trf.xlu0
          %v3989 = vpop.trf.xlu0
          %v3990 = vpop.trf.xlu0
          %v3991 = vpop.trf.xlu0
          %v3992 = vpop.trf.xlu0
          %v3993 = vpop.trf.xlu0
          %v3994 = vpop.trf.xlu0
          %v3995 = vpop.trf.xlu0
          %v3996 = vpop.trf.xlu0
          %v3997 = vpop.trf.xlu0
          %v3998 = vpop.trf.xlu0
          %s3999 = scalar_lea.vmem %s301, 4 [#allocation11]
          %4000 = vst [vmem:[%s3999] sm:$0xf] %v3983
          %4001 = vxpose.xlu0.b32.start [1/16] %v3902, 128
          %4002 = vxpose.xlu0.b32.cont [2/16] %v3903, 128
          %4003 = vxpose.xlu0.b32.cont [3/16] %v3904, 128
          %4004 = vxpose.xlu0.b32.cont [4/16] %v3905, 128
          %4005 = vxpose.xlu0.b32.cont [5/16] %v3906, 128
          %4006 = vxpose.xlu0.b32.cont [6/16] %v3907, 128
          %4007 = vxpose.xlu0.b32.cont [7/16] %v3908, 128
          %4008 = vxpose.xlu0.b32.cont [8/16] %v3909, 128
          %4009 = vxpose.xlu0.b32.cont [9/16] %v3910, 128
          %4010 = vxpose.xlu0.b32.cont [10/16] %v3911, 128
          %4011 = vxpose.xlu0.b32.cont [11/16] %v3912, 128
          %4012 = vxpose.xlu0.b32.cont [12/16] %v3913, 128
          %4013 = vxpose.xlu0.b32.cont [13/16] %v3914, 128
          %4014 = vxpose.xlu0.b32.cont [14/16] %v3915, 128
          %4015 = vxpose.xlu0.b32.cont [15/16] %v3916, 128
          %4016 = vxpose.xlu0.b32.end [16/16] %v3917, 128
          %v4017 = vpop.trf.xlu0
          %v4018 = vpop.trf.xlu0
          %v4019 = vpop.trf.xlu0
          %v4020 = vpop.trf.xlu0
          %v4021 = vpop.trf.xlu0
          %v4022 = vpop.trf.xlu0
          %v4023 = vpop.trf.xlu0
          %v4024 = vpop.trf.xlu0
          %v4025 = vpop.trf.xlu0
          %v4026 = vpop.trf.xlu0
          %v4027 = vpop.trf.xlu0
          %v4028 = vpop.trf.xlu0
          %v4029 = vpop.trf.xlu0
          %v4030 = vpop.trf.xlu0
          %v4031 = vpop.trf.xlu0
          %v4032 = vpop.trf.xlu0
          %s4033 = scalar_lea.vmem %s301, 8 [#allocation11]
          %4034 = vst [vmem:[%s4033] sm:$0xf] %v4017
          %4035 = vxpose.xlu0.b32.start [1/16] %v3918, 128
          %4036 = vxpose.xlu0.b32.cont [2/16] %v3919, 128
          %4037 = vxpose.xlu0.b32.cont [3/16] %v3920, 128
          %4038 = vxpose.xlu0.b32.cont [4/16] %v3921, 128
          %4039 = vxpose.xlu0.b32.cont [5/16] %v3922, 128
          %4040 = vxpose.xlu0.b32.cont [6/16] %v3923, 128
          %4041 = vxpose.xlu0.b32.cont [7/16] %v3924, 128
          %4042 = vxpose.xlu0.b32.cont [8/16] %v3925, 128
          %4043 = vxpose.xlu0.b32.cont [9/16] %v3926, 128
          %4044 = vxpose.xlu0.b32.cont [10/16] %v3927, 128
          %4045 = vxpose.xlu0.b32.cont [11/16] %v3928, 128
          %4046 = vxpose.xlu0.b32.cont [12/16] %v3929, 128
          %4047 = vxpose.xlu0.b32.cont [13/16] %v3930, 128
          %4048 = vxpose.xlu0.b32.cont [14/16] %v3931, 128
          %4049 = vxpose.xlu0.b32.cont [15/16] %v3932, 128
          %4050 = vxpose.xlu0.b32.end [16/16] %v3933, 128
          %v4051 = vpop.trf.xlu0
          %v4052 = vpop.trf.xlu0
          %v4053 = vpop.trf.xlu0
          %v4054 = vpop.trf.xlu0
          %v4055 = vpop.trf.xlu0
          %v4056 = vpop.trf.xlu0
          %v4057 = vpop.trf.xlu0
          %v4058 = vpop.trf.xlu0
          %v4059 = vpop.trf.xlu0
          %v4060 = vpop.trf.xlu0
          %v4061 = vpop.trf.xlu0
          %v4062 = vpop.trf.xlu0
          %v4063 = vpop.trf.xlu0
          %v4064 = vpop.trf.xlu0
          %v4065 = vpop.trf.xlu0
          %v4066 = vpop.trf.xlu0
          %s4067 = scalar_lea.vmem %s301, 12 [#allocation11]
          %4068 = vst [vmem:[%s4067] sm:$0xf] %v4051
        $region52: #{tpu_custom_call.1} parent=31 // pred_fallthru
          _
        %s4069 = sand.u32 %s136, 1
        %s4070 = scalar_lea.sflag [#allocation7], %s4069
        %s4071 = sand.u32 %s136, 1
        %s4072 = smul.addr %s4071, 16
        %s4073 = scalar_lea.vmem [#allocation11], %s4072
        // Predicated region
        $region53: #{tpu_custom_call.1} parent=31 // pred_check
          %p4074 = pneg %p146
        $region54: #{tpu_custom_call.1} parent=31 // pred_check_branch
          %4076 = sbr.rel (%p4074) target = $region56
        $region55: #{tpu_custom_call.1} parent=31 // pred_region
          %4078 = vsyncadd %s4070, 0
          %s4079 = smul.addr %s28, 4
          %s4080 = sadd.s32 %s29, %s4079
          %s4081 = smul.addr %s4080, 4
          %s4082 = scalar_lea.hbm %s3, %s4081
          %s4083 = sshll.u32 %s4073, 4
          %s4084 = int_to_ptr.vmem [resolvable:$true] %s4083
          %s4085 = sshll.u32 %s4082, 4
          %s4086 = int_to_ptr.hbm [resolvable:$true] %s4085
          %4091 = dma.vmem_to_hbm [thread:$0]  %s4084, 256, %s4086, %s4070, 64, 64, 4
        $region56: #{tpu_custom_call.1} parent=31 // pred_fallthru
          _
      $region32: #{tpu_custom_call.1} parent=5 // pred_fallthru
        _
      %p4092 = scmp.le.s32.totalorder 2, %s18
      // Predicated region
      $region57: #{tpu_custom_call.1} parent=5 // pred_check
        %p4093 = pneg %p4092
      $region58: #{tpu_custom_call.1} parent=5 // pred_check_branch
        %4095 = sbr.rel (%p4093) target = $region60
      $region59: #{tpu_custom_call.1} parent=5 // pred_region
        %s4096 = ssub.s32 %s18, 2
        // Predicated region
        $region61: #{tpu_custom_call.1} parent=59 // pred_check
          %p4097 = pneg %p152
        $region62: #{tpu_custom_call.1} parent=59 // pred_check_branch
          %4099 = sbr.rel (%p4097) target = $region64
        $region63: #{tpu_custom_call.1} parent=59 // pred_region
          %s4100 = sand.u32 %s137, 1
          %s4101 = scalar_lea.sflag [#allocation7], %s4100
          %s4102 = sand.u32 %s137, 1
          %s4103 = smul.addr %s4102, 16
          %s4104 = scalar_lea.vmem [#allocation11], %s4103
          %4106 = dma.done %s4101, 256
        $region64: #{tpu_custom_call.1} parent=59 // pred_fallthru
          _
      $region60: #{tpu_custom_call.1} parent=5 // pred_fallthru
        _
    $region6: #{tpu_custom_call.1} parent=1 // loop_footer
      %s22 = sadd.s32 1, %s18
    $region7: #{tpu_custom_call.1} parent=1 // loop_footer_branch
      %17 = sbr.rel target = $region3
    $region8: #{tpu_custom_call.1} parent=1 // loop_exit
      _
    %4107 = vsyncpa [#allocation6], 1
    %s4108 = scalar_lea.sflag [#allocation6], 1
    %4109 = vsyncpa %s4108, 1
    %4110 = vsyncpa [#allocation9], 1
    %s4111 = scalar_lea.sflag [#allocation9], 1
    %4112 = vsyncpa %s4111, 1
    %4113 = vsyncpa [#allocation7], 1
    %s4114 = scalar_lea.sflag [#allocation7], 1
    %4115 = vsyncpa %s4114, 1

</llo_original>
